<compile_context>
chip_gen: v7x
topology: tpu7x:2x2x1
jax: 0.10.0
libtpu: 0.0.40
codegen_flags: <defaults>
</compile_context>

<pallas_src>
import functools
import math

import jax
import jax.numpy as jnp
from jax.experimental import pallas as pl
from jax.experimental.pallas import tpu as pltpu


def cbam_kernel(x_ref, w1t_ref, w2t_ref, wmask_ref, out_ref, attn_ref, *, H, W, K):
    P = K // 2
    KK = K * K
    HW = H * W
    Bt, C = x_ref.shape[0], x_ref.shape[1]

    x = x_ref[...].astype(jnp.float32)                  # (Bt, C, HW) lane-dense

    # ---------------- channel attention ----------------
    mx = jnp.max(x, axis=-1)                            # (Bt, C)  adaptive max pool
    av = jnp.mean(x, axis=-1)                           # (Bt, C)  adaptive avg pool
    pooled = jnp.concatenate([mx, av], axis=0)          # (2*Bt, C) fused MLP input

    w1t = w1t_ref[...].astype(jnp.float32)              # (C, Cr)
    w2t = w2t_ref[...].astype(jnp.float32)              # (Cr, C)
    h = jnp.maximum(jnp.dot(pooled, w1t, preferred_element_type=jnp.float32), 0.0)
    y = jnp.dot(h, w2t, preferred_element_type=jnp.float32)      # (2*Bt, C)
    s = jax.nn.sigmoid(y[:Bt] + y[Bt:])                 # (Bt, C)
    x_ca = x * s[:, :, None]                            # (Bt, C, HW)

    # ---------------- spatial attention (lane-dense) ----------------
    ch_max = jnp.max(x_ca, axis=1)                      # (Bt, HW)
    ch_avg = jnp.mean(x_ca, axis=1)                     # (Bt, HW)

    # KxK, 2-in-channel conv as K*K rolled taps.  wmask_ref row t holds the
    # conv weight for tap t already folded into the zero-padding boundary mask
    # (rows [0,KK) -> max channel, [KK,2KK) -> avg channel), so each tap is a
    # roll on the XLU plus two full-width FMAs.  Four independent accumulators
    # break the serial VALU dependency chain.
    acc = [jnp.zeros((Bt, HW), jnp.float32) for _ in range(4)]
    for kh in range(K):
        for kw in range(K):
            t = kh * K + kw
            delta = (kh - P) * W + (kw - P)             # flat shift of this tap
            shift = (-delta) % HW                       # rolled[p] = x[(p+delta) % HW]
            rm = pltpu.roll(ch_max, shift, 1) if shift else ch_max
            ra = pltpu.roll(ch_avg, shift, 1) if shift else ch_avg
            p = 2 * (t & 1)
            acc[p + 0] = acc[p + 0] + wmask_ref[t, :] * rm
            acc[p + 1] = acc[p + 1] + wmask_ref[KK + t, :] * ra
    attn = jax.nn.sigmoid((acc[0] + acc[1]) + (acc[2] + acc[3]))   # (Bt, HW)

    attn3 = attn[:, None, :]                            # (Bt, 1, HW)
    out_ref[...] = (x_ca * attn3).astype(out_ref.dtype)
    attn_ref[...] = attn3.astype(attn_ref.dtype)


def _build_weighted_masks(conv_w, H, W, K):
    """Fold the spatial-conv weights into per-tap zero-padding boundary masks.

    Returns (2*K*K, H*W) float32: rows [0, K*K) are the max-channel taps,
    rows [K*K, 2*K*K) the avg-channel taps, each = weight * valid(i+dh, j+dw).
    """
    P = K // 2
    ii = jnp.arange(H)[:, None]
    jj = jnp.arange(W)[None, :]
    rows = []
    for kh in range(K):
        for kw in range(K):
            dh, dw = kh - P, kw - P
            valid = ((ii + dh >= 0) & (ii + dh < H) &
                     (jj + dw >= 0) & (jj + dw < W))
            rows.append(valid.reshape(-1))
    mask = jnp.stack(rows).astype(jnp.float32)                      # (K*K, HW)
    w = conv_w.reshape(2, K * K).astype(jnp.float32)                # ch0=max, ch1=avg
    return jnp.concatenate([w[0][:, None] * mask,
                            w[1][:, None] * mask], axis=0)          # (2*K*K, HW)


def _tpu_hw_info():
    """(per-core VMEM bytes, is_multi_tensorcore_chip) with safe fallbacks."""
    vmem_cap = 64 << 20                       # conservative default (v7x per-TC)
    try:
        vmem_cap = int(pltpu.get_tpu_info().vmem_capacity_bytes)
    except Exception:
        pass
    multi_tc = False
    try:
        kind = str(getattr(jax.devices()[0], "device_kind", "")).lower()
        multi_tc = ("v7" in kind) or ("7x" in kind)
    except Exception:
        pass
    if multi_tc:
        vmem_cap = min(vmem_cap, 64 << 20)    # v7x per-TC VMEM is 64 MiB
    return vmem_cap, multi_tc


def _largest_divisor_leq(n, cap):
    cap = max(1, min(n, int(cap)))
    for d in range(cap, 0, -1):
        if n % d == 0:
            return d
    return 1


def cbam_forward(x, w1, w2, conv_w, kernel_size=7):
    """x: (B,C,H,W). w1: (C//r, C), w2: (C, C//r), conv_w: (1, 2, K, K)."""
    B, C, H, W = x.shape
    K = kernel_size
    assert K % 2 == 1, "kernel_size must be odd to match PyTorch padding=K//2"
    Cr = w1.shape[0]
    HW = H * W
    itemsize = jnp.dtype(x.dtype).itemsize

    # Lane-dense views (free metadata reshapes of contiguous NCHW) + weight prep.
    x_flat = x.reshape(B, C, HW)
    w1t = jnp.transpose(w1).astype(jnp.float32)          # (C, Cr)  fc1: v @ w1t
    w2t = jnp.transpose(w2).astype(jnp.float32)          # (Cr, C)  fc2: h @ w2t
    wmask = _build_weighted_masks(conv_w, H, W, K)       # (2*K*K, HW)

    # ---- batch tile: largest divisor of B under the per-generation byte budget
    vmem_cap, multi_tc = _tpu_hw_info()
    tile_target = min(8 << 20, max(1 << 20, vmem_cap // 16))  # ~8 MiB v5e/v6e, ~4 MiB v7x
    bytes_per_b = C * HW * itemsize
    cap = min(B, max(1, tile_target // max(bytes_per_b, 1)))
    if multi_tc and B >= 2:
        cap = min(cap, max(1, B // 2))        # >=2 grid steps so both v7x TCs get work
    Bt = _largest_divisor_leq(B, cap)
    grid = (B // Bt,)

    # Per-step VMEM budget: 2x double-buffered (in + out + attn) pipeline tiles
    # plus the in-kernel f32 temporaries (x, x_ca, pooled maps, accumulators).
    tile_bytes = Bt * C * HW * itemsize
    attn_bytes = Bt * HW * itemsize
    f32_tile = Bt * C * HW * 4
    est_vmem = (2 * (2 * tile_bytes + attn_bytes) + 4 * f32_tile
                + 2 * (2 * K * K * HW * 4) + (2 << 20))
    vmem_limit = int(min(int(0.85 * vmem_cap), max(32 << 20, est_vmem)))

    cost = pl.CostEstimate(
        flops=8 * B * C * Cr + 6 * B * HW * K * K + 8 * B * C * HW,
        transcendentals=B * (C + HW),
        bytes_accessed=(2 * B * C * HW + B * HW) * itemsize,
    )

    kernel = functools.partial(cbam_kernel, H=H, W=W, K=K)
    out_flat, attn_flat = pl.pallas_call(
        kernel,
        out_shape=(
            jax.ShapeDtypeStruct((B, C, HW), x.dtype),
            jax.ShapeDtypeStruct((B, 1, HW), x.dtype),
        ),
        grid=grid,
        in_specs=[
            pl.BlockSpec((Bt, C, HW), lambda b: (b, 0, 0)),
            pl.BlockSpec((C, Cr), lambda b: (0, 0)),
            pl.BlockSpec((Cr, C), lambda b: (0, 0)),
            pl.BlockSpec((2 * K * K, HW), lambda b: (0, 0)),
        ],
        out_specs=(
            pl.BlockSpec((Bt, C, HW), lambda b: (b, 0, 0)),
            pl.BlockSpec((Bt, 1, HW), lambda b: (b, 0, 0)),
        ),
        compiler_params=pltpu.CompilerParams(
            dimension_semantics=("parallel",),
            vmem_limit_bytes=vmem_limit,
        ),
        cost_estimate=cost,
    )(x_flat, w1t, w2t, wmask)

    return out_flat.reshape(B, C, H, W), attn_flat.reshape(B, 1, H, W)


def cbam_reference(x, w1, w2, conv_w):
    """Pure-JAX reference of the PyTorch forward (for verification)."""
    mx = jnp.max(x, axis=(2, 3))
    av = jnp.mean(x, axis=(2, 3))

    def mlp(v):
        return jnp.maximum(v @ w1.T, 0.0) @ w2.T

    s = jax.nn.sigmoid(mlp(mx) + mlp(av))
    x_ca = x * s[:, :, None, None]

    ch_max = jnp.max(x_ca, axis=1, keepdims=True)
    ch_avg = jnp.mean(x_ca, axis=1, keepdims=True)
    inp = jnp.concatenate([ch_max, ch_avg], axis=1)
    conv_out = jax.lax.conv_general_dilated(
        inp, conv_w, window_strides=(1, 1), padding="SAME",
        dimension_numbers=("NCHW", "OIHW", "NCHW"))
    attn = jax.nn.sigmoid(conv_out)
    return x_ca * attn, attn


if __name__ == "__main__":
    B, C, H, W = 2, 4, 16, 16
    ratio, K = 4, 7
    Cr = max(1, C // ratio)

    key = jax.random.PRNGKey(0)
    kx, k1, k2, k3 = jax.random.split(key, 4)

    x = jax.random.normal(kx, (B, C, H, W), jnp.float32)
    # Deterministic synthetic parameters (shapes match the nn.Module __init__).
    w1 = jax.random.normal(k1, (Cr, C), jnp.float32) * (1.0 / math.sqrt(C))      # fc1
    w2 = jax.random.normal(k2, (C, Cr), jnp.float32) * (1.0 / math.sqrt(Cr))     # fc2
    conv_w = jax.random.normal(k3, (1, 2, K, K), jnp.float32) * (1.0 / math.sqrt(2 * K * K))

    out, attn = cbam_forward(x, w1, w2, conv_w, kernel_size=K)
    jax.block_until_ready((out, attn))

    out_ref, attn_ref = cbam_reference(x, w1, w2, conv_w)
    assert jnp.allclose(out, out_ref, atol=1e-3, rtol=1e-3), \
        float(jnp.max(jnp.abs(out - out_ref)))
    assert jnp.allclose(attn, attn_ref, atol=1e-3, rtol=1e-3), \
        float(jnp.max(jnp.abs(attn - attn_ref)))

    print("KERNEL_OK")
</pallas_src>

<mosaic_0001>
module attributes {stable_mosaic.version = 11 : i64} {
  func.func @cbam_kernel(%arg0: i32, %arg1: memref<2x4x256xf32, #tpu.memory_space<vmem>>, %arg2: memref<4x1xf32, #tpu.memory_space<vmem>>, %arg3: memref<1x4xf32, #tpu.memory_space<vmem>>, %arg4: memref<98x256xf32, #tpu.memory_space<vmem>>, %arg5: memref<2x4x256xf32, #tpu.memory_space<vmem>>, %arg6: memref<2x1x256xf32, #tpu.memory_space<vmem>>) attributes {dimension_semantics = [#tpu.dimension_semantics<parallel>], iteration_bounds = array<i64: 1>, scalar_prefetch = 0 : i64, scratch_operands = 0 : i64, tpu.core_type = #tpu.core_type<tc>, window_params = [{transform_indices = @transform_0, window_bounds = array<i64: 2, 4, 256>}, {pipeline_mode = #tpu.pipeline_mode<synchronous>, transform_indices = @transform_1, window_bounds = array<i64: 4, 1>}, {pipeline_mode = #tpu.pipeline_mode<synchronous>, transform_indices = @transform_2, window_bounds = array<i64: 1, 4>}, {pipeline_mode = #tpu.pipeline_mode<synchronous>, transform_indices = @transform_3, window_bounds = array<i64: 98, 256>}, {transform_indices = @transform_4, window_bounds = array<i64: 2, 4, 256>}, {transform_indices = @transform_5, window_bounds = array<i64: 2, 1, 256>}]} {
    %c0 = arith.constant 0 : index
    %c0_0 = arith.constant 0 : index
    %c0_1 = arith.constant 0 : index
    %0 = vector.load %arg1[%c0, %c0_0, %c0_1] : memref<2x4x256xf32, #tpu.memory_space<vmem>>, vector<2x4x256xf32>
    %cst = arith.constant dense<0xFF800000> : vector<2x4xf32>
    %1 = vector.multi_reduction <maximumf>, %0, %cst [2] : vector<2x4x256xf32> to vector<2x4xf32>
    %cst_2 = arith.constant dense<0.000000e+00> : vector<2x4xf32>
    %2 = vector.multi_reduction <add>, %0, %cst_2 [2] : vector<2x4x256xf32> to vector<2x4xf32>
    %cst_3 = arith.constant 2.560000e+02 : f32
    %3 = vector.broadcast %cst_3 : f32 to vector<2x4xf32>
    %4 = arith.divf %2, %3 : vector<2x4xf32>
    %5 = tpu.concatenate %1, %4 in 0 : vector<2x4xf32>, vector<2x4xf32> -> vector<4x4xf32>
    %c0_4 = arith.constant 0 : index
    %c0_5 = arith.constant 0 : index
    %6 = vector.load %arg2[%c0_4, %c0_5] : memref<4x1xf32, #tpu.memory_space<vmem>>, vector<4x1xf32>
    %c0_6 = arith.constant 0 : index
    %c0_7 = arith.constant 0 : index
    %7 = vector.load %arg3[%c0_6, %c0_7] : memref<1x4xf32, #tpu.memory_space<vmem>>, vector<1x4xf32>
    %cst_8 = arith.constant dense<0.000000e+00> : vector<4x1xf32>
    %8 = tpu.matmul %5, %6, %cst_8 {dimension_numbers = #tpu.dot_dimension_numbers<[1], [0], [0], [1], [0, 0, 1, 1], [], []>} : vector<4x4xf32>, vector<4x1xf32>, vector<4x1xf32> -> vector<4x1xf32>
    %cst_9 = arith.constant 0.000000e+00 : f32
    %9 = vector.broadcast %cst_9 : f32 to vector<4x1xf32>
    %10 = arith.maximumf %8, %9 : vector<4x1xf32>
    %cst_10 = arith.constant dense<0.000000e+00> : vector<4x4xf32>
    %11 = tpu.matmul %10, %7, %cst_10 {dimension_numbers = #tpu.dot_dimension_numbers<[1], [0], [0], [1], [0, 0, 1, 1], [], []>} : vector<4x1xf32>, vector<1x4xf32>, vector<4x4xf32> -> vector<4x4xf32>
    %12 = vector.extract_strided_slice %11 {offsets = [0, 0], sizes = [2, 4], strides = [1, 1]} : vector<4x4xf32> to vector<2x4xf32>
    %13 = vector.extract_strided_slice %11 {offsets = [2, 0], sizes = [2, 4], strides = [1, 1]} : vector<4x4xf32> to vector<2x4xf32>
    %14 = arith.addf %12, %13 : vector<2x4xf32>
    %15 = arith.negf %14 : vector<2x4xf32>
    %16 = math.exp %15 : vector<2x4xf32>
    %cst_11 = arith.constant 1.000000e+00 : f32
    %17 = vector.broadcast %cst_11 : f32 to vector<2x4xf32>
    %18 = arith.addf %17, %16 : vector<2x4xf32>
    %19 = arith.divf %17, %18 : vector<2x4xf32>
    %20 = vector.shape_cast %19 : vector<2x4xf32> to vector<2x4x1xf32>
    %21 = vector.broadcast %20 : vector<2x4x1xf32> to vector<2x4x256xf32>
    %22 = arith.mulf %0, %21 : vector<2x4x256xf32>
    %cst_12 = arith.constant dense<0xFF800000> : vector<2x256xf32>
    %23 = vector.multi_reduction <maximumf>, %22, %cst_12 [1] : vector<2x4x256xf32> to vector<2x256xf32>
    %cst_13 = arith.constant dense<0.000000e+00> : vector<2x256xf32>
    %24 = vector.multi_reduction <add>, %22, %cst_13 [1] : vector<2x4x256xf32> to vector<2x256xf32>
    %cst_14 = arith.constant 4.000000e+00 : f32
    %25 = vector.broadcast %cst_14 : f32 to vector<2x256xf32>
    %26 = arith.divf %24, %25 : vector<2x256xf32>
    %cst_15 = arith.constant 0.000000e+00 : f32
    %27 = vector.broadcast %cst_15 : f32 to vector<2x256xf32>
    %cst_16 = arith.constant 0.000000e+00 : f32
    %28 = vector.broadcast %cst_16 : f32 to vector<2x256xf32>
    %cst_17 = arith.constant 0.000000e+00 : f32
    %29 = vector.broadcast %cst_17 : f32 to vector<2x256xf32>
    %cst_18 = arith.constant 0.000000e+00 : f32
    %30 = vector.broadcast %cst_18 : f32 to vector<2x256xf32>
    %c51_i32 = arith.constant 51 : i32
    %31 = tpu.dynamic_rotate %23 by %c51_i32 dim 1 : vector<2x256xf32>, i32 -> vector<2x256xf32>
    %c51_i32_19 = arith.constant 51 : i32
    %32 = tpu.dynamic_rotate %26 by %c51_i32_19 dim 1 : vector<2x256xf32>, i32 -> vector<2x256xf32>
    %c0_20 = arith.constant 0 : index
    %c0_21 = arith.constant 0 : index
    %33 = vector.load %arg4[%c0_20, %c0_21] : memref<98x256xf32, #tpu.memory_space<vmem>>, vector<1x256xf32>
    %34 = vector.shape_cast %33 : vector<1x256xf32> to vector<256xf32>
    %35 = vector.shape_cast %34 : vector<256xf32> to vector<1x256xf32>
    %36 = vector.broadcast %35 : vector<1x256xf32> to vector<2x256xf32>
    %37 = arith.mulf %36, %31 : vector<2x256xf32>
    %38 = arith.addf %27, %37 : vector<2x256xf32>
    %c49 = arith.constant 49 : index
    %c0_22 = arith.constant 0 : index
    %39 = vector.load %arg4[%c49, %c0_22] : memref<98x256xf32, #tpu.memory_space<vmem>>, vector<1x256xf32>
    %40 = vector.shape_cast %39 : vector<1x256xf32> to vector<256xf32>
    %41 = vector.shape_cast %40 : vector<256xf32> to vector<1x256xf32>
    %42 = vector.broadcast %41 : vector<1x256xf32> to vector<2x256xf32>
    %43 = arith.mulf %42, %32 : vector<2x256xf32>
    %44 = arith.addf %28, %43 : vector<2x256xf32>
    %c50_i32 = arith.constant 50 : i32
    %45 = tpu.dynamic_rotate %23 by %c50_i32 dim 1 : vector<2x256xf32>, i32 -> vector<2x256xf32>
    %c50_i32_23 = arith.constant 50 : i32
    %46 = tpu.dynamic_rotate %26 by %c50_i32_23 dim 1 : vector<2x256xf32>, i32 -> vector<2x256xf32>
    %c1 = arith.constant 1 : index
    %c0_24 = arith.constant 0 : index
    %47 = vector.load %arg4[%c1, %c0_24] : memref<98x256xf32, #tpu.memory_space<vmem>>, vector<1x256xf32>
    %48 = vector.shape_cast %47 : vector<1x256xf32> to vector<256xf32>
    %49 = vector.shape_cast %48 : vector<256xf32> to vector<1x256xf32>
    %50 = vector.broadcast %49 : vector<1x256xf32> to vector<2x256xf32>
    %51 = arith.mulf %50, %45 : vector<2x256xf32>
    %52 = arith.addf %29, %51 : vector<2x256xf32>
    %c50 = arith.constant 50 : index
    %c0_25 = arith.constant 0 : index
    %53 = vector.load %arg4[%c50, %c0_25] : memref<98x256xf32, #tpu.memory_space<vmem>>, vector<1x256xf32>
    %54 = vector.shape_cast %53 : vector<1x256xf32> to vector<256xf32>
    %55 = vector.shape_cast %54 : vector<256xf32> to vector<1x256xf32>
    %56 = vector.broadcast %55 : vector<1x256xf32> to vector<2x256xf32>
    %57 = arith.mulf %56, %46 : vector<2x256xf32>
    %58 = arith.addf %30, %57 : vector<2x256xf32>
    %c49_i32 = arith.constant 49 : i32
    %59 = tpu.dynamic_rotate %23 by %c49_i32 dim 1 : vector<2x256xf32>, i32 -> vector<2x256xf32>
    %c49_i32_26 = arith.constant 49 : i32
    %60 = tpu.dynamic_rotate %26 by %c49_i32_26 dim 1 : vector<2x256xf32>, i32 -> vector<2x256xf32>
    %c2 = arith.constant 2 : index
    %c0_27 = arith.constant 0 : index
    %61 = vector.load %arg4[%c2, %c0_27] : memref<98x256xf32, #tpu.memory_space<vmem>>, vector<1x256xf32>
    %62 = vector.shape_cast %61 : vector<1x256xf32> to vector<256xf32>
    %63 = vector.shape_cast %62 : vector<256xf32> to vector<1x256xf32>
    %64 = vector.broadcast %63 : vector<1x256xf32> to vector<2x256xf32>
    %65 = arith.mulf %64, %59 : vector<2x256xf32>
    %66 = arith.addf %38, %65 : vector<2x256xf32>
    %c51 = arith.constant 51 : index
    %c0_28 = arith.constant 0 : index
    %67 = vector.load %arg4[%c51, %c0_28] : memref<98x256xf32, #tpu.memory_space<vmem>>, vector<1x256xf32>
    %68 = vector.shape_cast %67 : vector<1x256xf32> to vector<256xf32>
    %69 = vector.shape_cast %68 : vector<256xf32> to vector<1x256xf32>
    %70 = vector.broadcast %69 : vector<1x256xf32> to vector<2x256xf32>
    %71 = arith.mulf %70, %60 : vector<2x256xf32>
    %72 = arith.addf %44, %71 : vector<2x256xf32>
    %c48_i32 = arith.constant 48 : i32
    %73 = tpu.dynamic_rotate %23 by %c48_i32 dim 1 : vector<2x256xf32>, i32 -> vector<2x256xf32>
    %c48_i32_29 = arith.constant 48 : i32
    %74 = tpu.dynamic_rotate %26 by %c48_i32_29 dim 1 : vector<2x256xf32>, i32 -> vector<2x256xf32>
    %c3 = arith.constant 3 : index
    %c0_30 = arith.constant 0 : index
    %75 = vector.load %arg4[%c3, %c0_30] : memref<98x256xf32, #tpu.memory_space<vmem>>, vector<1x256xf32>
    %76 = vector.shape_cast %75 : vector<1x256xf32> to vector<256xf32>
    %77 = vector.shape_cast %76 : vector<256xf32> to vector<1x256xf32>
    %78 = vector.broadcast %77 : vector<1x256xf32> to vector<2x256xf32>
    %79 = arith.mulf %78, %73 : vector<2x256xf32>
    %80 = arith.addf %52, %79 : vector<2x256xf32>
    %c52 = arith.constant 52 : index
    %c0_31 = arith.constant 0 : index
    %81 = vector.load %arg4[%c52, %c0_31] : memref<98x256xf32, #tpu.memory_space<vmem>>, vector<1x256xf32>
    %82 = vector.shape_cast %81 : vector<1x256xf32> to vector<256xf32>
    %83 = vector.shape_cast %82 : vector<256xf32> to vector<1x256xf32>
    %84 = vector.broadcast %83 : vector<1x256xf32> to vector<2x256xf32>
    %85 = arith.mulf %84, %74 : vector<2x256xf32>
    %86 = arith.addf %58, %85 : vector<2x256xf32>
    %c47_i32 = arith.constant 47 : i32
    %87 = tpu.dynamic_rotate %23 by %c47_i32 dim 1 : vector<2x256xf32>, i32 -> vector<2x256xf32>
    %c47_i32_32 = arith.constant 47 : i32
    %88 = tpu.dynamic_rotate %26 by %c47_i32_32 dim 1 : vector<2x256xf32>, i32 -> vector<2x256xf32>
    %c4 = arith.constant 4 : index
    %c0_33 = arith.constant 0 : index
    %89 = vector.load %arg4[%c4, %c0_33] : memref<98x256xf32, #tpu.memory_space<vmem>>, vector<1x256xf32>
    %90 = vector.shape_cast %89 : vector<1x256xf32> to vector<256xf32>
    %91 = vector.shape_cast %90 : vector<256xf32> to vector<1x256xf32>
    %92 = vector.broadcast %91 : vector<1x256xf32> to vector<2x256xf32>
    %93 = arith.mulf %92, %87 : vector<2x256xf32>
    %94 = arith.addf %66, %93 : vector<2x256xf32>
    %c53 = arith.constant 53 : index
    %c0_34 = arith.constant 0 : index
    %95 = vector.load %arg4[%c53, %c0_34] : memref<98x256xf32, #tpu.memory_space<vmem>>, vector<1x256xf32>
    %96 = vector.shape_cast %95 : vector<1x256xf32> to vector<256xf32>
    %97 = vector.shape_cast %96 : vector<256xf32> to vector<1x256xf32>
    %98 = vector.broadcast %97 : vector<1x256xf32> to vector<2x256xf32>
    %99 = arith.mulf %98, %88 : vector<2x256xf32>
    %100 = arith.addf %72, %99 : vector<2x256xf32>
    %c46_i32 = arith.constant 46 : i32
    %101 = tpu.dynamic_rotate %23 by %c46_i32 dim 1 : vector<2x256xf32>, i32 -> vector<2x256xf32>
    %c46_i32_35 = arith.constant 46 : i32
    %102 = tpu.dynamic_rotate %26 by %c46_i32_35 dim 1 : vector<2x256xf32>, i32 -> vector<2x256xf32>
    %c5 = arith.constant 5 : index
    %c0_36 = arith.constant 0 : index
    %103 = vector.load %arg4[%c5, %c0_36] : memref<98x256xf32, #tpu.memory_space<vmem>>, vector<1x256xf32>
    %104 = vector.shape_cast %103 : vector<1x256xf32> to vector<256xf32>
    %105 = vector.shape_cast %104 : vector<256xf32> to vector<1x256xf32>
    %106 = vector.broadcast %105 : vector<1x256xf32> to vector<2x256xf32>
    %107 = arith.mulf %106, %101 : vector<2x256xf32>
    %108 = arith.addf %80, %107 : vector<2x256xf32>
    %c54 = arith.constant 54 : index
    %c0_37 = arith.constant 0 : index
    %109 = vector.load %arg4[%c54, %c0_37] : memref<98x256xf32, #tpu.memory_space<vmem>>, vector<1x256xf32>
    %110 = vector.shape_cast %109 : vector<1x256xf32> to vector<256xf32>
    %111 = vector.shape_cast %110 : vector<256xf32> to vector<1x256xf32>
    %112 = vector.broadcast %111 : vector<1x256xf32> to vector<2x256xf32>
    %113 = arith.mulf %112, %102 : vector<2x256xf32>
    %114 = arith.addf %86, %113 : vector<2x256xf32>
    %c45_i32 = arith.constant 45 : i32
    %115 = tpu.dynamic_rotate %23 by %c45_i32 dim 1 : vector<2x256xf32>, i32 -> vector<2x256xf32>
    %c45_i32_38 = arith.constant 45 : i32
    %116 = tpu.dynamic_rotate %26 by %c45_i32_38 dim 1 : vector<2x256xf32>, i32 -> vector<2x256xf32>
    %c6 = arith.constant 6 : index
    %c0_39 = arith.constant 0 : index
    %117 = vector.load %arg4[%c6, %c0_39] : memref<98x256xf32, #tpu.memory_space<vmem>>, vector<1x256xf32>
    %118 = vector.shape_cast %117 : vector<1x256xf32> to vector<256xf32>
    %119 = vector.shape_cast %118 : vector<256xf32> to vector<1x256xf32>
    %120 = vector.broadcast %119 : vector<1x256xf32> to vector<2x256xf32>
    %121 = arith.mulf %120, %115 : vector<2x256xf32>
    %122 = arith.addf %94, %121 : vector<2x256xf32>
    %c55 = arith.constant 55 : index
    %c0_40 = arith.constant 0 : index
    %123 = vector.load %arg4[%c55, %c0_40] : memref<98x256xf32, #tpu.memory_space<vmem>>, vector<1x256xf32>
    %124 = vector.shape_cast %123 : vector<1x256xf32> to vector<256xf32>
    %125 = vector.shape_cast %124 : vector<256xf32> to vector<1x256xf32>
    %126 = vector.broadcast %125 : vector<1x256xf32> to vector<2x256xf32>
    %127 = arith.mulf %126, %116 : vector<2x256xf32>
    %128 = arith.addf %100, %127 : vector<2x256xf32>
    %c35_i32 = arith.constant 35 : i32
    %129 = tpu.dynamic_rotate %23 by %c35_i32 dim 1 : vector<2x256xf32>, i32 -> vector<2x256xf32>
    %c35_i32_41 = arith.constant 35 : i32
    %130 = tpu.dynamic_rotate %26 by %c35_i32_41 dim 1 : vector<2x256xf32>, i32 -> vector<2x256xf32>
    %c7 = arith.constant 7 : index
    %c0_42 = arith.constant 0 : index
    %131 = vector.load %arg4[%c7, %c0_42] : memref<98x256xf32, #tpu.memory_space<vmem>>, vector<1x256xf32>
    %132 = vector.shape_cast %131 : vector<1x256xf32> to vector<256xf32>
    %133 = vector.shape_cast %132 : vector<256xf32> to vector<1x256xf32>
    %134 = vector.broadcast %133 : vector<1x256xf32> to vector<2x256xf32>
    %135 = arith.mulf %134, %129 : vector<2x256xf32>
    %136 = arith.addf %108, %135 : vector<2x256xf32>
    %c56 = arith.constant 56 : index
    %c0_43 = arith.constant 0 : index
    %137 = vector.load %arg4[%c56, %c0_43] : memref<98x256xf32, #tpu.memory_space<vmem>>, vector<1x256xf32>
    %138 = vector.shape_cast %137 : vector<1x256xf32> to vector<256xf32>
    %139 = vector.shape_cast %138 : vector<256xf32> to vector<1x256xf32>
    %140 = vector.broadcast %139 : vector<1x256xf32> to vector<2x256xf32>
    %141 = arith.mulf %140, %130 : vector<2x256xf32>
    %142 = arith.addf %114, %141 : vector<2x256xf32>
    %c34_i32 = arith.constant 34 : i32
    %143 = tpu.dynamic_rotate %23 by %c34_i32 dim 1 : vector<2x256xf32>, i32 -> vector<2x256xf32>
    %c34_i32_44 = arith.constant 34 : i32
    %144 = tpu.dynamic_rotate %26 by %c34_i32_44 dim 1 : vector<2x256xf32>, i32 -> vector<2x256xf32>
    %c8 = arith.constant 8 : index
    %c0_45 = arith.constant 0 : index
    %145 = vector.load %arg4[%c8, %c0_45] : memref<98x256xf32, #tpu.memory_space<vmem>>, vector<1x256xf32>
    %146 = vector.shape_cast %145 : vector<1x256xf32> to vector<256xf32>
    %147 = vector.shape_cast %146 : vector<256xf32> to vector<1x256xf32>
    %148 = vector.broadcast %147 : vector<1x256xf32> to vector<2x256xf32>
    %149 = arith.mulf %148, %143 : vector<2x256xf32>
    %150 = arith.addf %122, %149 : vector<2x256xf32>
    %c57 = arith.constant 57 : index
    %c0_46 = arith.constant 0 : index
    %151 = vector.load %arg4[%c57, %c0_46] : memref<98x256xf32, #tpu.memory_space<vmem>>, vector<1x256xf32>
    %152 = vector.shape_cast %151 : vector<1x256xf32> to vector<256xf32>
    %153 = vector.shape_cast %152 : vector<256xf32> to vector<1x256xf32>
    %154 = vector.broadcast %153 : vector<1x256xf32> to vector<2x256xf32>
    %155 = arith.mulf %154, %144 : vector<2x256xf32>
    %156 = arith.addf %128, %155 : vector<2x256xf32>
    %c33_i32 = arith.constant 33 : i32
    %157 = tpu.dynamic_rotate %23 by %c33_i32 dim 1 : vector<2x256xf32>, i32 -> vector<2x256xf32>
    %c33_i32_47 = arith.constant 33 : i32
    %158 = tpu.dynamic_rotate %26 by %c33_i32_47 dim 1 : vector<2x256xf32>, i32 -> vector<2x256xf32>
    %c9 = arith.constant 9 : index
    %c0_48 = arith.constant 0 : index
    %159 = vector.load %arg4[%c9, %c0_48] : memref<98x256xf32, #tpu.memory_space<vmem>>, vector<1x256xf32>
    %160 = vector.shape_cast %159 : vector<1x256xf32> to vector<256xf32>
    %161 = vector.shape_cast %160 : vector<256xf32> to vector<1x256xf32>
    %162 = vector.broadcast %161 : vector<1x256xf32> to vector<2x256xf32>
    %163 = arith.mulf %162, %157 : vector<2x256xf32>
    %164 = arith.addf %136, %163 : vector<2x256xf32>
    %c58 = arith.constant 58 : index
    %c0_49 = arith.constant 0 : index
    %165 = vector.load %arg4[%c58, %c0_49] : memref<98x256xf32, #tpu.memory_space<vmem>>, vector<1x256xf32>
    %166 = vector.shape_cast %165 : vector<1x256xf32> to vector<256xf32>
    %167 = vector.shape_cast %166 : vector<256xf32> to vector<1x256xf32>
    %168 = vector.broadcast %167 : vector<1x256xf32> to vector<2x256xf32>
    %169 = arith.mulf %168, %158 : vector<2x256xf32>
    %170 = arith.addf %142, %169 : vector<2x256xf32>
    %c32_i32 = arith.constant 32 : i32
    %171 = tpu.dynamic_rotate %23 by %c32_i32 dim 1 : vector<2x256xf32>, i32 -> vector<2x256xf32>
    %c32_i32_50 = arith.constant 32 : i32
    %172 = tpu.dynamic_rotate %26 by %c32_i32_50 dim 1 : vector<2x256xf32>, i32 -> vector<2x256xf32>
    %c10 = arith.constant 10 : index
    %c0_51 = arith.constant 0 : index
    %173 = vector.load %arg4[%c10, %c0_51] : memref<98x256xf32, #tpu.memory_space<vmem>>, vector<1x256xf32>
    %174 = vector.shape_cast %173 : vector<1x256xf32> to vector<256xf32>
    %175 = vector.shape_cast %174 : vector<256xf32> to vector<1x256xf32>
    %176 = vector.broadcast %175 : vector<1x256xf32> to vector<2x256xf32>
    %177 = arith.mulf %176, %171 : vector<2x256xf32>
    %178 = arith.addf %150, %177 : vector<2x256xf32>
    %c59 = arith.constant 59 : index
    %c0_52 = arith.constant 0 : index
    %179 = vector.load %arg4[%c59, %c0_52] : memref<98x256xf32, #tpu.memory_space<vmem>>, vector<1x256xf32>
    %180 = vector.shape_cast %179 : vector<1x256xf32> to vector<256xf32>
    %181 = vector.shape_cast %180 : vector<256xf32> to vector<1x256xf32>
    %182 = vector.broadcast %181 : vector<1x256xf32> to vector<2x256xf32>
    %183 = arith.mulf %182, %172 : vector<2x256xf32>
    %184 = arith.addf %156, %183 : vector<2x256xf32>
    %c31_i32 = arith.constant 31 : i32
    %185 = tpu.dynamic_rotate %23 by %c31_i32 dim 1 : vector<2x256xf32>, i32 -> vector<2x256xf32>
    %c31_i32_53 = arith.constant 31 : i32
    %186 = tpu.dynamic_rotate %26 by %c31_i32_53 dim 1 : vector<2x256xf32>, i32 -> vector<2x256xf32>
    %c11 = arith.constant 11 : index
    %c0_54 = arith.constant 0 : index
    %187 = vector.load %arg4[%c11, %c0_54] : memref<98x256xf32, #tpu.memory_space<vmem>>, vector<1x256xf32>
    %188 = vector.shape_cast %187 : vector<1x256xf32> to vector<256xf32>
    %189 = vector.shape_cast %188 : vector<256xf32> to vector<1x256xf32>
    %190 = vector.broadcast %189 : vector<1x256xf32> to vector<2x256xf32>
    %191 = arith.mulf %190, %185 : vector<2x256xf32>
    %192 = arith.addf %164, %191 : vector<2x256xf32>
    %c60 = arith.constant 60 : index
    %c0_55 = arith.constant 0 : index
    %193 = vector.load %arg4[%c60, %c0_55] : memref<98x256xf32, #tpu.memory_space<vmem>>, vector<1x256xf32>
    %194 = vector.shape_cast %193 : vector<1x256xf32> to vector<256xf32>
    %195 = vector.shape_cast %194 : vector<256xf32> to vector<1x256xf32>
    %196 = vector.broadcast %195 : vector<1x256xf32> to vector<2x256xf32>
    %197 = arith.mulf %196, %186 : vector<2x256xf32>
    %198 = arith.addf %170, %197 : vector<2x256xf32>
    %c30_i32 = arith.constant 30 : i32
    %199 = tpu.dynamic_rotate %23 by %c30_i32 dim 1 : vector<2x256xf32>, i32 -> vector<2x256xf32>
    %c30_i32_56 = arith.constant 30 : i32
    %200 = tpu.dynamic_rotate %26 by %c30_i32_56 dim 1 : vector<2x256xf32>, i32 -> vector<2x256xf32>
    %c12 = arith.constant 12 : index
    %c0_57 = arith.constant 0 : index
    %201 = vector.load %arg4[%c12, %c0_57] : memref<98x256xf32, #tpu.memory_space<vmem>>, vector<1x256xf32>
    %202 = vector.shape_cast %201 : vector<1x256xf32> to vector<256xf32>
    %203 = vector.shape_cast %202 : vector<256xf32> to vector<1x256xf32>
    %204 = vector.broadcast %203 : vector<1x256xf32> to vector<2x256xf32>
    %205 = arith.mulf %204, %199 : vector<2x256xf32>
    %206 = arith.addf %178, %205 : vector<2x256xf32>
    %c61 = arith.constant 61 : index
    %c0_58 = arith.constant 0 : index
    %207 = vector.load %arg4[%c61, %c0_58] : memref<98x256xf32, #tpu.memory_space<vmem>>, vector<1x256xf32>
    %208 = vector.shape_cast %207 : vector<1x256xf32> to vector<256xf32>
    %209 = vector.shape_cast %208 : vector<256xf32> to vector<1x256xf32>
    %210 = vector.broadcast %209 : vector<1x256xf32> to vector<2x256xf32>
    %211 = arith.mulf %210, %200 : vector<2x256xf32>
    %212 = arith.addf %184, %211 : vector<2x256xf32>
    %c29_i32 = arith.constant 29 : i32
    %213 = tpu.dynamic_rotate %23 by %c29_i32 dim 1 : vector<2x256xf32>, i32 -> vector<2x256xf32>
    %c29_i32_59 = arith.constant 29 : i32
    %214 = tpu.dynamic_rotate %26 by %c29_i32_59 dim 1 : vector<2x256xf32>, i32 -> vector<2x256xf32>
    %c13 = arith.constant 13 : index
    %c0_60 = arith.constant 0 : index
    %215 = vector.load %arg4[%c13, %c0_60] : memref<98x256xf32, #tpu.memory_space<vmem>>, vector<1x256xf32>
    %216 = vector.shape_cast %215 : vector<1x256xf32> to vector<256xf32>
    %217 = vector.shape_cast %216 : vector<256xf32> to vector<1x256xf32>
    %218 = vector.broadcast %217 : vector<1x256xf32> to vector<2x256xf32>
    %219 = arith.mulf %218, %213 : vector<2x256xf32>
    %220 = arith.addf %192, %219 : vector<2x256xf32>
    %c62 = arith.constant 62 : index
    %c0_61 = arith.constant 0 : index
    %221 = vector.load %arg4[%c62, %c0_61] : memref<98x256xf32, #tpu.memory_space<vmem>>, vector<1x256xf32>
    %222 = vector.shape_cast %221 : vector<1x256xf32> to vector<256xf32>
    %223 = vector.shape_cast %222 : vector<256xf32> to vector<1x256xf32>
    %224 = vector.broadcast %223 : vector<1x256xf32> to vector<2x256xf32>
    %225 = arith.mulf %224, %214 : vector<2x256xf32>
    %226 = arith.addf %198, %225 : vector<2x256xf32>
    %c19_i32 = arith.constant 19 : i32
    %227 = tpu.dynamic_rotate %23 by %c19_i32 dim 1 : vector<2x256xf32>, i32 -> vector<2x256xf32>
    %c19_i32_62 = arith.constant 19 : i32
    %228 = tpu.dynamic_rotate %26 by %c19_i32_62 dim 1 : vector<2x256xf32>, i32 -> vector<2x256xf32>
    %c14 = arith.constant 14 : index
    %c0_63 = arith.constant 0 : index
    %229 = vector.load %arg4[%c14, %c0_63] : memref<98x256xf32, #tpu.memory_space<vmem>>, vector<1x256xf32>
    %230 = vector.shape_cast %229 : vector<1x256xf32> to vector<256xf32>
    %231 = vector.shape_cast %230 : vector<256xf32> to vector<1x256xf32>
    %232 = vector.broadcast %231 : vector<1x256xf32> to vector<2x256xf32>
    %233 = arith.mulf %232, %227 : vector<2x256xf32>
    %234 = arith.addf %206, %233 : vector<2x256xf32>
    %c63 = arith.constant 63 : index
    %c0_64 = arith.constant 0 : index
    %235 = vector.load %arg4[%c63, %c0_64] : memref<98x256xf32, #tpu.memory_space<vmem>>, vector<1x256xf32>
    %236 = vector.shape_cast %235 : vector<1x256xf32> to vector<256xf32>
    %237 = vector.shape_cast %236 : vector<256xf32> to vector<1x256xf32>
    %238 = vector.broadcast %237 : vector<1x256xf32> to vector<2x256xf32>
    %239 = arith.mulf %238, %228 : vector<2x256xf32>
    %240 = arith.addf %212, %239 : vector<2x256xf32>
    %c18_i32 = arith.constant 18 : i32
    %241 = tpu.dynamic_rotate %23 by %c18_i32 dim 1 : vector<2x256xf32>, i32 -> vector<2x256xf32>
    %c18_i32_65 = arith.constant 18 : i32
    %242 = tpu.dynamic_rotate %26 by %c18_i32_65 dim 1 : vector<2x256xf32>, i32 -> vector<2x256xf32>
    %c15 = arith.constant 15 : index
    %c0_66 = arith.constant 0 : index
    %243 = vector.load %arg4[%c15, %c0_66] : memref<98x256xf32, #tpu.memory_space<vmem>>, vector<1x256xf32>
    %244 = vector.shape_cast %243 : vector<1x256xf32> to vector<256xf32>
    %245 = vector.shape_cast %244 : vector<256xf32> to vector<1x256xf32>
    %246 = vector.broadcast %245 : vector<1x256xf32> to vector<2x256xf32>
    %247 = arith.mulf %246, %241 : vector<2x256xf32>
    %248 = arith.addf %220, %247 : vector<2x256xf32>
    %c64 = arith.constant 64 : index
    %c0_67 = arith.constant 0 : index
    %249 = vector.load %arg4[%c64, %c0_67] : memref<98x256xf32, #tpu.memory_space<vmem>>, vector<1x256xf32>
    %250 = vector.shape_cast %249 : vector<1x256xf32> to vector<256xf32>
    %251 = vector.shape_cast %250 : vector<256xf32> to vector<1x256xf32>
    %252 = vector.broadcast %251 : vector<1x256xf32> to vector<2x256xf32>
    %253 = arith.mulf %252, %242 : vector<2x256xf32>
    %254 = arith.addf %226, %253 : vector<2x256xf32>
    %c17_i32 = arith.constant 17 : i32
    %255 = tpu.dynamic_rotate %23 by %c17_i32 dim 1 : vector<2x256xf32>, i32 -> vector<2x256xf32>
    %c17_i32_68 = arith.constant 17 : i32
    %256 = tpu.dynamic_rotate %26 by %c17_i32_68 dim 1 : vector<2x256xf32>, i32 -> vector<2x256xf32>
    %c16 = arith.constant 16 : index
    %c0_69 = arith.constant 0 : index
    %257 = vector.load %arg4[%c16, %c0_69] : memref<98x256xf32, #tpu.memory_space<vmem>>, vector<1x256xf32>
    %258 = vector.shape_cast %257 : vector<1x256xf32> to vector<256xf32>
    %259 = vector.shape_cast %258 : vector<256xf32> to vector<1x256xf32>
    %260 = vector.broadcast %259 : vector<1x256xf32> to vector<2x256xf32>
    %261 = arith.mulf %260, %255 : vector<2x256xf32>
    %262 = arith.addf %234, %261 : vector<2x256xf32>
    %c65 = arith.constant 65 : index
    %c0_70 = arith.constant 0 : index
    %263 = vector.load %arg4[%c65, %c0_70] : memref<98x256xf32, #tpu.memory_space<vmem>>, vector<1x256xf32>
    %264 = vector.shape_cast %263 : vector<1x256xf32> to vector<256xf32>
    %265 = vector.shape_cast %264 : vector<256xf32> to vector<1x256xf32>
    %266 = vector.broadcast %265 : vector<1x256xf32> to vector<2x256xf32>
    %267 = arith.mulf %266, %256 : vector<2x256xf32>
    %268 = arith.addf %240, %267 : vector<2x256xf32>
    %c16_i32 = arith.constant 16 : i32
    %269 = tpu.dynamic_rotate %23 by %c16_i32 dim 1 : vector<2x256xf32>, i32 -> vector<2x256xf32>
    %c16_i32_71 = arith.constant 16 : i32
    %270 = tpu.dynamic_rotate %26 by %c16_i32_71 dim 1 : vector<2x256xf32>, i32 -> vector<2x256xf32>
    %c17 = arith.constant 17 : index
    %c0_72 = arith.constant 0 : index
    %271 = vector.load %arg4[%c17, %c0_72] : memref<98x256xf32, #tpu.memory_space<vmem>>, vector<1x256xf32>
    %272 = vector.shape_cast %271 : vector<1x256xf32> to vector<256xf32>
    %273 = vector.shape_cast %272 : vector<256xf32> to vector<1x256xf32>
    %274 = vector.broadcast %273 : vector<1x256xf32> to vector<2x256xf32>
    %275 = arith.mulf %274, %269 : vector<2x256xf32>
    %276 = arith.addf %248, %275 : vector<2x256xf32>
    %c66 = arith.constant 66 : index
    %c0_73 = arith.constant 0 : index
    %277 = vector.load %arg4[%c66, %c0_73] : memref<98x256xf32, #tpu.memory_space<vmem>>, vector<1x256xf32>
    %278 = vector.shape_cast %277 : vector<1x256xf32> to vector<256xf32>
    %279 = vector.shape_cast %278 : vector<256xf32> to vector<1x256xf32>
    %280 = vector.broadcast %279 : vector<1x256xf32> to vector<2x256xf32>
    %281 = arith.mulf %280, %270 : vector<2x256xf32>
    %282 = arith.addf %254, %281 : vector<2x256xf32>
    %c15_i32 = arith.constant 15 : i32
    %283 = tpu.dynamic_rotate %23 by %c15_i32 dim 1 : vector<2x256xf32>, i32 -> vector<2x256xf32>
    %c15_i32_74 = arith.constant 15 : i32
    %284 = tpu.dynamic_rotate %26 by %c15_i32_74 dim 1 : vector<2x256xf32>, i32 -> vector<2x256xf32>
    %c18 = arith.constant 18 : index
    %c0_75 = arith.constant 0 : index
    %285 = vector.load %arg4[%c18, %c0_75] : memref<98x256xf32, #tpu.memory_space<vmem>>, vector<1x256xf32>
    %286 = vector.shape_cast %285 : vector<1x256xf32> to vector<256xf32>
    %287 = vector.shape_cast %286 : vector<256xf32> to vector<1x256xf32>
    %288 = vector.broadcast %287 : vector<1x256xf32> to vector<2x256xf32>
    %289 = arith.mulf %288, %283 : vector<2x256xf32>
    %290 = arith.addf %262, %289 : vector<2x256xf32>
    %c67 = arith.constant 67 : index
    %c0_76 = arith.constant 0 : index
    %291 = vector.load %arg4[%c67, %c0_76] : memref<98x256xf32, #tpu.memory_space<vmem>>, vector<1x256xf32>
    %292 = vector.shape_cast %291 : vector<1x256xf32> to vector<256xf32>
    %293 = vector.shape_cast %292 : vector<256xf32> to vector<1x256xf32>
    %294 = vector.broadcast %293 : vector<1x256xf32> to vector<2x256xf32>
    %295 = arith.mulf %294, %284 : vector<2x256xf32>
    %296 = arith.addf %268, %295 : vector<2x256xf32>
    %c14_i32 = arith.constant 14 : i32
    %297 = tpu.dynamic_rotate %23 by %c14_i32 dim 1 : vector<2x256xf32>, i32 -> vector<2x256xf32>
    %c14_i32_77 = arith.constant 14 : i32
    %298 = tpu.dynamic_rotate %26 by %c14_i32_77 dim 1 : vector<2x256xf32>, i32 -> vector<2x256xf32>
    %c19 = arith.constant 19 : index
    %c0_78 = arith.constant 0 : index
    %299 = vector.load %arg4[%c19, %c0_78] : memref<98x256xf32, #tpu.memory_space<vmem>>, vector<1x256xf32>
    %300 = vector.shape_cast %299 : vector<1x256xf32> to vector<256xf32>
    %301 = vector.shape_cast %300 : vector<256xf32> to vector<1x256xf32>
    %302 = vector.broadcast %301 : vector<1x256xf32> to vector<2x256xf32>
    %303 = arith.mulf %302, %297 : vector<2x256xf32>
    %304 = arith.addf %276, %303 : vector<2x256xf32>
    %c68 = arith.constant 68 : index
    %c0_79 = arith.constant 0 : index
    %305 = vector.load %arg4[%c68, %c0_79] : memref<98x256xf32, #tpu.memory_space<vmem>>, vector<1x256xf32>
    %306 = vector.shape_cast %305 : vector<1x256xf32> to vector<256xf32>
    %307 = vector.shape_cast %306 : vector<256xf32> to vector<1x256xf32>
    %308 = vector.broadcast %307 : vector<1x256xf32> to vector<2x256xf32>
    %309 = arith.mulf %308, %298 : vector<2x256xf32>
    %310 = arith.addf %282, %309 : vector<2x256xf32>
    %c13_i32 = arith.constant 13 : i32
    %311 = tpu.dynamic_rotate %23 by %c13_i32 dim 1 : vector<2x256xf32>, i32 -> vector<2x256xf32>
    %c13_i32_80 = arith.constant 13 : i32
    %312 = tpu.dynamic_rotate %26 by %c13_i32_80 dim 1 : vector<2x256xf32>, i32 -> vector<2x256xf32>
    %c20 = arith.constant 20 : index
    %c0_81 = arith.constant 0 : index
    %313 = vector.load %arg4[%c20, %c0_81] : memref<98x256xf32, #tpu.memory_space<vmem>>, vector<1x256xf32>
    %314 = vector.shape_cast %313 : vector<1x256xf32> to vector<256xf32>
    %315 = vector.shape_cast %314 : vector<256xf32> to vector<1x256xf32>
    %316 = vector.broadcast %315 : vector<1x256xf32> to vector<2x256xf32>
    %317 = arith.mulf %316, %311 : vector<2x256xf32>
    %318 = arith.addf %290, %317 : vector<2x256xf32>
    %c69 = arith.constant 69 : index
    %c0_82 = arith.constant 0 : index
    %319 = vector.load %arg4[%c69, %c0_82] : memref<98x256xf32, #tpu.memory_space<vmem>>, vector<1x256xf32>
    %320 = vector.shape_cast %319 : vector<1x256xf32> to vector<256xf32>
    %321 = vector.shape_cast %320 : vector<256xf32> to vector<1x256xf32>
    %322 = vector.broadcast %321 : vector<1x256xf32> to vector<2x256xf32>
    %323 = arith.mulf %322, %312 : vector<2x256xf32>
    %324 = arith.addf %296, %323 : vector<2x256xf32>
    %c3_i32 = arith.constant 3 : i32
    %325 = tpu.dynamic_rotate %23 by %c3_i32 dim 1 : vector<2x256xf32>, i32 -> vector<2x256xf32>
    %c3_i32_83 = arith.constant 3 : i32
    %326 = tpu.dynamic_rotate %26 by %c3_i32_83 dim 1 : vector<2x256xf32>, i32 -> vector<2x256xf32>
    %c21 = arith.constant 21 : index
    %c0_84 = arith.constant 0 : index
    %327 = vector.load %arg4[%c21, %c0_84] : memref<98x256xf32, #tpu.memory_space<vmem>>, vector<1x256xf32>
    %328 = vector.shape_cast %327 : vector<1x256xf32> to vector<256xf32>
    %329 = vector.shape_cast %328 : vector<256xf32> to vector<1x256xf32>
    %330 = vector.broadcast %329 : vector<1x256xf32> to vector<2x256xf32>
    %331 = arith.mulf %330, %325 : vector<2x256xf32>
    %332 = arith.addf %304, %331 : vector<2x256xf32>
    %c70 = arith.constant 70 : index
    %c0_85 = arith.constant 0 : index
    %333 = vector.load %arg4[%c70, %c0_85] : memref<98x256xf32, #tpu.memory_space<vmem>>, vector<1x256xf32>
    %334 = vector.shape_cast %333 : vector<1x256xf32> to vector<256xf32>
    %335 = vector.shape_cast %334 : vector<256xf32> to vector<1x256xf32>
    %336 = vector.broadcast %335 : vector<1x256xf32> to vector<2x256xf32>
    %337 = arith.mulf %336, %326 : vector<2x256xf32>
    %338 = arith.addf %310, %337 : vector<2x256xf32>
    %c2_i32 = arith.constant 2 : i32
    %339 = tpu.dynamic_rotate %23 by %c2_i32 dim 1 : vector<2x256xf32>, i32 -> vector<2x256xf32>
    %c2_i32_86 = arith.constant 2 : i32
    %340 = tpu.dynamic_rotate %26 by %c2_i32_86 dim 1 : vector<2x256xf32>, i32 -> vector<2x256xf32>
    %c22 = arith.constant 22 : index
    %c0_87 = arith.constant 0 : index
    %341 = vector.load %arg4[%c22, %c0_87] : memref<98x256xf32, #tpu.memory_space<vmem>>, vector<1x256xf32>
    %342 = vector.shape_cast %341 : vector<1x256xf32> to vector<256xf32>
    %343 = vector.shape_cast %342 : vector<256xf32> to vector<1x256xf32>
    %344 = vector.broadcast %343 : vector<1x256xf32> to vector<2x256xf32>
    %345 = arith.mulf %344, %339 : vector<2x256xf32>
    %346 = arith.addf %318, %345 : vector<2x256xf32>
    %c71 = arith.constant 71 : index
    %c0_88 = arith.constant 0 : index
    %347 = vector.load %arg4[%c71, %c0_88] : memref<98x256xf32, #tpu.memory_space<vmem>>, vector<1x256xf32>
    %348 = vector.shape_cast %347 : vector<1x256xf32> to vector<256xf32>
    %349 = vector.shape_cast %348 : vector<256xf32> to vector<1x256xf32>
    %350 = vector.broadcast %349 : vector<1x256xf32> to vector<2x256xf32>
    %351 = arith.mulf %350, %340 : vector<2x256xf32>
    %352 = arith.addf %324, %351 : vector<2x256xf32>
    %c1_i32 = arith.constant 1 : i32
    %353 = tpu.dynamic_rotate %23 by %c1_i32 dim 1 : vector<2x256xf32>, i32 -> vector<2x256xf32>
    %c1_i32_89 = arith.constant 1 : i32
    %354 = tpu.dynamic_rotate %26 by %c1_i32_89 dim 1 : vector<2x256xf32>, i32 -> vector<2x256xf32>
    %c23 = arith.constant 23 : index
    %c0_90 = arith.constant 0 : index
    %355 = vector.load %arg4[%c23, %c0_90] : memref<98x256xf32, #tpu.memory_space<vmem>>, vector<1x256xf32>
    %356 = vector.shape_cast %355 : vector<1x256xf32> to vector<256xf32>
    %357 = vector.shape_cast %356 : vector<256xf32> to vector<1x256xf32>
    %358 = vector.broadcast %357 : vector<1x256xf32> to vector<2x256xf32>
    %359 = arith.mulf %358, %353 : vector<2x256xf32>
    %360 = arith.addf %332, %359 : vector<2x256xf32>
    %c72 = arith.constant 72 : index
    %c0_91 = arith.constant 0 : index
    %361 = vector.load %arg4[%c72, %c0_91] : memref<98x256xf32, #tpu.memory_space<vmem>>, vector<1x256xf32>
    %362 = vector.shape_cast %361 : vector<1x256xf32> to vector<256xf32>
    %363 = vector.shape_cast %362 : vector<256xf32> to vector<1x256xf32>
    %364 = vector.broadcast %363 : vector<1x256xf32> to vector<2x256xf32>
    %365 = arith.mulf %364, %354 : vector<2x256xf32>
    %366 = arith.addf %338, %365 : vector<2x256xf32>
    %c24 = arith.constant 24 : index
    %c0_92 = arith.constant 0 : index
    %367 = vector.load %arg4[%c24, %c0_92] : memref<98x256xf32, #tpu.memory_space<vmem>>, vector<1x256xf32>
    %368 = vector.shape_cast %367 : vector<1x256xf32> to vector<256xf32>
    %369 = vector.shape_cast %368 : vector<256xf32> to vector<1x256xf32>
    %370 = vector.broadcast %369 : vector<1x256xf32> to vector<2x256xf32>
    %371 = arith.mulf %370, %23 : vector<2x256xf32>
    %372 = arith.addf %346, %371 : vector<2x256xf32>
    %c73 = arith.constant 73 : index
    %c0_93 = arith.constant 0 : index
    %373 = vector.load %arg4[%c73, %c0_93] : memref<98x256xf32, #tpu.memory_space<vmem>>, vector<1x256xf32>
    %374 = vector.shape_cast %373 : vector<1x256xf32> to vector<256xf32>
    %375 = vector.shape_cast %374 : vector<256xf32> to vector<1x256xf32>
    %376 = vector.broadcast %375 : vector<1x256xf32> to vector<2x256xf32>
    %377 = arith.mulf %376, %26 : vector<2x256xf32>
    %378 = arith.addf %352, %377 : vector<2x256xf32>
    %c255_i32 = arith.constant 255 : i32
    %379 = tpu.dynamic_rotate %23 by %c255_i32 dim 1 : vector<2x256xf32>, i32 -> vector<2x256xf32>
    %c255_i32_94 = arith.constant 255 : i32
    %380 = tpu.dynamic_rotate %26 by %c255_i32_94 dim 1 : vector<2x256xf32>, i32 -> vector<2x256xf32>
    %c25 = arith.constant 25 : index
    %c0_95 = arith.constant 0 : index
    %381 = vector.load %arg4[%c25, %c0_95] : memref<98x256xf32, #tpu.memory_space<vmem>>, vector<1x256xf32>
    %382 = vector.shape_cast %381 : vector<1x256xf32> to vector<256xf32>
    %383 = vector.shape_cast %382 : vector<256xf32> to vector<1x256xf32>
    %384 = vector.broadcast %383 : vector<1x256xf32> to vector<2x256xf32>
    %385 = arith.mulf %384, %379 : vector<2x256xf32>
    %386 = arith.addf %360, %385 : vector<2x256xf32>
    %c74 = arith.constant 74 : index
    %c0_96 = arith.constant 0 : index
    %387 = vector.load %arg4[%c74, %c0_96] : memref<98x256xf32, #tpu.memory_space<vmem>>, vector<1x256xf32>
    %388 = vector.shape_cast %387 : vector<1x256xf32> to vector<256xf32>
    %389 = vector.shape_cast %388 : vector<256xf32> to vector<1x256xf32>
    %390 = vector.broadcast %389 : vector<1x256xf32> to vector<2x256xf32>
    %391 = arith.mulf %390, %380 : vector<2x256xf32>
    %392 = arith.addf %366, %391 : vector<2x256xf32>
    %c254_i32 = arith.constant 254 : i32
    %393 = tpu.dynamic_rotate %23 by %c254_i32 dim 1 : vector<2x256xf32>, i32 -> vector<2x256xf32>
    %c254_i32_97 = arith.constant 254 : i32
    %394 = tpu.dynamic_rotate %26 by %c254_i32_97 dim 1 : vector<2x256xf32>, i32 -> vector<2x256xf32>
    %c26 = arith.constant 26 : index
    %c0_98 = arith.constant 0 : index
    %395 = vector.load %arg4[%c26, %c0_98] : memref<98x256xf32, #tpu.memory_space<vmem>>, vector<1x256xf32>
    %396 = vector.shape_cast %395 : vector<1x256xf32> to vector<256xf32>
    %397 = vector.shape_cast %396 : vector<256xf32> to vector<1x256xf32>
    %398 = vector.broadcast %397 : vector<1x256xf32> to vector<2x256xf32>
    %399 = arith.mulf %398, %393 : vector<2x256xf32>
    %400 = arith.addf %372, %399 : vector<2x256xf32>
    %c75 = arith.constant 75 : index
    %c0_99 = arith.constant 0 : index
    %401 = vector.load %arg4[%c75, %c0_99] : memref<98x256xf32, #tpu.memory_space<vmem>>, vector<1x256xf32>
    %402 = vector.shape_cast %401 : vector<1x256xf32> to vector<256xf32>
    %403 = vector.shape_cast %402 : vector<256xf32> to vector<1x256xf32>
    %404 = vector.broadcast %403 : vector<1x256xf32> to vector<2x256xf32>
    %405 = arith.mulf %404, %394 : vector<2x256xf32>
    %406 = arith.addf %378, %405 : vector<2x256xf32>
    %c253_i32 = arith.constant 253 : i32
    %407 = tpu.dynamic_rotate %23 by %c253_i32 dim 1 : vector<2x256xf32>, i32 -> vector<2x256xf32>
    %c253_i32_100 = arith.constant 253 : i32
    %408 = tpu.dynamic_rotate %26 by %c253_i32_100 dim 1 : vector<2x256xf32>, i32 -> vector<2x256xf32>
    %c27 = arith.constant 27 : index
    %c0_101 = arith.constant 0 : index
    %409 = vector.load %arg4[%c27, %c0_101] : memref<98x256xf32, #tpu.memory_space<vmem>>, vector<1x256xf32>
    %410 = vector.shape_cast %409 : vector<1x256xf32> to vector<256xf32>
    %411 = vector.shape_cast %410 : vector<256xf32> to vector<1x256xf32>
    %412 = vector.broadcast %411 : vector<1x256xf32> to vector<2x256xf32>
    %413 = arith.mulf %412, %407 : vector<2x256xf32>
    %414 = arith.addf %386, %413 : vector<2x256xf32>
    %c76 = arith.constant 76 : index
    %c0_102 = arith.constant 0 : index
    %415 = vector.load %arg4[%c76, %c0_102] : memref<98x256xf32, #tpu.memory_space<vmem>>, vector<1x256xf32>
    %416 = vector.shape_cast %415 : vector<1x256xf32> to vector<256xf32>
    %417 = vector.shape_cast %416 : vector<256xf32> to vector<1x256xf32>
    %418 = vector.broadcast %417 : vector<1x256xf32> to vector<2x256xf32>
    %419 = arith.mulf %418, %408 : vector<2x256xf32>
    %420 = arith.addf %392, %419 : vector<2x256xf32>
    %c243_i32 = arith.constant 243 : i32
    %421 = tpu.dynamic_rotate %23 by %c243_i32 dim 1 : vector<2x256xf32>, i32 -> vector<2x256xf32>
    %c243_i32_103 = arith.constant 243 : i32
    %422 = tpu.dynamic_rotate %26 by %c243_i32_103 dim 1 : vector<2x256xf32>, i32 -> vector<2x256xf32>
    %c28 = arith.constant 28 : index
    %c0_104 = arith.constant 0 : index
    %423 = vector.load %arg4[%c28, %c0_104] : memref<98x256xf32, #tpu.memory_space<vmem>>, vector<1x256xf32>
    %424 = vector.shape_cast %423 : vector<1x256xf32> to vector<256xf32>
    %425 = vector.shape_cast %424 : vector<256xf32> to vector<1x256xf32>
    %426 = vector.broadcast %425 : vector<1x256xf32> to vector<2x256xf32>
    %427 = arith.mulf %426, %421 : vector<2x256xf32>
    %428 = arith.addf %400, %427 : vector<2x256xf32>
    %c77 = arith.constant 77 : index
    %c0_105 = arith.constant 0 : index
    %429 = vector.load %arg4[%c77, %c0_105] : memref<98x256xf32, #tpu.memory_space<vmem>>, vector<1x256xf32>
    %430 = vector.shape_cast %429 : vector<1x256xf32> to vector<256xf32>
    %431 = vector.shape_cast %430 : vector<256xf32> to vector<1x256xf32>
    %432 = vector.broadcast %431 : vector<1x256xf32> to vector<2x256xf32>
    %433 = arith.mulf %432, %422 : vector<2x256xf32>
    %434 = arith.addf %406, %433 : vector<2x256xf32>
    %c242_i32 = arith.constant 242 : i32
    %435 = tpu.dynamic_rotate %23 by %c242_i32 dim 1 : vector<2x256xf32>, i32 -> vector<2x256xf32>
    %c242_i32_106 = arith.constant 242 : i32
    %436 = tpu.dynamic_rotate %26 by %c242_i32_106 dim 1 : vector<2x256xf32>, i32 -> vector<2x256xf32>
    %c29 = arith.constant 29 : index
    %c0_107 = arith.constant 0 : index
    %437 = vector.load %arg4[%c29, %c0_107] : memref<98x256xf32, #tpu.memory_space<vmem>>, vector<1x256xf32>
    %438 = vector.shape_cast %437 : vector<1x256xf32> to vector<256xf32>
    %439 = vector.shape_cast %438 : vector<256xf32> to vector<1x256xf32>
    %440 = vector.broadcast %439 : vector<1x256xf32> to vector<2x256xf32>
    %441 = arith.mulf %440, %435 : vector<2x256xf32>
    %442 = arith.addf %414, %441 : vector<2x256xf32>
    %c78 = arith.constant 78 : index
    %c0_108 = arith.constant 0 : index
    %443 = vector.load %arg4[%c78, %c0_108] : memref<98x256xf32, #tpu.memory_space<vmem>>, vector<1x256xf32>
    %444 = vector.shape_cast %443 : vector<1x256xf32> to vector<256xf32>
    %445 = vector.shape_cast %444 : vector<256xf32> to vector<1x256xf32>
    %446 = vector.broadcast %445 : vector<1x256xf32> to vector<2x256xf32>
    %447 = arith.mulf %446, %436 : vector<2x256xf32>
    %448 = arith.addf %420, %447 : vector<2x256xf32>
    %c241_i32 = arith.constant 241 : i32
    %449 = tpu.dynamic_rotate %23 by %c241_i32 dim 1 : vector<2x256xf32>, i32 -> vector<2x256xf32>
    %c241_i32_109 = arith.constant 241 : i32
    %450 = tpu.dynamic_rotate %26 by %c241_i32_109 dim 1 : vector<2x256xf32>, i32 -> vector<2x256xf32>
    %c30 = arith.constant 30 : index
    %c0_110 = arith.constant 0 : index
    %451 = vector.load %arg4[%c30, %c0_110] : memref<98x256xf32, #tpu.memory_space<vmem>>, vector<1x256xf32>
    %452 = vector.shape_cast %451 : vector<1x256xf32> to vector<256xf32>
    %453 = vector.shape_cast %452 : vector<256xf32> to vector<1x256xf32>
    %454 = vector.broadcast %453 : vector<1x256xf32> to vector<2x256xf32>
    %455 = arith.mulf %454, %449 : vector<2x256xf32>
    %456 = arith.addf %428, %455 : vector<2x256xf32>
    %c79 = arith.constant 79 : index
    %c0_111 = arith.constant 0 : index
    %457 = vector.load %arg4[%c79, %c0_111] : memref<98x256xf32, #tpu.memory_space<vmem>>, vector<1x256xf32>
    %458 = vector.shape_cast %457 : vector<1x256xf32> to vector<256xf32>
    %459 = vector.shape_cast %458 : vector<256xf32> to vector<1x256xf32>
    %460 = vector.broadcast %459 : vector<1x256xf32> to vector<2x256xf32>
    %461 = arith.mulf %460, %450 : vector<2x256xf32>
    %462 = arith.addf %434, %461 : vector<2x256xf32>
    %c240_i32 = arith.constant 240 : i32
    %463 = tpu.dynamic_rotate %23 by %c240_i32 dim 1 : vector<2x256xf32>, i32 -> vector<2x256xf32>
    %c240_i32_112 = arith.constant 240 : i32
    %464 = tpu.dynamic_rotate %26 by %c240_i32_112 dim 1 : vector<2x256xf32>, i32 -> vector<2x256xf32>
    %c31 = arith.constant 31 : index
    %c0_113 = arith.constant 0 : index
    %465 = vector.load %arg4[%c31, %c0_113] : memref<98x256xf32, #tpu.memory_space<vmem>>, vector<1x256xf32>
    %466 = vector.shape_cast %465 : vector<1x256xf32> to vector<256xf32>
    %467 = vector.shape_cast %466 : vector<256xf32> to vector<1x256xf32>
    %468 = vector.broadcast %467 : vector<1x256xf32> to vector<2x256xf32>
    %469 = arith.mulf %468, %463 : vector<2x256xf32>
    %470 = arith.addf %442, %469 : vector<2x256xf32>
    %c80 = arith.constant 80 : index
    %c0_114 = arith.constant 0 : index
    %471 = vector.load %arg4[%c80, %c0_114] : memref<98x256xf32, #tpu.memory_space<vmem>>, vector<1x256xf32>
    %472 = vector.shape_cast %471 : vector<1x256xf32> to vector<256xf32>
    %473 = vector.shape_cast %472 : vector<256xf32> to vector<1x256xf32>
    %474 = vector.broadcast %473 : vector<1x256xf32> to vector<2x256xf32>
    %475 = arith.mulf %474, %464 : vector<2x256xf32>
    %476 = arith.addf %448, %475 : vector<2x256xf32>
    %c239_i32 = arith.constant 239 : i32
    %477 = tpu.dynamic_rotate %23 by %c239_i32 dim 1 : vector<2x256xf32>, i32 -> vector<2x256xf32>
    %c239_i32_115 = arith.constant 239 : i32
    %478 = tpu.dynamic_rotate %26 by %c239_i32_115 dim 1 : vector<2x256xf32>, i32 -> vector<2x256xf32>
    %c32 = arith.constant 32 : index
    %c0_116 = arith.constant 0 : index
    %479 = vector.load %arg4[%c32, %c0_116] : memref<98x256xf32, #tpu.memory_space<vmem>>, vector<1x256xf32>
    %480 = vector.shape_cast %479 : vector<1x256xf32> to vector<256xf32>
    %481 = vector.shape_cast %480 : vector<256xf32> to vector<1x256xf32>
    %482 = vector.broadcast %481 : vector<1x256xf32> to vector<2x256xf32>
    %483 = arith.mulf %482, %477 : vector<2x256xf32>
    %484 = arith.addf %456, %483 : vector<2x256xf32>
    %c81 = arith.constant 81 : index
    %c0_117 = arith.constant 0 : index
    %485 = vector.load %arg4[%c81, %c0_117] : memref<98x256xf32, #tpu.memory_space<vmem>>, vector<1x256xf32>
    %486 = vector.shape_cast %485 : vector<1x256xf32> to vector<256xf32>
    %487 = vector.shape_cast %486 : vector<256xf32> to vector<1x256xf32>
    %488 = vector.broadcast %487 : vector<1x256xf32> to vector<2x256xf32>
    %489 = arith.mulf %488, %478 : vector<2x256xf32>
    %490 = arith.addf %462, %489 : vector<2x256xf32>
    %c238_i32 = arith.constant 238 : i32
    %491 = tpu.dynamic_rotate %23 by %c238_i32 dim 1 : vector<2x256xf32>, i32 -> vector<2x256xf32>
    %c238_i32_118 = arith.constant 238 : i32
    %492 = tpu.dynamic_rotate %26 by %c238_i32_118 dim 1 : vector<2x256xf32>, i32 -> vector<2x256xf32>
    %c33 = arith.constant 33 : index
    %c0_119 = arith.constant 0 : index
    %493 = vector.load %arg4[%c33, %c0_119] : memref<98x256xf32, #tpu.memory_space<vmem>>, vector<1x256xf32>
    %494 = vector.shape_cast %493 : vector<1x256xf32> to vector<256xf32>
    %495 = vector.shape_cast %494 : vector<256xf32> to vector<1x256xf32>
    %496 = vector.broadcast %495 : vector<1x256xf32> to vector<2x256xf32>
    %497 = arith.mulf %496, %491 : vector<2x256xf32>
    %498 = arith.addf %470, %497 : vector<2x256xf32>
    %c82 = arith.constant 82 : index
    %c0_120 = arith.constant 0 : index
    %499 = vector.load %arg4[%c82, %c0_120] : memref<98x256xf32, #tpu.memory_space<vmem>>, vector<1x256xf32>
    %500 = vector.shape_cast %499 : vector<1x256xf32> to vector<256xf32>
    %501 = vector.shape_cast %500 : vector<256xf32> to vector<1x256xf32>
    %502 = vector.broadcast %501 : vector<1x256xf32> to vector<2x256xf32>
    %503 = arith.mulf %502, %492 : vector<2x256xf32>
    %504 = arith.addf %476, %503 : vector<2x256xf32>
    %c237_i32 = arith.constant 237 : i32
    %505 = tpu.dynamic_rotate %23 by %c237_i32 dim 1 : vector<2x256xf32>, i32 -> vector<2x256xf32>
    %c237_i32_121 = arith.constant 237 : i32
    %506 = tpu.dynamic_rotate %26 by %c237_i32_121 dim 1 : vector<2x256xf32>, i32 -> vector<2x256xf32>
    %c34 = arith.constant 34 : index
    %c0_122 = arith.constant 0 : index
    %507 = vector.load %arg4[%c34, %c0_122] : memref<98x256xf32, #tpu.memory_space<vmem>>, vector<1x256xf32>
    %508 = vector.shape_cast %507 : vector<1x256xf32> to vector<256xf32>
    %509 = vector.shape_cast %508 : vector<256xf32> to vector<1x256xf32>
    %510 = vector.broadcast %509 : vector<1x256xf32> to vector<2x256xf32>
    %511 = arith.mulf %510, %505 : vector<2x256xf32>
    %512 = arith.addf %484, %511 : vector<2x256xf32>
    %c83 = arith.constant 83 : index
    %c0_123 = arith.constant 0 : index
    %513 = vector.load %arg4[%c83, %c0_123] : memref<98x256xf32, #tpu.memory_space<vmem>>, vector<1x256xf32>
    %514 = vector.shape_cast %513 : vector<1x256xf32> to vector<256xf32>
    %515 = vector.shape_cast %514 : vector<256xf32> to vector<1x256xf32>
    %516 = vector.broadcast %515 : vector<1x256xf32> to vector<2x256xf32>
    %517 = arith.mulf %516, %506 : vector<2x256xf32>
    %518 = arith.addf %490, %517 : vector<2x256xf32>
    %c227_i32 = arith.constant 227 : i32
    %519 = tpu.dynamic_rotate %23 by %c227_i32 dim 1 : vector<2x256xf32>, i32 -> vector<2x256xf32>
    %c227_i32_124 = arith.constant 227 : i32
    %520 = tpu.dynamic_rotate %26 by %c227_i32_124 dim 1 : vector<2x256xf32>, i32 -> vector<2x256xf32>
    %c35 = arith.constant 35 : index
    %c0_125 = arith.constant 0 : index
    %521 = vector.load %arg4[%c35, %c0_125] : memref<98x256xf32, #tpu.memory_space<vmem>>, vector<1x256xf32>
    %522 = vector.shape_cast %521 : vector<1x256xf32> to vector<256xf32>
    %523 = vector.shape_cast %522 : vector<256xf32> to vector<1x256xf32>
    %524 = vector.broadcast %523 : vector<1x256xf32> to vector<2x256xf32>
    %525 = arith.mulf %524, %519 : vector<2x256xf32>
    %526 = arith.addf %498, %525 : vector<2x256xf32>
    %c84 = arith.constant 84 : index
    %c0_126 = arith.constant 0 : index
    %527 = vector.load %arg4[%c84, %c0_126] : memref<98x256xf32, #tpu.memory_space<vmem>>, vector<1x256xf32>
    %528 = vector.shape_cast %527 : vector<1x256xf32> to vector<256xf32>
    %529 = vector.shape_cast %528 : vector<256xf32> to vector<1x256xf32>
    %530 = vector.broadcast %529 : vector<1x256xf32> to vector<2x256xf32>
    %531 = arith.mulf %530, %520 : vector<2x256xf32>
    %532 = arith.addf %504, %531 : vector<2x256xf32>
    %c226_i32 = arith.constant 226 : i32
    %533 = tpu.dynamic_rotate %23 by %c226_i32 dim 1 : vector<2x256xf32>, i32 -> vector<2x256xf32>
    %c226_i32_127 = arith.constant 226 : i32
    %534 = tpu.dynamic_rotate %26 by %c226_i32_127 dim 1 : vector<2x256xf32>, i32 -> vector<2x256xf32>
    %c36 = arith.constant 36 : index
    %c0_128 = arith.constant 0 : index
    %535 = vector.load %arg4[%c36, %c0_128] : memref<98x256xf32, #tpu.memory_space<vmem>>, vector<1x256xf32>
    %536 = vector.shape_cast %535 : vector<1x256xf32> to vector<256xf32>
    %537 = vector.shape_cast %536 : vector<256xf32> to vector<1x256xf32>
    %538 = vector.broadcast %537 : vector<1x256xf32> to vector<2x256xf32>
    %539 = arith.mulf %538, %533 : vector<2x256xf32>
    %540 = arith.addf %512, %539 : vector<2x256xf32>
    %c85 = arith.constant 85 : index
    %c0_129 = arith.constant 0 : index
    %541 = vector.load %arg4[%c85, %c0_129] : memref<98x256xf32, #tpu.memory_space<vmem>>, vector<1x256xf32>
    %542 = vector.shape_cast %541 : vector<1x256xf32> to vector<256xf32>
    %543 = vector.shape_cast %542 : vector<256xf32> to vector<1x256xf32>
    %544 = vector.broadcast %543 : vector<1x256xf32> to vector<2x256xf32>
    %545 = arith.mulf %544, %534 : vector<2x256xf32>
    %546 = arith.addf %518, %545 : vector<2x256xf32>
    %c225_i32 = arith.constant 225 : i32
    %547 = tpu.dynamic_rotate %23 by %c225_i32 dim 1 : vector<2x256xf32>, i32 -> vector<2x256xf32>
    %c225_i32_130 = arith.constant 225 : i32
    %548 = tpu.dynamic_rotate %26 by %c225_i32_130 dim 1 : vector<2x256xf32>, i32 -> vector<2x256xf32>
    %c37 = arith.constant 37 : index
    %c0_131 = arith.constant 0 : index
    %549 = vector.load %arg4[%c37, %c0_131] : memref<98x256xf32, #tpu.memory_space<vmem>>, vector<1x256xf32>
    %550 = vector.shape_cast %549 : vector<1x256xf32> to vector<256xf32>
    %551 = vector.shape_cast %550 : vector<256xf32> to vector<1x256xf32>
    %552 = vector.broadcast %551 : vector<1x256xf32> to vector<2x256xf32>
    %553 = arith.mulf %552, %547 : vector<2x256xf32>
    %554 = arith.addf %526, %553 : vector<2x256xf32>
    %c86 = arith.constant 86 : index
    %c0_132 = arith.constant 0 : index
    %555 = vector.load %arg4[%c86, %c0_132] : memref<98x256xf32, #tpu.memory_space<vmem>>, vector<1x256xf32>
    %556 = vector.shape_cast %555 : vector<1x256xf32> to vector<256xf32>
    %557 = vector.shape_cast %556 : vector<256xf32> to vector<1x256xf32>
    %558 = vector.broadcast %557 : vector<1x256xf32> to vector<2x256xf32>
    %559 = arith.mulf %558, %548 : vector<2x256xf32>
    %560 = arith.addf %532, %559 : vector<2x256xf32>
    %c224_i32 = arith.constant 224 : i32
    %561 = tpu.dynamic_rotate %23 by %c224_i32 dim 1 : vector<2x256xf32>, i32 -> vector<2x256xf32>
    %c224_i32_133 = arith.constant 224 : i32
    %562 = tpu.dynamic_rotate %26 by %c224_i32_133 dim 1 : vector<2x256xf32>, i32 -> vector<2x256xf32>
    %c38 = arith.constant 38 : index
    %c0_134 = arith.constant 0 : index
    %563 = vector.load %arg4[%c38, %c0_134] : memref<98x256xf32, #tpu.memory_space<vmem>>, vector<1x256xf32>
    %564 = vector.shape_cast %563 : vector<1x256xf32> to vector<256xf32>
    %565 = vector.shape_cast %564 : vector<256xf32> to vector<1x256xf32>
    %566 = vector.broadcast %565 : vector<1x256xf32> to vector<2x256xf32>
    %567 = arith.mulf %566, %561 : vector<2x256xf32>
    %568 = arith.addf %540, %567 : vector<2x256xf32>
    %c87 = arith.constant 87 : index
    %c0_135 = arith.constant 0 : index
    %569 = vector.load %arg4[%c87, %c0_135] : memref<98x256xf32, #tpu.memory_space<vmem>>, vector<1x256xf32>
    %570 = vector.shape_cast %569 : vector<1x256xf32> to vector<256xf32>
    %571 = vector.shape_cast %570 : vector<256xf32> to vector<1x256xf32>
    %572 = vector.broadcast %571 : vector<1x256xf32> to vector<2x256xf32>
    %573 = arith.mulf %572, %562 : vector<2x256xf32>
    %574 = arith.addf %546, %573 : vector<2x256xf32>
    %c223_i32 = arith.constant 223 : i32
    %575 = tpu.dynamic_rotate %23 by %c223_i32 dim 1 : vector<2x256xf32>, i32 -> vector<2x256xf32>
    %c223_i32_136 = arith.constant 223 : i32
    %576 = tpu.dynamic_rotate %26 by %c223_i32_136 dim 1 : vector<2x256xf32>, i32 -> vector<2x256xf32>
    %c39 = arith.constant 39 : index
    %c0_137 = arith.constant 0 : index
    %577 = vector.load %arg4[%c39, %c0_137] : memref<98x256xf32, #tpu.memory_space<vmem>>, vector<1x256xf32>
    %578 = vector.shape_cast %577 : vector<1x256xf32> to vector<256xf32>
    %579 = vector.shape_cast %578 : vector<256xf32> to vector<1x256xf32>
    %580 = vector.broadcast %579 : vector<1x256xf32> to vector<2x256xf32>
    %581 = arith.mulf %580, %575 : vector<2x256xf32>
    %582 = arith.addf %554, %581 : vector<2x256xf32>
    %c88 = arith.constant 88 : index
    %c0_138 = arith.constant 0 : index
    %583 = vector.load %arg4[%c88, %c0_138] : memref<98x256xf32, #tpu.memory_space<vmem>>, vector<1x256xf32>
    %584 = vector.shape_cast %583 : vector<1x256xf32> to vector<256xf32>
    %585 = vector.shape_cast %584 : vector<256xf32> to vector<1x256xf32>
    %586 = vector.broadcast %585 : vector<1x256xf32> to vector<2x256xf32>
    %587 = arith.mulf %586, %576 : vector<2x256xf32>
    %588 = arith.addf %560, %587 : vector<2x256xf32>
    %c222_i32 = arith.constant 222 : i32
    %589 = tpu.dynamic_rotate %23 by %c222_i32 dim 1 : vector<2x256xf32>, i32 -> vector<2x256xf32>
    %c222_i32_139 = arith.constant 222 : i32
    %590 = tpu.dynamic_rotate %26 by %c222_i32_139 dim 1 : vector<2x256xf32>, i32 -> vector<2x256xf32>
    %c40 = arith.constant 40 : index
    %c0_140 = arith.constant 0 : index
    %591 = vector.load %arg4[%c40, %c0_140] : memref<98x256xf32, #tpu.memory_space<vmem>>, vector<1x256xf32>
    %592 = vector.shape_cast %591 : vector<1x256xf32> to vector<256xf32>
    %593 = vector.shape_cast %592 : vector<256xf32> to vector<1x256xf32>
    %594 = vector.broadcast %593 : vector<1x256xf32> to vector<2x256xf32>
    %595 = arith.mulf %594, %589 : vector<2x256xf32>
    %596 = arith.addf %568, %595 : vector<2x256xf32>
    %c89 = arith.constant 89 : index
    %c0_141 = arith.constant 0 : index
    %597 = vector.load %arg4[%c89, %c0_141] : memref<98x256xf32, #tpu.memory_space<vmem>>, vector<1x256xf32>
    %598 = vector.shape_cast %597 : vector<1x256xf32> to vector<256xf32>
    %599 = vector.shape_cast %598 : vector<256xf32> to vector<1x256xf32>
    %600 = vector.broadcast %599 : vector<1x256xf32> to vector<2x256xf32>
    %601 = arith.mulf %600, %590 : vector<2x256xf32>
    %602 = arith.addf %574, %601 : vector<2x256xf32>
    %c221_i32 = arith.constant 221 : i32
    %603 = tpu.dynamic_rotate %23 by %c221_i32 dim 1 : vector<2x256xf32>, i32 -> vector<2x256xf32>
    %c221_i32_142 = arith.constant 221 : i32
    %604 = tpu.dynamic_rotate %26 by %c221_i32_142 dim 1 : vector<2x256xf32>, i32 -> vector<2x256xf32>
    %c41 = arith.constant 41 : index
    %c0_143 = arith.constant 0 : index
    %605 = vector.load %arg4[%c41, %c0_143] : memref<98x256xf32, #tpu.memory_space<vmem>>, vector<1x256xf32>
    %606 = vector.shape_cast %605 : vector<1x256xf32> to vector<256xf32>
    %607 = vector.shape_cast %606 : vector<256xf32> to vector<1x256xf32>
    %608 = vector.broadcast %607 : vector<1x256xf32> to vector<2x256xf32>
    %609 = arith.mulf %608, %603 : vector<2x256xf32>
    %610 = arith.addf %582, %609 : vector<2x256xf32>
    %c90 = arith.constant 90 : index
    %c0_144 = arith.constant 0 : index
    %611 = vector.load %arg4[%c90, %c0_144] : memref<98x256xf32, #tpu.memory_space<vmem>>, vector<1x256xf32>
    %612 = vector.shape_cast %611 : vector<1x256xf32> to vector<256xf32>
    %613 = vector.shape_cast %612 : vector<256xf32> to vector<1x256xf32>
    %614 = vector.broadcast %613 : vector<1x256xf32> to vector<2x256xf32>
    %615 = arith.mulf %614, %604 : vector<2x256xf32>
    %616 = arith.addf %588, %615 : vector<2x256xf32>
    %c211_i32 = arith.constant 211 : i32
    %617 = tpu.dynamic_rotate %23 by %c211_i32 dim 1 : vector<2x256xf32>, i32 -> vector<2x256xf32>
    %c211_i32_145 = arith.constant 211 : i32
    %618 = tpu.dynamic_rotate %26 by %c211_i32_145 dim 1 : vector<2x256xf32>, i32 -> vector<2x256xf32>
    %c42 = arith.constant 42 : index
    %c0_146 = arith.constant 0 : index
    %619 = vector.load %arg4[%c42, %c0_146] : memref<98x256xf32, #tpu.memory_space<vmem>>, vector<1x256xf32>
    %620 = vector.shape_cast %619 : vector<1x256xf32> to vector<256xf32>
    %621 = vector.shape_cast %620 : vector<256xf32> to vector<1x256xf32>
    %622 = vector.broadcast %621 : vector<1x256xf32> to vector<2x256xf32>
    %623 = arith.mulf %622, %617 : vector<2x256xf32>
    %624 = arith.addf %596, %623 : vector<2x256xf32>
    %c91 = arith.constant 91 : index
    %c0_147 = arith.constant 0 : index
    %625 = vector.load %arg4[%c91, %c0_147] : memref<98x256xf32, #tpu.memory_space<vmem>>, vector<1x256xf32>
    %626 = vector.shape_cast %625 : vector<1x256xf32> to vector<256xf32>
    %627 = vector.shape_cast %626 : vector<256xf32> to vector<1x256xf32>
    %628 = vector.broadcast %627 : vector<1x256xf32> to vector<2x256xf32>
    %629 = arith.mulf %628, %618 : vector<2x256xf32>
    %630 = arith.addf %602, %629 : vector<2x256xf32>
    %c210_i32 = arith.constant 210 : i32
    %631 = tpu.dynamic_rotate %23 by %c210_i32 dim 1 : vector<2x256xf32>, i32 -> vector<2x256xf32>
    %c210_i32_148 = arith.constant 210 : i32
    %632 = tpu.dynamic_rotate %26 by %c210_i32_148 dim 1 : vector<2x256xf32>, i32 -> vector<2x256xf32>
    %c43 = arith.constant 43 : index
    %c0_149 = arith.constant 0 : index
    %633 = vector.load %arg4[%c43, %c0_149] : memref<98x256xf32, #tpu.memory_space<vmem>>, vector<1x256xf32>
    %634 = vector.shape_cast %633 : vector<1x256xf32> to vector<256xf32>
    %635 = vector.shape_cast %634 : vector<256xf32> to vector<1x256xf32>
    %636 = vector.broadcast %635 : vector<1x256xf32> to vector<2x256xf32>
    %637 = arith.mulf %636, %631 : vector<2x256xf32>
    %638 = arith.addf %610, %637 : vector<2x256xf32>
    %c92 = arith.constant 92 : index
    %c0_150 = arith.constant 0 : index
    %639 = vector.load %arg4[%c92, %c0_150] : memref<98x256xf32, #tpu.memory_space<vmem>>, vector<1x256xf32>
    %640 = vector.shape_cast %639 : vector<1x256xf32> to vector<256xf32>
    %641 = vector.shape_cast %640 : vector<256xf32> to vector<1x256xf32>
    %642 = vector.broadcast %641 : vector<1x256xf32> to vector<2x256xf32>
    %643 = arith.mulf %642, %632 : vector<2x256xf32>
    %644 = arith.addf %616, %643 : vector<2x256xf32>
    %c209_i32 = arith.constant 209 : i32
    %645 = tpu.dynamic_rotate %23 by %c209_i32 dim 1 : vector<2x256xf32>, i32 -> vector<2x256xf32>
    %c209_i32_151 = arith.constant 209 : i32
    %646 = tpu.dynamic_rotate %26 by %c209_i32_151 dim 1 : vector<2x256xf32>, i32 -> vector<2x256xf32>
    %c44 = arith.constant 44 : index
    %c0_152 = arith.constant 0 : index
    %647 = vector.load %arg4[%c44, %c0_152] : memref<98x256xf32, #tpu.memory_space<vmem>>, vector<1x256xf32>
    %648 = vector.shape_cast %647 : vector<1x256xf32> to vector<256xf32>
    %649 = vector.shape_cast %648 : vector<256xf32> to vector<1x256xf32>
    %650 = vector.broadcast %649 : vector<1x256xf32> to vector<2x256xf32>
    %651 = arith.mulf %650, %645 : vector<2x256xf32>
    %652 = arith.addf %624, %651 : vector<2x256xf32>
    %c93 = arith.constant 93 : index
    %c0_153 = arith.constant 0 : index
    %653 = vector.load %arg4[%c93, %c0_153] : memref<98x256xf32, #tpu.memory_space<vmem>>, vector<1x256xf32>
    %654 = vector.shape_cast %653 : vector<1x256xf32> to vector<256xf32>
    %655 = vector.shape_cast %654 : vector<256xf32> to vector<1x256xf32>
    %656 = vector.broadcast %655 : vector<1x256xf32> to vector<2x256xf32>
    %657 = arith.mulf %656, %646 : vector<2x256xf32>
    %658 = arith.addf %630, %657 : vector<2x256xf32>
    %c208_i32 = arith.constant 208 : i32
    %659 = tpu.dynamic_rotate %23 by %c208_i32 dim 1 : vector<2x256xf32>, i32 -> vector<2x256xf32>
    %c208_i32_154 = arith.constant 208 : i32
    %660 = tpu.dynamic_rotate %26 by %c208_i32_154 dim 1 : vector<2x256xf32>, i32 -> vector<2x256xf32>
    %c45 = arith.constant 45 : index
    %c0_155 = arith.constant 0 : index
    %661 = vector.load %arg4[%c45, %c0_155] : memref<98x256xf32, #tpu.memory_space<vmem>>, vector<1x256xf32>
    %662 = vector.shape_cast %661 : vector<1x256xf32> to vector<256xf32>
    %663 = vector.shape_cast %662 : vector<256xf32> to vector<1x256xf32>
    %664 = vector.broadcast %663 : vector<1x256xf32> to vector<2x256xf32>
    %665 = arith.mulf %664, %659 : vector<2x256xf32>
    %666 = arith.addf %638, %665 : vector<2x256xf32>
    %c94 = arith.constant 94 : index
    %c0_156 = arith.constant 0 : index
    %667 = vector.load %arg4[%c94, %c0_156] : memref<98x256xf32, #tpu.memory_space<vmem>>, vector<1x256xf32>
    %668 = vector.shape_cast %667 : vector<1x256xf32> to vector<256xf32>
    %669 = vector.shape_cast %668 : vector<256xf32> to vector<1x256xf32>
    %670 = vector.broadcast %669 : vector<1x256xf32> to vector<2x256xf32>
    %671 = arith.mulf %670, %660 : vector<2x256xf32>
    %672 = arith.addf %644, %671 : vector<2x256xf32>
    %c207_i32 = arith.constant 207 : i32
    %673 = tpu.dynamic_rotate %23 by %c207_i32 dim 1 : vector<2x256xf32>, i32 -> vector<2x256xf32>
    %c207_i32_157 = arith.constant 207 : i32
    %674 = tpu.dynamic_rotate %26 by %c207_i32_157 dim 1 : vector<2x256xf32>, i32 -> vector<2x256xf32>
    %c46 = arith.constant 46 : index
    %c0_158 = arith.constant 0 : index
    %675 = vector.load %arg4[%c46, %c0_158] : memref<98x256xf32, #tpu.memory_space<vmem>>, vector<1x256xf32>
    %676 = vector.shape_cast %675 : vector<1x256xf32> to vector<256xf32>
    %677 = vector.shape_cast %676 : vector<256xf32> to vector<1x256xf32>
    %678 = vector.broadcast %677 : vector<1x256xf32> to vector<2x256xf32>
    %679 = arith.mulf %678, %673 : vector<2x256xf32>
    %680 = arith.addf %652, %679 : vector<2x256xf32>
    %c95 = arith.constant 95 : index
    %c0_159 = arith.constant 0 : index
    %681 = vector.load %arg4[%c95, %c0_159] : memref<98x256xf32, #tpu.memory_space<vmem>>, vector<1x256xf32>
    %682 = vector.shape_cast %681 : vector<1x256xf32> to vector<256xf32>
    %683 = vector.shape_cast %682 : vector<256xf32> to vector<1x256xf32>
    %684 = vector.broadcast %683 : vector<1x256xf32> to vector<2x256xf32>
    %685 = arith.mulf %684, %674 : vector<2x256xf32>
    %686 = arith.addf %658, %685 : vector<2x256xf32>
    %c206_i32 = arith.constant 206 : i32
    %687 = tpu.dynamic_rotate %23 by %c206_i32 dim 1 : vector<2x256xf32>, i32 -> vector<2x256xf32>
    %c206_i32_160 = arith.constant 206 : i32
    %688 = tpu.dynamic_rotate %26 by %c206_i32_160 dim 1 : vector<2x256xf32>, i32 -> vector<2x256xf32>
    %c47 = arith.constant 47 : index
    %c0_161 = arith.constant 0 : index
    %689 = vector.load %arg4[%c47, %c0_161] : memref<98x256xf32, #tpu.memory_space<vmem>>, vector<1x256xf32>
    %690 = vector.shape_cast %689 : vector<1x256xf32> to vector<256xf32>
    %691 = vector.shape_cast %690 : vector<256xf32> to vector<1x256xf32>
    %692 = vector.broadcast %691 : vector<1x256xf32> to vector<2x256xf32>
    %693 = arith.mulf %692, %687 : vector<2x256xf32>
    %694 = arith.addf %666, %693 : vector<2x256xf32>
    %c96 = arith.constant 96 : index
    %c0_162 = arith.constant 0 : index
    %695 = vector.load %arg4[%c96, %c0_162] : memref<98x256xf32, #tpu.memory_space<vmem>>, vector<1x256xf32>
    %696 = vector.shape_cast %695 : vector<1x256xf32> to vector<256xf32>
    %697 = vector.shape_cast %696 : vector<256xf32> to vector<1x256xf32>
    %698 = vector.broadcast %697 : vector<1x256xf32> to vector<2x256xf32>
    %699 = arith.mulf %698, %688 : vector<2x256xf32>
    %700 = arith.addf %672, %699 : vector<2x256xf32>
    %c205_i32 = arith.constant 205 : i32
    %701 = tpu.dynamic_rotate %23 by %c205_i32 dim 1 : vector<2x256xf32>, i32 -> vector<2x256xf32>
    %c205_i32_163 = arith.constant 205 : i32
    %702 = tpu.dynamic_rotate %26 by %c205_i32_163 dim 1 : vector<2x256xf32>, i32 -> vector<2x256xf32>
    %c48 = arith.constant 48 : index
    %c0_164 = arith.constant 0 : index
    %703 = vector.load %arg4[%c48, %c0_164] : memref<98x256xf32, #tpu.memory_space<vmem>>, vector<1x256xf32>
    %704 = vector.shape_cast %703 : vector<1x256xf32> to vector<256xf32>
    %705 = vector.shape_cast %704 : vector<256xf32> to vector<1x256xf32>
    %706 = vector.broadcast %705 : vector<1x256xf32> to vector<2x256xf32>
    %707 = arith.mulf %706, %701 : vector<2x256xf32>
    %708 = arith.addf %680, %707 : vector<2x256xf32>
    %c97 = arith.constant 97 : index
    %c0_165 = arith.constant 0 : index
    %709 = vector.load %arg4[%c97, %c0_165] : memref<98x256xf32, #tpu.memory_space<vmem>>, vector<1x256xf32>
    %710 = vector.shape_cast %709 : vector<1x256xf32> to vector<256xf32>
    %711 = vector.shape_cast %710 : vector<256xf32> to vector<1x256xf32>
    %712 = vector.broadcast %711 : vector<1x256xf32> to vector<2x256xf32>
    %713 = arith.mulf %712, %702 : vector<2x256xf32>
    %714 = arith.addf %686, %713 : vector<2x256xf32>
    %715 = arith.addf %708, %714 : vector<2x256xf32>
    %716 = arith.addf %694, %700 : vector<2x256xf32>
    %717 = arith.addf %715, %716 : vector<2x256xf32>
    %718 = arith.negf %717 : vector<2x256xf32>
    %719 = math.exp %718 : vector<2x256xf32>
    %cst_166 = arith.constant 1.000000e+00 : f32
    %720 = vector.broadcast %cst_166 : f32 to vector<2x256xf32>
    %721 = arith.addf %720, %719 : vector<2x256xf32>
    %722 = arith.divf %720, %721 : vector<2x256xf32>
    %723 = vector.shape_cast %722 : vector<2x256xf32> to vector<2x1x256xf32>
    %724 = vector.broadcast %723 : vector<2x1x256xf32> to vector<2x4x256xf32>
    %725 = arith.mulf %22, %724 : vector<2x4x256xf32>
    %c0_167 = arith.constant 0 : index
    %c0_168 = arith.constant 0 : index
    %c0_169 = arith.constant 0 : index
    %726 = vector.load %arg5[%c0_167, %c0_168, %c0_169] : memref<2x4x256xf32, #tpu.memory_space<vmem>>, vector<2x4x256xf32>
    tpu.vector_store %arg5[%c0_167, %c0_168, %c0_169], %725 {strides = array<i32>} : memref<2x4x256xf32, #tpu.memory_space<vmem>>, vector<2x4x256xf32>,
    %c0_170 = arith.constant 0 : index
    %c0_171 = arith.constant 0 : index
    %c0_172 = arith.constant 0 : index
    %727 = vector.load %arg6[%c0_170, %c0_171, %c0_172] : memref<2x1x256xf32, #tpu.memory_space<vmem>>, vector<2x1x256xf32>
    tpu.vector_store %arg6[%c0_170, %c0_171, %c0_172], %723 {strides = array<i32>} : memref<2x1x256xf32, #tpu.memory_space<vmem>>, vector<2x1x256xf32>,
    return
  }
  func.func @transform_0(%arg0: i32) -> (i32, i32, i32) {
    %c0_i32 = arith.constant 0 : i32
    %c0_i32_0 = arith.constant 0 : i32
    %c0_i32_1 = arith.constant 0 : i32
    return %arg0, %c0_i32, %c0_i32_0 : i32, i32, i32
  }
  func.func @transform_1(%arg0: i32) -> (i32, i32) {
    %c0_i32 = arith.constant 0 : i32
    %c0_i32_0 = arith.constant 0 : i32
    %c0_i32_1 = arith.constant 0 : i32
    return %c0_i32, %c0_i32_0 : i32, i32
  }
  func.func @transform_2(%arg0: i32) -> (i32, i32) {
    %c0_i32 = arith.constant 0 : i32
    %c0_i32_0 = arith.constant 0 : i32
    %c0_i32_1 = arith.constant 0 : i32
    return %c0_i32, %c0_i32_0 : i32, i32
  }
  func.func @transform_3(%arg0: i32) -> (i32, i32) {
    %c0_i32 = arith.constant 0 : i32
    %c0_i32_0 = arith.constant 0 : i32
    %c0_i32_1 = arith.constant 0 : i32
    return %c0_i32, %c0_i32_0 : i32, i32
  }
  func.func @transform_4(%arg0: i32) -> (i32, i32, i32) {
    %c0_i32 = arith.constant 0 : i32
    %c0_i32_0 = arith.constant 0 : i32
    %c0_i32_1 = arith.constant 0 : i32
    return %arg0, %c0_i32, %c0_i32_0 : i32, i32, i32
  }
  func.func @transform_5(%arg0: i32) -> (i32, i32, i32) {
    %c0_i32 = arith.constant 0 : i32
    %c0_i32_0 = arith.constant 0 : i32
    %c0_i32_1 = arith.constant 0 : i32
    return %arg0, %c0_i32, %c0_i32_0 : i32, i32, i32
  }
}

</mosaic_0001>

<llo_original>
// kernel: tpu_custom_call.1
$region0: #{tpu_custom_call.1}
  #allocation0 [shape = 'u32[]', space=smem, size = 0x4, offset = 0x4, fixed_abs, tag = 'smem constant byte address 0x4 - core index']
  #allocation1 [shape = 'u32[144,128]{1,0:T(1,128)}', space=vmem, size = 0x12000, scoped, tag = 'internal scratch']
  %s0 = inlined_call_operand.hbm [shape: f32[2,4,256], index: 0, kind: input, shape index: {}]
  %s1 = inlined_call_operand.vmem [shape: f32[4,1], index: 1, kind: input, shape index: {}]
  %s2 = inlined_call_operand.vmem [shape: f32[1,4], index: 2, kind: input, shape index: {}]
  %s3 = inlined_call_operand.hbm [shape: f32[98,256], index: 3, kind: input, shape index: {}]
  %s4 = inlined_call_operand.hbm [shape: f32[2,4,256], index: 4, kind: output, shape index: {0}]
  %s5 = inlined_call_operand.hbm [shape: f32[2,1,256], index: 5, kind: output, shape index: {1}]
  %6 = xla_tuple %s4, %s5
  %s7 = sld [smem:[#allocation0]]
  $region42: #{tpu_custom_call.1} parent=0
    _
  %s9 = ssub.s32 1, %s7
  %s10 = scalar_select 0, %s9, %s7
  $region1: #{tpu_custom_call.1} parent=0
    #allocation2 [shape = 'u8[8192]{0}', space=vmem, size = 0x2000, scoped, tag = 'input window, operand 0, single buffered']
    #allocation3 [shape = 's32[1]{0}', space=sflag, size = 0x4, scoped, tag = 'scoped memory for tpu_custom_call.1']
    #allocation4 [shape = 's32[1]{0}', space=sflag, size = 0x4, scoped, tag = 'scoped memory for tpu_custom_call.1']
    #allocation5 [shape = 'u8[106496]{0}', space=vmem, size = 0x1a000, scoped, tag = 'input window, operand 3, single buffered']
    #allocation6 [shape = 's32[1]{0}', space=sflag, size = 0x4, scoped, tag = 'scoped memory for tpu_custom_call.1']
    #allocation7 [shape = 'u8[8192]{0}', space=vmem, size = 0x2000, scoped, tag = 'output window, operand 0, single buffered']
    #allocation8 [shape = 'u8[2048]{0}', space=vmem, size = 0x800, scoped, tag = 'output window, operand 1, single buffered']
    #allocation9 [shape = 's32[1]{0}', space=sflag, size = 0x4, scoped, tag = 'scoped memory for tpu_custom_call.1']
    %11 = vsyncpa [#allocation3], 0
    %12 = vsyncpa [#allocation6], 0
    %13 = vsyncpa [#allocation4], 0
    %14 = vsyncpa [#allocation9], 0
    // Predicated region
    $region2: #{tpu_custom_call.1} parent=1 // pred_check
      _
    $region3: #{tpu_custom_call.1} parent=1 // pred_check_branch
      %16 = sbr.rel (0) target = $region5
    $region4: #{tpu_custom_call.1} parent=1 // pred_region
      %s18 = ssub.s32 256, 256
      %19 = vsyncadd [#allocation3], %s18
      %s20 = sshll.u32 [#allocation2], 4
      %s21 = int_to_ptr.vmem [resolvable:$true] %s20
      %26 = dma.hbm_to_vmem [thread:$0]  %s0, 256, %s21, [#allocation3], 128, 128, 8
    $region5: #{tpu_custom_call.1} parent=1 // pred_fallthru
      _
    // Predicated region
    $region6: #{tpu_custom_call.1} parent=1 // pred_check
      _
    $region7: #{tpu_custom_call.1} parent=1 // pred_check_branch
      %28 = sbr.rel (0) target = $region9
    $region8: #{tpu_custom_call.1} parent=1 // pred_region
      _
    $region9: #{tpu_custom_call.1} parent=1 // pred_fallthru
      _
    // Predicated region
    $region10: #{tpu_custom_call.1} parent=1 // pred_check
      _
    $region11: #{tpu_custom_call.1} parent=1 // pred_check_branch
      %30 = sbr.rel (0) target = $region13
    $region12: #{tpu_custom_call.1} parent=1 // pred_region
      _
    $region13: #{tpu_custom_call.1} parent=1 // pred_fallthru
      _
    // Predicated region
    $region14: #{tpu_custom_call.1} parent=1 // pred_check
      _
    $region15: #{tpu_custom_call.1} parent=1 // pred_check_branch
      %32 = sbr.rel (0) target = $region17
    $region16: #{tpu_custom_call.1} parent=1 // pred_region
      %s34 = ssub.s32 3328, 3328
      %35 = vsyncadd [#allocation6], %s34
      %s36 = sshll.u32 [#allocation5], 4
      %s37 = int_to_ptr.vmem [resolvable:$true] %s36
      %42 = dma.hbm_to_vmem [thread:$0]  %s3, 3328, %s37, [#allocation6], 256, 256, 16
    $region17: #{tpu_custom_call.1} parent=1 // pred_fallthru
      _
    // Predicated region
    $region18: #{tpu_custom_call.1} parent=1 // pred_check
      _
    $region19: #{tpu_custom_call.1} parent=1 // pred_check_branch
      %44 = sbr.rel (0) target = $region21
    $region20: #{tpu_custom_call.1} parent=1 // pred_region
      %45 = dma.done [#allocation3], 256
    $region21: #{tpu_custom_call.1} parent=1 // pred_fallthru
      _
    // Predicated region
    $region22: #{tpu_custom_call.1} parent=1 // pred_check
      _
    $region23: #{tpu_custom_call.1} parent=1 // pred_check_branch
      %47 = sbr.rel (0) target = $region25
    $region24: #{tpu_custom_call.1} parent=1 // pred_region
      %48 = dma.done [#allocation6], 3328
    $region25: #{tpu_custom_call.1} parent=1 // pred_fallthru
      _
    %v49 = vld [vmem:[#allocation2] sm:$0xff]
    %v50 = vld [vmem:[#allocation2 + $0x8] sm:$0xff]
    %v53 = vcombine.high %v49, %v49
    %v54 = vcombine.high %v50, %v50
    %vm57 = vcmask 1043456
    %v58 = vsel %vm57, %v49, -inf
    %v59 = vsel %vm57, %v53, -inf
    %v60 = vmax.f32 %v58, %v59
    %61 = vmax.xlane.f32.xlu0 %v60
    %v62 = vpop.xlane.xlu0 %61
    %v63 = vsel %vm57, %v50, -inf
    %v64 = vsel %vm57, %v54, -inf
    %v65 = vmax.f32 %v63, %v64
    %66 = vmax.xlane.f32.xlu0 %v65
    %v67 = vpop.xlane.xlu0 %66
    %v68 = vsel %vm57, %v49, 0.0
    %v69 = vsel %vm57, %v53, 0.0
    %v70 = vadd.f32 %v68, %v69
    %71 = vadd.xlane.f32.xlu0 %v70
    %v72 = vpop.xlane.xlu0 %71
    %v73 = vsel %vm57, %v50, 0.0
    %v74 = vsel %vm57, %v54, 0.0
    %v75 = vadd.f32 %v73, %v74
    %76 = vadd.xlane.f32.xlu0 %v75
    %v77 = vpop.xlane.xlu0 %76
    %v78 = vrcp.pop 256.0
    %v79 = vmul.f32 %v72, %v78
    %v80 = vmul.f32 %v77, %v78
    %v83 = vlaneseq
    %v84 = vand.u32 %v83, 127
    %v85 = vlaneseq
    %v86 = vshrl.u32 %v85, 7
    %v87 = vsub.s32 %v84, %v86
    %v88 = vrot.slane %v62, %v87
    %v89 = vlaneseq
    %v90 = vshrl.u32 %v89, 7
    %v91 = vsub.s32 %v84, %v90
    %v92 = vrot.slane %v67, %v91
    %vm93 = vcmask 1041409
    %v94 = vsel %vm93, %v92, %v88
    %v98 = vlaneseq
    %v99 = vshrl.u32 %v98, 7
    %v100 = vsub.s32 %v84, %v99
    %v101 = vrot.slane %v79, %v100
    %v102 = vlaneseq
    %v103 = vshrl.u32 %v102, 7
    %v104 = vsub.s32 %v84, %v103
    %v105 = vrot.slane %v80, %v104
    %vm106 = vcmask 1043459
    %v107 = vsel %vm106, %v105, %v101
    %vm109 = vcmask 1041408
    %v110 = vsel %vm109, %v94, %v107
    %v111 = vld [vmem:[%s1] sm:$0xf]
    %v112 = vld [vmem:[%s2] sm:$0x1]
    %vm113 = vcmask 31744
    %v115 = vsel %vm113, %v110, 0
    %v118 = vsel %vm57, %v111, 0
    %120 = vmatprep.subr.mxu0 0.0
    %121 = vmatpush1.msra.mxu0 %v118
    %122 = vmatprep.subr.mxu0 0.0
    %123 = vmatpush1.msra.mxu0 0.0
    %124 = vmatprep.subr.mxu0 0.0
    %125 = vmatpush1.msra.mxu0 0.0
    %126 = vmatprep.subr.mxu0 0.0
    %127 = vmatpush1.msra.mxu0 0.0
    %128 = vmatprep.subr.mxu0 0.0
    %129 = vmatpush1.msra.mxu0 0.0
    %130 = vmatprep.subr.mxu0 0.0
    %131 = vmatpush1.msra.mxu0 0.0
    %132 = vmatprep.subr.mxu0 0.0
    %133 = vmatpush1.msra.mxu0 0.0
    %134 = vmatprep.subr.mxu0 0.0
    %135 = vmatpush1.msra.mxu0 0.0
    %136 = vmatprep.subr.mxu0 0.0
    %137 = vmatpush1.msra.mxu0 0.0
    %138 = vmatprep.subr.mxu0 0.0
    %139 = vmatpush1.msra.mxu0 0.0
    %140 = vmatprep.subr.mxu0 0.0
    %141 = vmatpush1.msra.mxu0 0.0
    %142 = vmatprep.subr.mxu0 0.0
    %143 = vmatpush1.msra.mxu0 0.0
    %144 = vmatprep.subr.mxu0 0.0
    %145 = vmatpush1.msra.mxu0 0.0
    %146 = vmatprep.subr.mxu0 0.0
    %147 = vmatpush1.msra.mxu0 0.0
    %148 = vmatprep.subr.mxu0 0.0
    %149 = vmatpush1.msra.mxu0 0.0
    %150 = vmatprep.subr.mxu0 0.0
    %151 = vmatpush1.msra.mxu0 0.0
    %152 = vmatprep.subr.mxu0 0.0
    %153 = vmatpush1.msra.mxu0 0.0
    %154 = vmatprep.subr.mxu0 0.0
    %155 = vmatpush1.msra.mxu0 0.0
    %156 = vmatprep.subr.mxu0 0.0
    %157 = vmatpush1.msra.mxu0 0.0
    %158 = vmatprep.subr.mxu0 0.0
    %159 = vmatpush1.msra.mxu0 0.0
    %160 = vmatprep.subr.mxu0 0.0
    %161 = vmatpush1.msra.mxu0 0.0
    %162 = vmatprep.subr.mxu0 0.0
    %163 = vmatpush1.msra.mxu0 0.0
    %164 = vmatprep.subr.mxu0 0.0
    %165 = vmatpush1.msra.mxu0 0.0
    %166 = vmatprep.subr.mxu0 0.0
    %167 = vmatpush1.msra.mxu0 0.0
    %168 = vmatprep.subr.mxu0 0.0
    %169 = vmatpush1.msra.mxu0 0.0
    %170 = vmatprep.subr.mxu0 0.0
    %171 = vmatpush1.msra.mxu0 0.0
    %172 = vmatprep.subr.mxu0 0.0
    %173 = vmatpush1.msra.mxu0 0.0
    %174 = vmatprep.subr.mxu0 0.0
    %175 = vmatpush1.msra.mxu0 0.0
    %176 = vmatprep.subr.mxu0 0.0
    %177 = vmatpush1.msra.mxu0 0.0
    %178 = vmatprep.subr.mxu0 0.0
    %179 = vmatpush1.msra.mxu0 0.0
    %180 = vmatprep.subr.mxu0 0.0
    %181 = vmatpush1.msra.mxu0 0.0
    %182 = vmatprep.subr.mxu0 0.0
    %183 = vmatpush1.msra.mxu0 0.0
    %184 = vmatprep.mubr.f32.mxu0 0.0
    %185 = vmatmul.mubr.f32.gmra.mrb[0].mxu0 %v115
    %v186 = vpop.f32.mrb[0].mxu0
    %v187 = vadd.f32 0.0, %v186
    %v188 = vpop.f32.mrb[0].mxu0
    %189 = vdwg.mxu0
    %v190 = vmax.f32 %v187, 0.0
    %vm191 = vcmask 7168
    %v193 = vsel %vm191, %v190, 0
    %vm195 = vcmask 1040384
    %v197 = vsel %vm195, %v112, 0
    %199 = vmatprep.subr.mxu0 0.0
    %200 = vmatpush1.msra.mxu0 %v197
    %201 = vmatprep.subr.mxu0 0.0
    %202 = vmatpush1.msra.mxu0 0.0
    %203 = vmatprep.subr.mxu0 0.0
    %204 = vmatpush1.msra.mxu0 0.0
    %205 = vmatprep.subr.mxu0 0.0
    %206 = vmatpush1.msra.mxu0 0.0
    %207 = vmatprep.subr.mxu0 0.0
    %208 = vmatpush1.msra.mxu0 0.0
    %209 = vmatprep.subr.mxu0 0.0
    %210 = vmatpush1.msra.mxu0 0.0
    %211 = vmatprep.subr.mxu0 0.0
    %212 = vmatpush1.msra.mxu0 0.0
    %213 = vmatprep.subr.mxu0 0.0
    %214 = vmatpush1.msra.mxu0 0.0
    %215 = vmatprep.subr.mxu0 0.0
    %216 = vmatpush1.msra.mxu0 0.0
    %217 = vmatprep.subr.mxu0 0.0
    %218 = vmatpush1.msra.mxu0 0.0
    %219 = vmatprep.subr.mxu0 0.0
    %220 = vmatpush1.msra.mxu0 0.0
    %221 = vmatprep.subr.mxu0 0.0
    %222 = vmatpush1.msra.mxu0 0.0
    %223 = vmatprep.subr.mxu0 0.0
    %224 = vmatpush1.msra.mxu0 0.0
    %225 = vmatprep.subr.mxu0 0.0
    %226 = vmatpush1.msra.mxu0 0.0
    %227 = vmatprep.subr.mxu0 0.0
    %228 = vmatpush1.msra.mxu0 0.0
    %229 = vmatprep.subr.mxu0 0.0
    %230 = vmatpush1.msra.mxu0 0.0
    %231 = vmatprep.subr.mxu0 0.0
    %232 = vmatpush1.msra.mxu0 0.0
    %233 = vmatprep.subr.mxu0 0.0
    %234 = vmatpush1.msra.mxu0 0.0
    %235 = vmatprep.subr.mxu0 0.0
    %236 = vmatpush1.msra.mxu0 0.0
    %237 = vmatprep.subr.mxu0 0.0
    %238 = vmatpush1.msra.mxu0 0.0
    %239 = vmatprep.subr.mxu0 0.0
    %240 = vmatpush1.msra.mxu0 0.0
    %241 = vmatprep.subr.mxu0 0.0
    %242 = vmatpush1.msra.mxu0 0.0
    %243 = vmatprep.subr.mxu0 0.0
    %244 = vmatpush1.msra.mxu0 0.0
    %245 = vmatprep.subr.mxu0 0.0
    %246 = vmatpush1.msra.mxu0 0.0
    %247 = vmatprep.subr.mxu0 0.0
    %248 = vmatpush1.msra.mxu0 0.0
    %249 = vmatprep.subr.mxu0 0.0
    %250 = vmatpush1.msra.mxu0 0.0
    %251 = vmatprep.subr.mxu0 0.0
    %252 = vmatpush1.msra.mxu0 0.0
    %253 = vmatprep.subr.mxu0 0.0
    %254 = vmatpush1.msra.mxu0 0.0
    %255 = vmatprep.subr.mxu0 0.0
    %256 = vmatpush1.msra.mxu0 0.0
    %257 = vmatprep.subr.mxu0 0.0
    %258 = vmatpush1.msra.mxu0 0.0
    %259 = vmatprep.subr.mxu0 0.0
    %260 = vmatpush1.msra.mxu0 0.0
    %261 = vmatprep.subr.mxu0 0.0
    %262 = vmatpush1.msra.mxu0 0.0
    %263 = vmatprep.mubr.f32.mxu0 0.0
    %264 = vmatmul.mubr.f32.gmra.mrb[0].mxu0 %v193
    %v265 = vpop.f32.mrb[0].mxu0
    %v266 = vadd.f32 0.0, %v265
    %v267 = vpop.f32.mrb[0].mxu0
    %268 = vdwg.mxu0
    %v270 = vrot.slane %v266, 2
    %v272 = vadd.f32 %v266, %v270
    %v273 = vxor.u32 %v272, 2147483648
    %v274 = vmul.f32 %v273, 1.442695
    %v275 = vpow.pop %v274
    %v276 = vadd.f32 %v275, 1.0
    %v277 = vrcp.pop %v276
    %v278 = vmul.f32 1.0, %v277
    %v279 = vlaneseq
    %v280 = vshrl.u32 %v279, 7
    %v281 = vsub.s32 0, %v280
    %v282 = vrot.slane %v278, %v281
    %284 = vbcast.lane.b32.xlu0 %v282, 256
    %v285 = vpop.permute.xlu0 %284
    %v286 = vlaneseq
    %v287 = vshrl.u32 %v286, 7
    %v288 = vsub.s32 1, %v287
    %v289 = vrot.slane %v278, %v288
    %291 = vbcast.lane.b32.xlu0 %v289, 256
    %v292 = vpop.permute.xlu0 %291
    %v296 = vunpack.c.l.s4 839922192
    %v297 = vunpack.c.0.s8 %v296
    %v298 = vlaneseq
    %v299 = vshrl.u32 %v298, 7
    %v300 = vsub.s32 %v297, %v299
    %v301 = vrot.slane %v285, %v300
    %v303 = vunpack.c.l.s4 839922192
    %v304 = vunpack.c.0.s8 %v303
    %v305 = vlaneseq
    %v306 = vshrl.u32 %v305, 7
    %v307 = vsub.s32 %v304, %v306
    %v308 = vrot.slane %v292, %v307
    %v311 = vmul.f32 %v49, %v301
    %v312 = vmul.f32 %v50, %v308
    %v315 = vcombine.high %v311, %v311
    %v316 = vcombine.high %v312, %v312
    %v319 = vsel %vm57, %v311, -inf
    %v320 = vrot.slane %v319, 4
    %v321 = vmax.f32 %v319, %v320
    %v322 = vrot.slane %v321, 2
    %v323 = vmax.f32 %v321, %v322
    %v324 = vrot.slane %v323, 1
    %v325 = vmax.f32 %v323, %v324
    %v326 = vsel %vm57, %v315, -inf
    %v327 = vrot.slane %v326, 4
    %v328 = vmax.f32 %v326, %v327
    %v329 = vrot.slane %v328, 2
    %v330 = vmax.f32 %v328, %v329
    %v331 = vrot.slane %v330, 1
    %v332 = vmax.f32 %v330, %v331
    %v333 = vsel %vm57, %v312, -inf
    %v334 = vrot.slane %v333, 4
    %v335 = vmax.f32 %v333, %v334
    %v336 = vrot.slane %v335, 2
    %v337 = vmax.f32 %v335, %v336
    %v338 = vrot.slane %v337, 1
    %v339 = vmax.f32 %v337, %v338
    %v340 = vsel %vm57, %v316, -inf
    %v341 = vrot.slane %v340, 4
    %v342 = vmax.f32 %v340, %v341
    %v343 = vrot.slane %v342, 2
    %v344 = vmax.f32 %v342, %v343
    %v345 = vrot.slane %v344, 1
    %v346 = vmax.f32 %v344, %v345
    %v347 = vsel %vm57, %v311, 0.0
    %v348 = vrot.slane %v347, 4
    %v349 = vadd.f32 %v347, %v348
    %v350 = vrot.slane %v349, 2
    %v351 = vadd.f32 %v349, %v350
    %v352 = vrot.slane %v351, 1
    %v353 = vadd.f32 %v351, %v352
    %v354 = vsel %vm57, %v315, 0.0
    %v355 = vrot.slane %v354, 4
    %v356 = vadd.f32 %v354, %v355
    %v357 = vrot.slane %v356, 2
    %v358 = vadd.f32 %v356, %v357
    %v359 = vrot.slane %v358, 1
    %v360 = vadd.f32 %v358, %v359
    %v361 = vsel %vm57, %v312, 0.0
    %v362 = vrot.slane %v361, 4
    %v363 = vadd.f32 %v361, %v362
    %v364 = vrot.slane %v363, 2
    %v365 = vadd.f32 %v363, %v364
    %v366 = vrot.slane %v365, 1
    %v367 = vadd.f32 %v365, %v366
    %v368 = vsel %vm57, %v316, 0.0
    %v369 = vrot.slane %v368, 4
    %v370 = vadd.f32 %v368, %v369
    %v371 = vrot.slane %v370, 2
    %v372 = vadd.f32 %v370, %v371
    %v373 = vrot.slane %v372, 1
    %v374 = vadd.f32 %v372, %v373
    %v375 = vrcp.pop 4.0
    %v376 = vmul.f32 %v353, %v375
    %v377 = vmul.f32 %v360, %v375
    %v378 = vmul.f32 %v367, %v375
    %v379 = vmul.f32 %v374, %v375
    %v384 = vsel %vm93, %v339, %v325
    %v385 = vsel %vm93, %v346, %v332
    %388 = vrot.lane.b32.xlu0 %v384, 51
    %v389 = vpop.permute.xlu0 %388
    %390 = vrot.lane.b32.xlu0 %v385, 51
    %v391 = vpop.permute.xlu0 %390
    %vm392 = vcmp.lt.s32.totalorder %v84, 51
    %v393 = vsel %vm392, %v389, %v391
    %v394 = vsel %vm392, %v391, %v389
    %v399 = vsel %vm93, %v378, %v376
    %v400 = vsel %vm93, %v379, %v377
    %403 = vrot.lane.b32.xlu0 %v399, 51
    %v404 = vpop.permute.xlu0 %403
    %405 = vrot.lane.b32.xlu0 %v400, 51
    %v406 = vpop.permute.xlu0 %405
    %v407 = vsel %vm392, %v404, %v406
    %v408 = vsel %vm392, %v406, %v404
    %v409 = vld [vmem:[#allocation5] ss:$8 sm:$0x3]
    %v411 = vlaneseq
    %v412 = vshrl.u32 %v411, 7
    %v413 = vsub.s32 0, %v412
    %v414 = vrot.slane %v409, %v413
    %v415 = vlaneseq
    %v416 = vshrl.u32 %v415, 7
    %v417 = vsub.s32 1, %v416
    %v418 = vrot.slane %v409, %v417
    %v421 = vmul.f32 %v414, %v394
    %v422 = vmul.f32 %v418, %v393
    %v423 = vadd.f32 %v421, 0.0
    %v424 = vadd.f32 %v422, 0.0
    %s425 = scalar_lea.vmem [#allocation5], 97
    %v426 = vld [vmem:[%s425] ss:$8 sm:$0x3]
    %v428 = vlaneseq
    %v429 = vshrl.u32 %v428, 7
    %v430 = vsub.s32 0, %v429
    %v431 = vrot.slane %v426, %v430
    %v432 = vlaneseq
    %v433 = vshrl.u32 %v432, 7
    %v434 = vsub.s32 1, %v433
    %v435 = vrot.slane %v426, %v434
    %v438 = vmul.f32 %v431, %v408
    %v439 = vmul.f32 %v435, %v407
    %v440 = vadd.f32 %v438, 0.0
    %v441 = vadd.f32 %v439, 0.0
    %442 = vrot.lane.b32.xlu0 %v384, 50
    %v443 = vpop.permute.xlu0 %442
    %444 = vrot.lane.b32.xlu0 %v385, 50
    %v445 = vpop.permute.xlu0 %444
    %vm446 = vcmp.lt.s32.totalorder %v84, 50
    %v447 = vsel %vm446, %v443, %v445
    %v448 = vsel %vm446, %v445, %v443
    %449 = vrot.lane.b32.xlu0 %v399, 50
    %v450 = vpop.permute.xlu0 %449
    %451 = vrot.lane.b32.xlu0 %v400, 50
    %v452 = vpop.permute.xlu0 %451
    %v453 = vsel %vm446, %v450, %v452
    %v454 = vsel %vm446, %v452, %v450
    %s455 = scalar_lea.vmem [#allocation5], 1
    %v456 = vld [vmem:[%s455] ss:$8 sm:$0x3]
    %v458 = vlaneseq
    %v459 = vshrl.u32 %v458, 7
    %v460 = vsub.s32 0, %v459
    %v461 = vrot.slane %v456, %v460
    %v462 = vlaneseq
    %v463 = vshrl.u32 %v462, 7
    %v464 = vsub.s32 1, %v463
    %v465 = vrot.slane %v456, %v464
    %v468 = vmul.f32 %v461, %v448
    %v469 = vmul.f32 %v465, %v447
    %v470 = vadd.f32 %v468, 0.0
    %v471 = vadd.f32 %v469, 0.0
    %s472 = scalar_lea.vmem [#allocation5], 98
    %v473 = vld [vmem:[%s472] ss:$8 sm:$0x3]
    %v475 = vlaneseq
    %v476 = vshrl.u32 %v475, 7
    %v477 = vsub.s32 0, %v476
    %v478 = vrot.slane %v473, %v477
    %v479 = vlaneseq
    %v480 = vshrl.u32 %v479, 7
    %v481 = vsub.s32 1, %v480
    %v482 = vrot.slane %v473, %v481
    %v485 = vmul.f32 %v478, %v454
    %v486 = vmul.f32 %v482, %v453
    %v487 = vadd.f32 %v485, 0.0
    %v488 = vadd.f32 %v486, 0.0
    %489 = vrot.lane.b32.xlu0 %v384, 49
    %v490 = vpop.permute.xlu0 %489
    %491 = vrot.lane.b32.xlu0 %v385, 49
    %v492 = vpop.permute.xlu0 %491
    %vm493 = vcmp.lt.s32.totalorder %v84, 49
    %v494 = vsel %vm493, %v490, %v492
    %v495 = vsel %vm493, %v492, %v490
    %496 = vrot.lane.b32.xlu0 %v399, 49
    %v497 = vpop.permute.xlu0 %496
    %498 = vrot.lane.b32.xlu0 %v400, 49
    %v499 = vpop.permute.xlu0 %498
    %v500 = vsel %vm493, %v497, %v499
    %v501 = vsel %vm493, %v499, %v497
    %s502 = scalar_lea.vmem [#allocation5], 2
    %v503 = vld [vmem:[%s502] ss:$8 sm:$0x3]
    %v505 = vlaneseq
    %v506 = vshrl.u32 %v505, 7
    %v507 = vsub.s32 0, %v506
    %v508 = vrot.slane %v503, %v507
    %v509 = vlaneseq
    %v510 = vshrl.u32 %v509, 7
    %v511 = vsub.s32 1, %v510
    %v512 = vrot.slane %v503, %v511
    %v515 = vmul.f32 %v508, %v495
    %v516 = vmul.f32 %v512, %v494
    %v517 = vadd.f32 %v423, %v515
    %v518 = vadd.f32 %v424, %v516
    %s519 = scalar_lea.vmem [#allocation5], 99
    %v520 = vld [vmem:[%s519] ss:$8 sm:$0x3]
    %v522 = vlaneseq
    %v523 = vshrl.u32 %v522, 7
    %v524 = vsub.s32 0, %v523
    %v525 = vrot.slane %v520, %v524
    %v526 = vlaneseq
    %v527 = vshrl.u32 %v526, 7
    %v528 = vsub.s32 1, %v527
    %v529 = vrot.slane %v520, %v528
    %v532 = vmul.f32 %v525, %v501
    %v533 = vmul.f32 %v529, %v500
    %v534 = vadd.f32 %v440, %v532
    %v535 = vadd.f32 %v441, %v533
    %536 = vrot.lane.b32.xlu0 %v384, 48
    %v537 = vpop.permute.xlu0 %536
    %538 = vrot.lane.b32.xlu0 %v385, 48
    %v539 = vpop.permute.xlu0 %538
    %vm540 = vcmp.lt.s32.totalorder %v84, 48
    %v541 = vsel %vm540, %v537, %v539
    %v542 = vsel %vm540, %v539, %v537
    %543 = vrot.lane.b32.xlu0 %v399, 48
    %v544 = vpop.permute.xlu0 %543
    %545 = vrot.lane.b32.xlu0 %v400, 48
    %v546 = vpop.permute.xlu0 %545
    %v547 = vsel %vm540, %v544, %v546
    %v548 = vsel %vm540, %v546, %v544
    %s549 = scalar_lea.vmem [#allocation5], 3
    %v550 = vld [vmem:[%s549] ss:$8 sm:$0x3]
    %v552 = vlaneseq
    %v553 = vshrl.u32 %v552, 7
    %v554 = vsub.s32 0, %v553
    %v555 = vrot.slane %v550, %v554
    %v556 = vlaneseq
    %v557 = vshrl.u32 %v556, 7
    %v558 = vsub.s32 1, %v557
    %v559 = vrot.slane %v550, %v558
    %v562 = vmul.f32 %v555, %v542
    %v563 = vmul.f32 %v559, %v541
    %v564 = vadd.f32 %v470, %v562
    %v565 = vadd.f32 %v471, %v563
    %s566 = scalar_lea.vmem [#allocation5], 100
    %v567 = vld [vmem:[%s566] ss:$8 sm:$0x3]
    %v569 = vlaneseq
    %v570 = vshrl.u32 %v569, 7
    %v571 = vsub.s32 0, %v570
    %v572 = vrot.slane %v567, %v571
    %v573 = vlaneseq
    %v574 = vshrl.u32 %v573, 7
    %v575 = vsub.s32 1, %v574
    %v576 = vrot.slane %v567, %v575
    %v579 = vmul.f32 %v572, %v548
    %v580 = vmul.f32 %v576, %v547
    %v581 = vadd.f32 %v487, %v579
    %v582 = vadd.f32 %v488, %v580
    %583 = vrot.lane.b32.xlu0 %v384, 47
    %v584 = vpop.permute.xlu0 %583
    %585 = vrot.lane.b32.xlu0 %v385, 47
    %v586 = vpop.permute.xlu0 %585
    %vm587 = vcmp.lt.s32.totalorder %v84, 47
    %v588 = vsel %vm587, %v584, %v586
    %v589 = vsel %vm587, %v586, %v584
    %590 = vrot.lane.b32.xlu0 %v399, 47
    %v591 = vpop.permute.xlu0 %590
    %592 = vrot.lane.b32.xlu0 %v400, 47
    %v593 = vpop.permute.xlu0 %592
    %v594 = vsel %vm587, %v591, %v593
    %v595 = vsel %vm587, %v593, %v591
    %s596 = scalar_lea.vmem [#allocation5], 4
    %v597 = vld [vmem:[%s596] ss:$8 sm:$0x3]
    %v599 = vlaneseq
    %v600 = vshrl.u32 %v599, 7
    %v601 = vsub.s32 0, %v600
    %v602 = vrot.slane %v597, %v601
    %v603 = vlaneseq
    %v604 = vshrl.u32 %v603, 7
    %v605 = vsub.s32 1, %v604
    %v606 = vrot.slane %v597, %v605
    %v609 = vmul.f32 %v602, %v589
    %v610 = vmul.f32 %v606, %v588
    %v611 = vadd.f32 %v517, %v609
    %v612 = vadd.f32 %v518, %v610
    %s613 = scalar_lea.vmem [#allocation5], 101
    %v614 = vld [vmem:[%s613] ss:$8 sm:$0x3]
    %v616 = vlaneseq
    %v617 = vshrl.u32 %v616, 7
    %v618 = vsub.s32 0, %v617
    %v619 = vrot.slane %v614, %v618
    %v620 = vlaneseq
    %v621 = vshrl.u32 %v620, 7
    %v622 = vsub.s32 1, %v621
    %v623 = vrot.slane %v614, %v622
    %v626 = vmul.f32 %v619, %v595
    %v627 = vmul.f32 %v623, %v594
    %v628 = vadd.f32 %v534, %v626
    %v629 = vadd.f32 %v535, %v627
    %630 = vrot.lane.b32.xlu0 %v384, 46
    %v631 = vpop.permute.xlu0 %630
    %632 = vrot.lane.b32.xlu0 %v385, 46
    %v633 = vpop.permute.xlu0 %632
    %vm634 = vcmp.lt.s32.totalorder %v84, 46
    %v635 = vsel %vm634, %v631, %v633
    %v636 = vsel %vm634, %v633, %v631
    %637 = vrot.lane.b32.xlu0 %v399, 46
    %v638 = vpop.permute.xlu0 %637
    %639 = vrot.lane.b32.xlu0 %v400, 46
    %v640 = vpop.permute.xlu0 %639
    %v641 = vsel %vm634, %v638, %v640
    %v642 = vsel %vm634, %v640, %v638
    %s643 = scalar_lea.vmem [#allocation5], 5
    %v644 = vld [vmem:[%s643] ss:$8 sm:$0x3]
    %v646 = vlaneseq
    %v647 = vshrl.u32 %v646, 7
    %v648 = vsub.s32 0, %v647
    %v649 = vrot.slane %v644, %v648
    %v650 = vlaneseq
    %v651 = vshrl.u32 %v650, 7
    %v652 = vsub.s32 1, %v651
    %v653 = vrot.slane %v644, %v652
    %v656 = vmul.f32 %v649, %v636
    %v657 = vmul.f32 %v653, %v635
    %v658 = vadd.f32 %v564, %v656
    %v659 = vadd.f32 %v565, %v657
    %s660 = scalar_lea.vmem [#allocation5], 102
    %v661 = vld [vmem:[%s660] ss:$8 sm:$0x3]
    %v663 = vlaneseq
    %v664 = vshrl.u32 %v663, 7
    %v665 = vsub.s32 0, %v664
    %v666 = vrot.slane %v661, %v665
    %v667 = vlaneseq
    %v668 = vshrl.u32 %v667, 7
    %v669 = vsub.s32 1, %v668
    %v670 = vrot.slane %v661, %v669
    %v673 = vmul.f32 %v666, %v642
    %v674 = vmul.f32 %v670, %v641
    %v675 = vadd.f32 %v581, %v673
    %v676 = vadd.f32 %v582, %v674
    %677 = vrot.lane.b32.xlu0 %v384, 45
    %v678 = vpop.permute.xlu0 %677
    %679 = vrot.lane.b32.xlu0 %v385, 45
    %v680 = vpop.permute.xlu0 %679
    %vm681 = vcmp.lt.s32.totalorder %v84, 45
    %v682 = vsel %vm681, %v678, %v680
    %v683 = vsel %vm681, %v680, %v678
    %684 = vrot.lane.b32.xlu0 %v399, 45
    %v685 = vpop.permute.xlu0 %684
    %686 = vrot.lane.b32.xlu0 %v400, 45
    %v687 = vpop.permute.xlu0 %686
    %v688 = vsel %vm681, %v685, %v687
    %v689 = vsel %vm681, %v687, %v685
    %s690 = scalar_lea.vmem [#allocation5], 6
    %v691 = vld [vmem:[%s690] ss:$8 sm:$0x3]
    %v693 = vlaneseq
    %v694 = vshrl.u32 %v693, 7
    %v695 = vsub.s32 0, %v694
    %v696 = vrot.slane %v691, %v695
    %v697 = vlaneseq
    %v698 = vshrl.u32 %v697, 7
    %v699 = vsub.s32 1, %v698
    %v700 = vrot.slane %v691, %v699
    %v703 = vmul.f32 %v696, %v683
    %v704 = vmul.f32 %v700, %v682
    %v705 = vadd.f32 %v611, %v703
    %v706 = vadd.f32 %v612, %v704
    %s707 = scalar_lea.vmem [#allocation5], 103
    %v708 = vld [vmem:[%s707] ss:$8 sm:$0x3]
    %v710 = vlaneseq
    %v711 = vshrl.u32 %v710, 7
    %v712 = vsub.s32 0, %v711
    %v713 = vrot.slane %v708, %v712
    %v714 = vlaneseq
    %v715 = vshrl.u32 %v714, 7
    %v716 = vsub.s32 1, %v715
    %v717 = vrot.slane %v708, %v716
    %v720 = vmul.f32 %v713, %v689
    %v721 = vmul.f32 %v717, %v688
    %v722 = vadd.f32 %v628, %v720
    %v723 = vadd.f32 %v629, %v721
    %724 = vrot.lane.b32.xlu0 %v384, 35
    %v725 = vpop.permute.xlu0 %724
    %726 = vrot.lane.b32.xlu0 %v385, 35
    %v727 = vpop.permute.xlu0 %726
    %vm728 = vcmp.lt.s32.totalorder %v84, 35
    %v729 = vsel %vm728, %v725, %v727
    %v730 = vsel %vm728, %v727, %v725
    %731 = vrot.lane.b32.xlu0 %v399, 35
    %v732 = vpop.permute.xlu0 %731
    %733 = vrot.lane.b32.xlu0 %v400, 35
    %v734 = vpop.permute.xlu0 %733
    %v735 = vsel %vm728, %v732, %v734
    %v736 = vsel %vm728, %v734, %v732
    %s737 = scalar_lea.vmem [#allocation5], 7
    %v738 = vld [vmem:[%s737] ss:$8 sm:$0x3]
    %v740 = vlaneseq
    %v741 = vshrl.u32 %v740, 7
    %v742 = vsub.s32 0, %v741
    %v743 = vrot.slane %v738, %v742
    %v744 = vlaneseq
    %v745 = vshrl.u32 %v744, 7
    %v746 = vsub.s32 1, %v745
    %v747 = vrot.slane %v738, %v746
    %v750 = vmul.f32 %v743, %v730
    %v751 = vmul.f32 %v747, %v729
    %v752 = vadd.f32 %v658, %v750
    %v753 = vadd.f32 %v659, %v751
    %s754 = scalar_lea.vmem [#allocation5], 112
    %v755 = vld [vmem:[%s754] ss:$8 sm:$0x3]
    %v757 = vlaneseq
    %v758 = vshrl.u32 %v757, 7
    %v759 = vsub.s32 0, %v758
    %v760 = vrot.slane %v755, %v759
    %v761 = vlaneseq
    %v762 = vshrl.u32 %v761, 7
    %v763 = vsub.s32 1, %v762
    %v764 = vrot.slane %v755, %v763
    %v767 = vmul.f32 %v760, %v736
    %v768 = vmul.f32 %v764, %v735
    %v769 = vadd.f32 %v675, %v767
    %v770 = vadd.f32 %v676, %v768
    %771 = vrot.lane.b32.xlu0 %v384, 34
    %v772 = vpop.permute.xlu0 %771
    %773 = vrot.lane.b32.xlu0 %v385, 34
    %v774 = vpop.permute.xlu0 %773
    %vm775 = vcmp.lt.s32.totalorder %v84, 34
    %v776 = vsel %vm775, %v772, %v774
    %v777 = vsel %vm775, %v774, %v772
    %778 = vrot.lane.b32.xlu0 %v399, 34
    %v779 = vpop.permute.xlu0 %778
    %780 = vrot.lane.b32.xlu0 %v400, 34
    %v781 = vpop.permute.xlu0 %780
    %v782 = vsel %vm775, %v779, %v781
    %v783 = vsel %vm775, %v781, %v779
    %s784 = scalar_lea.vmem [#allocation5], 16
    %v785 = vld [vmem:[%s784] ss:$8 sm:$0x3]
    %v787 = vlaneseq
    %v788 = vshrl.u32 %v787, 7
    %v789 = vsub.s32 0, %v788
    %v790 = vrot.slane %v785, %v789
    %v791 = vlaneseq
    %v792 = vshrl.u32 %v791, 7
    %v793 = vsub.s32 1, %v792
    %v794 = vrot.slane %v785, %v793
    %v797 = vmul.f32 %v790, %v777
    %v798 = vmul.f32 %v794, %v776
    %v799 = vadd.f32 %v705, %v797
    %v800 = vadd.f32 %v706, %v798
    %s801 = scalar_lea.vmem [#allocation5], 113
    %v802 = vld [vmem:[%s801] ss:$8 sm:$0x3]
    %v804 = vlaneseq
    %v805 = vshrl.u32 %v804, 7
    %v806 = vsub.s32 0, %v805
    %v807 = vrot.slane %v802, %v806
    %v808 = vlaneseq
    %v809 = vshrl.u32 %v808, 7
    %v810 = vsub.s32 1, %v809
    %v811 = vrot.slane %v802, %v810
    %v814 = vmul.f32 %v807, %v783
    %v815 = vmul.f32 %v811, %v782
    %v816 = vadd.f32 %v722, %v814
    %v817 = vadd.f32 %v723, %v815
    %818 = vrot.lane.b32.xlu0 %v384, 33
    %v819 = vpop.permute.xlu0 %818
    %820 = vrot.lane.b32.xlu0 %v385, 33
    %v821 = vpop.permute.xlu0 %820
    %vm822 = vcmp.lt.s32.totalorder %v84, 33
    %v823 = vsel %vm822, %v819, %v821
    %v824 = vsel %vm822, %v821, %v819
    %825 = vrot.lane.b32.xlu0 %v399, 33
    %v826 = vpop.permute.xlu0 %825
    %827 = vrot.lane.b32.xlu0 %v400, 33
    %v828 = vpop.permute.xlu0 %827
    %v829 = vsel %vm822, %v826, %v828
    %v830 = vsel %vm822, %v828, %v826
    %s831 = scalar_lea.vmem [#allocation5], 17
    %v832 = vld [vmem:[%s831] ss:$8 sm:$0x3]
    %v834 = vlaneseq
    %v835 = vshrl.u32 %v834, 7
    %v836 = vsub.s32 0, %v835
    %v837 = vrot.slane %v832, %v836
    %v838 = vlaneseq
    %v839 = vshrl.u32 %v838, 7
    %v840 = vsub.s32 1, %v839
    %v841 = vrot.slane %v832, %v840
    %v844 = vmul.f32 %v837, %v824
    %v845 = vmul.f32 %v841, %v823
    %v846 = vadd.f32 %v752, %v844
    %v847 = vadd.f32 %v753, %v845
    %s848 = scalar_lea.vmem [#allocation5], 114
    %v849 = vld [vmem:[%s848] ss:$8 sm:$0x3]
    %v851 = vlaneseq
    %v852 = vshrl.u32 %v851, 7
    %v853 = vsub.s32 0, %v852
    %v854 = vrot.slane %v849, %v853
    %v855 = vlaneseq
    %v856 = vshrl.u32 %v855, 7
    %v857 = vsub.s32 1, %v856
    %v858 = vrot.slane %v849, %v857
    %v861 = vmul.f32 %v854, %v830
    %v862 = vmul.f32 %v858, %v829
    %v863 = vadd.f32 %v769, %v861
    %v864 = vadd.f32 %v770, %v862
    %865 = vrot.lane.b32.xlu0 %v384, 32
    %v866 = vpop.permute.xlu0 %865
    %867 = vrot.lane.b32.xlu0 %v385, 32
    %v868 = vpop.permute.xlu0 %867
    %vm869 = vcmp.lt.s32.totalorder %v84, 32
    %v870 = vsel %vm869, %v866, %v868
    %v871 = vsel %vm869, %v868, %v866
    %872 = vrot.lane.b32.xlu0 %v399, 32
    %v873 = vpop.permute.xlu0 %872
    %874 = vrot.lane.b32.xlu0 %v400, 32
    %v875 = vpop.permute.xlu0 %874
    %v876 = vsel %vm869, %v873, %v875
    %v877 = vsel %vm869, %v875, %v873
    %s878 = scalar_lea.vmem [#allocation5], 18
    %v879 = vld [vmem:[%s878] ss:$8 sm:$0x3]
    %v881 = vlaneseq
    %v882 = vshrl.u32 %v881, 7
    %v883 = vsub.s32 0, %v882
    %v884 = vrot.slane %v879, %v883
    %v885 = vlaneseq
    %v886 = vshrl.u32 %v885, 7
    %v887 = vsub.s32 1, %v886
    %v888 = vrot.slane %v879, %v887
    %v891 = vmul.f32 %v884, %v871
    %v892 = vmul.f32 %v888, %v870
    %v893 = vadd.f32 %v799, %v891
    %v894 = vadd.f32 %v800, %v892
    %s895 = scalar_lea.vmem [#allocation5], 115
    %v896 = vld [vmem:[%s895] ss:$8 sm:$0x3]
    %v898 = vlaneseq
    %v899 = vshrl.u32 %v898, 7
    %v900 = vsub.s32 0, %v899
    %v901 = vrot.slane %v896, %v900
    %v902 = vlaneseq
    %v903 = vshrl.u32 %v902, 7
    %v904 = vsub.s32 1, %v903
    %v905 = vrot.slane %v896, %v904
    %v908 = vmul.f32 %v901, %v877
    %v909 = vmul.f32 %v905, %v876
    %v910 = vadd.f32 %v816, %v908
    %v911 = vadd.f32 %v817, %v909
    %912 = vrot.lane.b32.xlu0 %v384, 31
    %v913 = vpop.permute.xlu0 %912
    %914 = vrot.lane.b32.xlu0 %v385, 31
    %v915 = vpop.permute.xlu0 %914
    %vm916 = vcmp.lt.s32.totalorder %v84, 31
    %v917 = vsel %vm916, %v913, %v915
    %v918 = vsel %vm916, %v915, %v913
    %919 = vrot.lane.b32.xlu0 %v399, 31
    %v920 = vpop.permute.xlu0 %919
    %921 = vrot.lane.b32.xlu0 %v400, 31
    %v922 = vpop.permute.xlu0 %921
    %v923 = vsel %vm916, %v920, %v922
    %v924 = vsel %vm916, %v922, %v920
    %s925 = scalar_lea.vmem [#allocation5], 19
    %v926 = vld [vmem:[%s925] ss:$8 sm:$0x3]
    %v928 = vlaneseq
    %v929 = vshrl.u32 %v928, 7
    %v930 = vsub.s32 0, %v929
    %v931 = vrot.slane %v926, %v930
    %v932 = vlaneseq
    %v933 = vshrl.u32 %v932, 7
    %v934 = vsub.s32 1, %v933
    %v935 = vrot.slane %v926, %v934
    %v938 = vmul.f32 %v931, %v918
    %v939 = vmul.f32 %v935, %v917
    %v940 = vadd.f32 %v846, %v938
    %v941 = vadd.f32 %v847, %v939
    %s942 = scalar_lea.vmem [#allocation5], 116
    %v943 = vld [vmem:[%s942] ss:$8 sm:$0x3]
    %v945 = vlaneseq
    %v946 = vshrl.u32 %v945, 7
    %v947 = vsub.s32 0, %v946
    %v948 = vrot.slane %v943, %v947
    %v949 = vlaneseq
    %v950 = vshrl.u32 %v949, 7
    %v951 = vsub.s32 1, %v950
    %v952 = vrot.slane %v943, %v951
    %v955 = vmul.f32 %v948, %v924
    %v956 = vmul.f32 %v952, %v923
    %v957 = vadd.f32 %v863, %v955
    %v958 = vadd.f32 %v864, %v956
    %959 = vrot.lane.b32.xlu0 %v384, 30
    %v960 = vpop.permute.xlu0 %959
    %961 = vrot.lane.b32.xlu0 %v385, 30
    %v962 = vpop.permute.xlu0 %961
    %vm963 = vcmp.lt.s32.totalorder %v84, 30
    %v964 = vsel %vm963, %v960, %v962
    %v965 = vsel %vm963, %v962, %v960
    %966 = vrot.lane.b32.xlu0 %v399, 30
    %v967 = vpop.permute.xlu0 %966
    %968 = vrot.lane.b32.xlu0 %v400, 30
    %v969 = vpop.permute.xlu0 %968
    %v970 = vsel %vm963, %v967, %v969
    %v971 = vsel %vm963, %v969, %v967
    %s972 = scalar_lea.vmem [#allocation5], 20
    %v973 = vld [vmem:[%s972] ss:$8 sm:$0x3]
    %v975 = vlaneseq
    %v976 = vshrl.u32 %v975, 7
    %v977 = vsub.s32 0, %v976
    %v978 = vrot.slane %v973, %v977
    %v979 = vlaneseq
    %v980 = vshrl.u32 %v979, 7
    %v981 = vsub.s32 1, %v980
    %v982 = vrot.slane %v973, %v981
    %v985 = vmul.f32 %v978, %v965
    %v986 = vmul.f32 %v982, %v964
    %v987 = vadd.f32 %v893, %v985
    %v988 = vadd.f32 %v894, %v986
    %s989 = scalar_lea.vmem [#allocation5], 117
    %v990 = vld [vmem:[%s989] ss:$8 sm:$0x3]
    %v992 = vlaneseq
    %v993 = vshrl.u32 %v992, 7
    %v994 = vsub.s32 0, %v993
    %v995 = vrot.slane %v990, %v994
    %v996 = vlaneseq
    %v997 = vshrl.u32 %v996, 7
    %v998 = vsub.s32 1, %v997
    %v999 = vrot.slane %v990, %v998
    %v1002 = vmul.f32 %v995, %v971
    %v1003 = vmul.f32 %v999, %v970
    %v1004 = vadd.f32 %v910, %v1002
    %v1005 = vadd.f32 %v911, %v1003
    %1006 = vrot.lane.b32.xlu0 %v384, 29
    %v1007 = vpop.permute.xlu0 %1006
    %1008 = vrot.lane.b32.xlu0 %v385, 29
    %v1009 = vpop.permute.xlu0 %1008
    %vm1010 = vcmp.lt.s32.totalorder %v84, 29
    %v1011 = vsel %vm1010, %v1007, %v1009
    %v1012 = vsel %vm1010, %v1009, %v1007
    %1013 = vrot.lane.b32.xlu0 %v399, 29
    %v1014 = vpop.permute.xlu0 %1013
    %1015 = vrot.lane.b32.xlu0 %v400, 29
    %v1016 = vpop.permute.xlu0 %1015
    %v1017 = vsel %vm1010, %v1014, %v1016
    %v1018 = vsel %vm1010, %v1016, %v1014
    %s1019 = scalar_lea.vmem [#allocation5], 21
    %v1020 = vld [vmem:[%s1019] ss:$8 sm:$0x3]
    %v1022 = vlaneseq
    %v1023 = vshrl.u32 %v1022, 7
    %v1024 = vsub.s32 0, %v1023
    %v1025 = vrot.slane %v1020, %v1024
    %v1026 = vlaneseq
    %v1027 = vshrl.u32 %v1026, 7
    %v1028 = vsub.s32 1, %v1027
    %v1029 = vrot.slane %v1020, %v1028
    %v1032 = vmul.f32 %v1025, %v1012
    %v1033 = vmul.f32 %v1029, %v1011
    %v1034 = vadd.f32 %v940, %v1032
    %v1035 = vadd.f32 %v941, %v1033
    %s1036 = scalar_lea.vmem [#allocation5], 118
    %v1037 = vld [vmem:[%s1036] ss:$8 sm:$0x3]
    %v1039 = vlaneseq
    %v1040 = vshrl.u32 %v1039, 7
    %v1041 = vsub.s32 0, %v1040
    %v1042 = vrot.slane %v1037, %v1041
    %v1043 = vlaneseq
    %v1044 = vshrl.u32 %v1043, 7
    %v1045 = vsub.s32 1, %v1044
    %v1046 = vrot.slane %v1037, %v1045
    %v1049 = vmul.f32 %v1042, %v1018
    %v1050 = vmul.f32 %v1046, %v1017
    %v1051 = vadd.f32 %v957, %v1049
    %v1052 = vadd.f32 %v958, %v1050
    %1053 = vrot.lane.b32.xlu0 %v384, 19
    %v1054 = vpop.permute.xlu0 %1053
    %1055 = vrot.lane.b32.xlu0 %v385, 19
    %v1056 = vpop.permute.xlu0 %1055
    %vm1057 = vcmp.lt.s32.totalorder %v84, 19
    %v1058 = vsel %vm1057, %v1054, %v1056
    %v1059 = vsel %vm1057, %v1056, %v1054
    %1060 = vrot.lane.b32.xlu0 %v399, 19
    %v1061 = vpop.permute.xlu0 %1060
    %1062 = vrot.lane.b32.xlu0 %v400, 19
    %v1063 = vpop.permute.xlu0 %1062
    %v1064 = vsel %vm1057, %v1061, %v1063
    %v1065 = vsel %vm1057, %v1063, %v1061
    %s1066 = scalar_lea.vmem [#allocation5], 22
    %v1067 = vld [vmem:[%s1066] ss:$8 sm:$0x3]
    %v1069 = vlaneseq
    %v1070 = vshrl.u32 %v1069, 7
    %v1071 = vsub.s32 0, %v1070
    %v1072 = vrot.slane %v1067, %v1071
    %v1073 = vlaneseq
    %v1074 = vshrl.u32 %v1073, 7
    %v1075 = vsub.s32 1, %v1074
    %v1076 = vrot.slane %v1067, %v1075
    %v1079 = vmul.f32 %v1072, %v1059
    %v1080 = vmul.f32 %v1076, %v1058
    %v1081 = vadd.f32 %v987, %v1079
    %v1082 = vadd.f32 %v988, %v1080
    %s1083 = scalar_lea.vmem [#allocation5], 119
    %v1084 = vld [vmem:[%s1083] ss:$8 sm:$0x3]
    %v1086 = vlaneseq
    %v1087 = vshrl.u32 %v1086, 7
    %v1088 = vsub.s32 0, %v1087
    %v1089 = vrot.slane %v1084, %v1088
    %v1090 = vlaneseq
    %v1091 = vshrl.u32 %v1090, 7
    %v1092 = vsub.s32 1, %v1091
    %v1093 = vrot.slane %v1084, %v1092
    %v1096 = vmul.f32 %v1089, %v1065
    %v1097 = vmul.f32 %v1093, %v1064
    %v1098 = vadd.f32 %v1004, %v1096
    %v1099 = vadd.f32 %v1005, %v1097
    %1100 = vrot.lane.b32.xlu0 %v384, 18
    %v1101 = vpop.permute.xlu0 %1100
    %1102 = vrot.lane.b32.xlu0 %v385, 18
    %v1103 = vpop.permute.xlu0 %1102
    %vm1104 = vcmp.lt.s32.totalorder %v84, 18
    %v1105 = vsel %vm1104, %v1101, %v1103
    %v1106 = vsel %vm1104, %v1103, %v1101
    %1107 = vrot.lane.b32.xlu0 %v399, 18
    %v1108 = vpop.permute.xlu0 %1107
    %1109 = vrot.lane.b32.xlu0 %v400, 18
    %v1110 = vpop.permute.xlu0 %1109
    %v1111 = vsel %vm1104, %v1108, %v1110
    %v1112 = vsel %vm1104, %v1110, %v1108
    %s1113 = scalar_lea.vmem [#allocation5], 23
    %v1114 = vld [vmem:[%s1113] ss:$8 sm:$0x3]
    %v1116 = vlaneseq
    %v1117 = vshrl.u32 %v1116, 7
    %v1118 = vsub.s32 0, %v1117
    %v1119 = vrot.slane %v1114, %v1118
    %v1120 = vlaneseq
    %v1121 = vshrl.u32 %v1120, 7
    %v1122 = vsub.s32 1, %v1121
    %v1123 = vrot.slane %v1114, %v1122
    %v1126 = vmul.f32 %v1119, %v1106
    %v1127 = vmul.f32 %v1123, %v1105
    %v1128 = vadd.f32 %v1034, %v1126
    %v1129 = vadd.f32 %v1035, %v1127
    %s1130 = scalar_lea.vmem [#allocation5], 128
    %v1131 = vld [vmem:[%s1130] ss:$8 sm:$0x3]
    %v1133 = vlaneseq
    %v1134 = vshrl.u32 %v1133, 7
    %v1135 = vsub.s32 0, %v1134
    %v1136 = vrot.slane %v1131, %v1135
    %v1137 = vlaneseq
    %v1138 = vshrl.u32 %v1137, 7
    %v1139 = vsub.s32 1, %v1138
    %v1140 = vrot.slane %v1131, %v1139
    %v1143 = vmul.f32 %v1136, %v1112
    %v1144 = vmul.f32 %v1140, %v1111
    %v1145 = vadd.f32 %v1051, %v1143
    %v1146 = vadd.f32 %v1052, %v1144
    %1147 = vrot.lane.b32.xlu0 %v384, 17
    %v1148 = vpop.permute.xlu0 %1147
    %1149 = vrot.lane.b32.xlu0 %v385, 17
    %v1150 = vpop.permute.xlu0 %1149
    %vm1151 = vcmp.lt.s32.totalorder %v84, 17
    %v1152 = vsel %vm1151, %v1148, %v1150
    %v1153 = vsel %vm1151, %v1150, %v1148
    %1154 = vrot.lane.b32.xlu0 %v399, 17
    %v1155 = vpop.permute.xlu0 %1154
    %1156 = vrot.lane.b32.xlu0 %v400, 17
    %v1157 = vpop.permute.xlu0 %1156
    %v1158 = vsel %vm1151, %v1155, %v1157
    %v1159 = vsel %vm1151, %v1157, %v1155
    %s1160 = scalar_lea.vmem [#allocation5], 32
    %v1161 = vld [vmem:[%s1160] ss:$8 sm:$0x3]
    %v1163 = vlaneseq
    %v1164 = vshrl.u32 %v1163, 7
    %v1165 = vsub.s32 0, %v1164
    %v1166 = vrot.slane %v1161, %v1165
    %v1167 = vlaneseq
    %v1168 = vshrl.u32 %v1167, 7
    %v1169 = vsub.s32 1, %v1168
    %v1170 = vrot.slane %v1161, %v1169
    %v1173 = vmul.f32 %v1166, %v1153
    %v1174 = vmul.f32 %v1170, %v1152
    %v1175 = vadd.f32 %v1081, %v1173
    %v1176 = vadd.f32 %v1082, %v1174
    %s1177 = scalar_lea.vmem [#allocation5], 129
    %v1178 = vld [vmem:[%s1177] ss:$8 sm:$0x3]
    %v1180 = vlaneseq
    %v1181 = vshrl.u32 %v1180, 7
    %v1182 = vsub.s32 0, %v1181
    %v1183 = vrot.slane %v1178, %v1182
    %v1184 = vlaneseq
    %v1185 = vshrl.u32 %v1184, 7
    %v1186 = vsub.s32 1, %v1185
    %v1187 = vrot.slane %v1178, %v1186
    %v1190 = vmul.f32 %v1183, %v1159
    %v1191 = vmul.f32 %v1187, %v1158
    %v1192 = vadd.f32 %v1098, %v1190
    %v1193 = vadd.f32 %v1099, %v1191
    %1194 = vrot.lane.b32.xlu0 %v384, 16
    %v1195 = vpop.permute.xlu0 %1194
    %1196 = vrot.lane.b32.xlu0 %v385, 16
    %v1197 = vpop.permute.xlu0 %1196
    %vm1198 = vcmp.lt.s32.totalorder %v84, 16
    %v1199 = vsel %vm1198, %v1195, %v1197
    %v1200 = vsel %vm1198, %v1197, %v1195
    %1201 = vrot.lane.b32.xlu0 %v399, 16
    %v1202 = vpop.permute.xlu0 %1201
    %1203 = vrot.lane.b32.xlu0 %v400, 16
    %v1204 = vpop.permute.xlu0 %1203
    %v1205 = vsel %vm1198, %v1202, %v1204
    %v1206 = vsel %vm1198, %v1204, %v1202
    %s1207 = scalar_lea.vmem [#allocation5], 33
    %v1208 = vld [vmem:[%s1207] ss:$8 sm:$0x3]
    %v1210 = vlaneseq
    %v1211 = vshrl.u32 %v1210, 7
    %v1212 = vsub.s32 0, %v1211
    %v1213 = vrot.slane %v1208, %v1212
    %v1214 = vlaneseq
    %v1215 = vshrl.u32 %v1214, 7
    %v1216 = vsub.s32 1, %v1215
    %v1217 = vrot.slane %v1208, %v1216
    %v1220 = vmul.f32 %v1213, %v1200
    %v1221 = vmul.f32 %v1217, %v1199
    %v1222 = vadd.f32 %v1128, %v1220
    %v1223 = vadd.f32 %v1129, %v1221
    %s1224 = scalar_lea.vmem [#allocation5], 130
    %v1225 = vld [vmem:[%s1224] ss:$8 sm:$0x3]
    %v1227 = vlaneseq
    %v1228 = vshrl.u32 %v1227, 7
    %v1229 = vsub.s32 0, %v1228
    %v1230 = vrot.slane %v1225, %v1229
    %v1231 = vlaneseq
    %v1232 = vshrl.u32 %v1231, 7
    %v1233 = vsub.s32 1, %v1232
    %v1234 = vrot.slane %v1225, %v1233
    %v1237 = vmul.f32 %v1230, %v1206
    %v1238 = vmul.f32 %v1234, %v1205
    %v1239 = vadd.f32 %v1145, %v1237
    %v1240 = vadd.f32 %v1146, %v1238
    %1241 = vrot.lane.b32.xlu0 %v384, 15
    %v1242 = vpop.permute.xlu0 %1241
    %1243 = vrot.lane.b32.xlu0 %v385, 15
    %v1244 = vpop.permute.xlu0 %1243
    %vm1245 = vcmp.lt.s32.totalorder %v84, 15
    %v1246 = vsel %vm1245, %v1242, %v1244
    %v1247 = vsel %vm1245, %v1244, %v1242
    %1248 = vrot.lane.b32.xlu0 %v399, 15
    %v1249 = vpop.permute.xlu0 %1248
    %1250 = vrot.lane.b32.xlu0 %v400, 15
    %v1251 = vpop.permute.xlu0 %1250
    %v1252 = vsel %vm1245, %v1249, %v1251
    %v1253 = vsel %vm1245, %v1251, %v1249
    %s1254 = scalar_lea.vmem [#allocation5], 34
    %v1255 = vld [vmem:[%s1254] ss:$8 sm:$0x3]
    %v1257 = vlaneseq
    %v1258 = vshrl.u32 %v1257, 7
    %v1259 = vsub.s32 0, %v1258
    %v1260 = vrot.slane %v1255, %v1259
    %v1261 = vlaneseq
    %v1262 = vshrl.u32 %v1261, 7
    %v1263 = vsub.s32 1, %v1262
    %v1264 = vrot.slane %v1255, %v1263
    %v1267 = vmul.f32 %v1260, %v1247
    %v1268 = vmul.f32 %v1264, %v1246
    %v1269 = vadd.f32 %v1175, %v1267
    %v1270 = vadd.f32 %v1176, %v1268
    %s1271 = scalar_lea.vmem [#allocation5], 131
    %v1272 = vld [vmem:[%s1271] ss:$8 sm:$0x3]
    %v1274 = vlaneseq
    %v1275 = vshrl.u32 %v1274, 7
    %v1276 = vsub.s32 0, %v1275
    %v1277 = vrot.slane %v1272, %v1276
    %v1278 = vlaneseq
    %v1279 = vshrl.u32 %v1278, 7
    %v1280 = vsub.s32 1, %v1279
    %v1281 = vrot.slane %v1272, %v1280
    %v1284 = vmul.f32 %v1277, %v1253
    %v1285 = vmul.f32 %v1281, %v1252
    %v1286 = vadd.f32 %v1192, %v1284
    %v1287 = vadd.f32 %v1193, %v1285
    %1288 = vrot.lane.b32.xlu0 %v384, 14
    %v1289 = vpop.permute.xlu0 %1288
    %1290 = vrot.lane.b32.xlu0 %v385, 14
    %v1291 = vpop.permute.xlu0 %1290
    %vm1292 = vcmp.lt.s32.totalorder %v84, 14
    %v1293 = vsel %vm1292, %v1289, %v1291
    %v1294 = vsel %vm1292, %v1291, %v1289
    %1295 = vrot.lane.b32.xlu0 %v399, 14
    %v1296 = vpop.permute.xlu0 %1295
    %1297 = vrot.lane.b32.xlu0 %v400, 14
    %v1298 = vpop.permute.xlu0 %1297
    %v1299 = vsel %vm1292, %v1296, %v1298
    %v1300 = vsel %vm1292, %v1298, %v1296
    %s1301 = scalar_lea.vmem [#allocation5], 35
    %v1302 = vld [vmem:[%s1301] ss:$8 sm:$0x3]
    %v1304 = vlaneseq
    %v1305 = vshrl.u32 %v1304, 7
    %v1306 = vsub.s32 0, %v1305
    %v1307 = vrot.slane %v1302, %v1306
    %v1308 = vlaneseq
    %v1309 = vshrl.u32 %v1308, 7
    %v1310 = vsub.s32 1, %v1309
    %v1311 = vrot.slane %v1302, %v1310
    %v1314 = vmul.f32 %v1307, %v1294
    %v1315 = vmul.f32 %v1311, %v1293
    %v1316 = vadd.f32 %v1222, %v1314
    %v1317 = vadd.f32 %v1223, %v1315
    %s1318 = scalar_lea.vmem [#allocation5], 132
    %v1319 = vld [vmem:[%s1318] ss:$8 sm:$0x3]
    %v1321 = vlaneseq
    %v1322 = vshrl.u32 %v1321, 7
    %v1323 = vsub.s32 0, %v1322
    %v1324 = vrot.slane %v1319, %v1323
    %v1325 = vlaneseq
    %v1326 = vshrl.u32 %v1325, 7
    %v1327 = vsub.s32 1, %v1326
    %v1328 = vrot.slane %v1319, %v1327
    %v1331 = vmul.f32 %v1324, %v1300
    %v1332 = vmul.f32 %v1328, %v1299
    %v1333 = vadd.f32 %v1239, %v1331
    %v1334 = vadd.f32 %v1240, %v1332
    %1335 = vrot.lane.b32.xlu0 %v384, 13
    %v1336 = vpop.permute.xlu0 %1335
    %1337 = vrot.lane.b32.xlu0 %v385, 13
    %v1338 = vpop.permute.xlu0 %1337
    %vm1339 = vcmp.lt.s32.totalorder %v84, 13
    %v1340 = vsel %vm1339, %v1336, %v1338
    %v1341 = vsel %vm1339, %v1338, %v1336
    %1342 = vrot.lane.b32.xlu0 %v399, 13
    %v1343 = vpop.permute.xlu0 %1342
    %1344 = vrot.lane.b32.xlu0 %v400, 13
    %v1345 = vpop.permute.xlu0 %1344
    %v1346 = vsel %vm1339, %v1343, %v1345
    %v1347 = vsel %vm1339, %v1345, %v1343
    %s1348 = scalar_lea.vmem [#allocation5], 36
    %v1349 = vld [vmem:[%s1348] ss:$8 sm:$0x3]
    %v1351 = vlaneseq
    %v1352 = vshrl.u32 %v1351, 7
    %v1353 = vsub.s32 0, %v1352
    %v1354 = vrot.slane %v1349, %v1353
    %v1355 = vlaneseq
    %v1356 = vshrl.u32 %v1355, 7
    %v1357 = vsub.s32 1, %v1356
    %v1358 = vrot.slane %v1349, %v1357
    %v1361 = vmul.f32 %v1354, %v1341
    %v1362 = vmul.f32 %v1358, %v1340
    %v1363 = vadd.f32 %v1269, %v1361
    %v1364 = vadd.f32 %v1270, %v1362
    %s1365 = scalar_lea.vmem [#allocation5], 133
    %v1366 = vld [vmem:[%s1365] ss:$8 sm:$0x3]
    %v1368 = vlaneseq
    %v1369 = vshrl.u32 %v1368, 7
    %v1370 = vsub.s32 0, %v1369
    %v1371 = vrot.slane %v1366, %v1370
    %v1372 = vlaneseq
    %v1373 = vshrl.u32 %v1372, 7
    %v1374 = vsub.s32 1, %v1373
    %v1375 = vrot.slane %v1366, %v1374
    %v1378 = vmul.f32 %v1371, %v1347
    %v1379 = vmul.f32 %v1375, %v1346
    %v1380 = vadd.f32 %v1286, %v1378
    %v1381 = vadd.f32 %v1287, %v1379
    %1382 = vrot.lane.b32.xlu0 %v384, 3
    %v1383 = vpop.permute.xlu0 %1382
    %1384 = vrot.lane.b32.xlu0 %v385, 3
    %v1385 = vpop.permute.xlu0 %1384
    %vm1386 = vcmp.lt.s32.totalorder %v84, 3
    %v1387 = vsel %vm1386, %v1383, %v1385
    %v1388 = vsel %vm1386, %v1385, %v1383
    %1389 = vrot.lane.b32.xlu0 %v399, 3
    %v1390 = vpop.permute.xlu0 %1389
    %1391 = vrot.lane.b32.xlu0 %v400, 3
    %v1392 = vpop.permute.xlu0 %1391
    %v1393 = vsel %vm1386, %v1390, %v1392
    %v1394 = vsel %vm1386, %v1392, %v1390
    %s1395 = scalar_lea.vmem [#allocation5], 37
    %v1396 = vld [vmem:[%s1395] ss:$8 sm:$0x3]
    %v1398 = vlaneseq
    %v1399 = vshrl.u32 %v1398, 7
    %v1400 = vsub.s32 0, %v1399
    %v1401 = vrot.slane %v1396, %v1400
    %v1402 = vlaneseq
    %v1403 = vshrl.u32 %v1402, 7
    %v1404 = vsub.s32 1, %v1403
    %v1405 = vrot.slane %v1396, %v1404
    %v1408 = vmul.f32 %v1401, %v1388
    %v1409 = vmul.f32 %v1405, %v1387
    %v1410 = vadd.f32 %v1316, %v1408
    %v1411 = vadd.f32 %v1317, %v1409
    %s1412 = scalar_lea.vmem [#allocation5], 134
    %v1413 = vld [vmem:[%s1412] ss:$8 sm:$0x3]
    %v1415 = vlaneseq
    %v1416 = vshrl.u32 %v1415, 7
    %v1417 = vsub.s32 0, %v1416
    %v1418 = vrot.slane %v1413, %v1417
    %v1419 = vlaneseq
    %v1420 = vshrl.u32 %v1419, 7
    %v1421 = vsub.s32 1, %v1420
    %v1422 = vrot.slane %v1413, %v1421
    %v1425 = vmul.f32 %v1418, %v1394
    %v1426 = vmul.f32 %v1422, %v1393
    %v1427 = vadd.f32 %v1333, %v1425
    %v1428 = vadd.f32 %v1334, %v1426
    %1429 = vrot.lane.b32.xlu0 %v384, 2
    %v1430 = vpop.permute.xlu0 %1429
    %1431 = vrot.lane.b32.xlu0 %v385, 2
    %v1432 = vpop.permute.xlu0 %1431
    %vm1433 = vcmp.lt.s32.totalorder %v84, 2
    %v1434 = vsel %vm1433, %v1430, %v1432
    %v1435 = vsel %vm1433, %v1432, %v1430
    %1436 = vrot.lane.b32.xlu0 %v399, 2
    %v1437 = vpop.permute.xlu0 %1436
    %1438 = vrot.lane.b32.xlu0 %v400, 2
    %v1439 = vpop.permute.xlu0 %1438
    %v1440 = vsel %vm1433, %v1437, %v1439
    %v1441 = vsel %vm1433, %v1439, %v1437
    %s1442 = scalar_lea.vmem [#allocation5], 38
    %v1443 = vld [vmem:[%s1442] ss:$8 sm:$0x3]
    %v1445 = vlaneseq
    %v1446 = vshrl.u32 %v1445, 7
    %v1447 = vsub.s32 0, %v1446
    %v1448 = vrot.slane %v1443, %v1447
    %v1449 = vlaneseq
    %v1450 = vshrl.u32 %v1449, 7
    %v1451 = vsub.s32 1, %v1450
    %v1452 = vrot.slane %v1443, %v1451
    %v1455 = vmul.f32 %v1448, %v1435
    %v1456 = vmul.f32 %v1452, %v1434
    %v1457 = vadd.f32 %v1363, %v1455
    %v1458 = vadd.f32 %v1364, %v1456
    %s1459 = scalar_lea.vmem [#allocation5], 135
    %v1460 = vld [vmem:[%s1459] ss:$8 sm:$0x3]
    %v1462 = vlaneseq
    %v1463 = vshrl.u32 %v1462, 7
    %v1464 = vsub.s32 0, %v1463
    %v1465 = vrot.slane %v1460, %v1464
    %v1466 = vlaneseq
    %v1467 = vshrl.u32 %v1466, 7
    %v1468 = vsub.s32 1, %v1467
    %v1469 = vrot.slane %v1460, %v1468
    %v1472 = vmul.f32 %v1465, %v1441
    %v1473 = vmul.f32 %v1469, %v1440
    %v1474 = vadd.f32 %v1380, %v1472
    %v1475 = vadd.f32 %v1381, %v1473
    %1476 = vrot.lane.b32.xlu0 %v384, 1
    %v1477 = vpop.permute.xlu0 %1476
    %1478 = vrot.lane.b32.xlu0 %v385, 1
    %v1479 = vpop.permute.xlu0 %1478
    %vm1480 = vcmp.lt.s32.totalorder %v84, 1
    %v1481 = vsel %vm1480, %v1477, %v1479
    %v1482 = vsel %vm1480, %v1479, %v1477
    %1483 = vrot.lane.b32.xlu0 %v399, 1
    %v1484 = vpop.permute.xlu0 %1483
    %1485 = vrot.lane.b32.xlu0 %v400, 1
    %v1486 = vpop.permute.xlu0 %1485
    %v1487 = vsel %vm1480, %v1484, %v1486
    %v1488 = vsel %vm1480, %v1486, %v1484
    %s1489 = scalar_lea.vmem [#allocation5], 39
    %v1490 = vld [vmem:[%s1489] ss:$8 sm:$0x3]
    %v1492 = vlaneseq
    %v1493 = vshrl.u32 %v1492, 7
    %v1494 = vsub.s32 0, %v1493
    %v1495 = vrot.slane %v1490, %v1494
    %v1496 = vlaneseq
    %v1497 = vshrl.u32 %v1496, 7
    %v1498 = vsub.s32 1, %v1497
    %v1499 = vrot.slane %v1490, %v1498
    %v1502 = vmul.f32 %v1495, %v1482
    %v1503 = vmul.f32 %v1499, %v1481
    %v1504 = vadd.f32 %v1410, %v1502
    %v1505 = vadd.f32 %v1411, %v1503
    %s1506 = scalar_lea.vmem [#allocation5], 144
    %v1507 = vld [vmem:[%s1506] ss:$8 sm:$0x3]
    %v1509 = vlaneseq
    %v1510 = vshrl.u32 %v1509, 7
    %v1511 = vsub.s32 0, %v1510
    %v1512 = vrot.slane %v1507, %v1511
    %v1513 = vlaneseq
    %v1514 = vshrl.u32 %v1513, 7
    %v1515 = vsub.s32 1, %v1514
    %v1516 = vrot.slane %v1507, %v1515
    %v1519 = vmul.f32 %v1512, %v1488
    %v1520 = vmul.f32 %v1516, %v1487
    %v1521 = vadd.f32 %v1427, %v1519
    %v1522 = vadd.f32 %v1428, %v1520
    %s1523 = scalar_lea.vmem [#allocation5], 48
    %v1524 = vld [vmem:[%s1523] ss:$8 sm:$0x3]
    %v1526 = vlaneseq
    %v1527 = vshrl.u32 %v1526, 7
    %v1528 = vsub.s32 0, %v1527
    %v1529 = vrot.slane %v1524, %v1528
    %v1530 = vlaneseq
    %v1531 = vshrl.u32 %v1530, 7
    %v1532 = vsub.s32 1, %v1531
    %v1533 = vrot.slane %v1524, %v1532
    %v1536 = vmul.f32 %v1529, %v384
    %v1537 = vmul.f32 %v1533, %v385
    %v1538 = vadd.f32 %v1457, %v1536
    %v1539 = vadd.f32 %v1458, %v1537
    %s1540 = scalar_lea.vmem [#allocation5], 145
    %v1541 = vld [vmem:[%s1540] ss:$8 sm:$0x3]
    %v1543 = vlaneseq
    %v1544 = vshrl.u32 %v1543, 7
    %v1545 = vsub.s32 0, %v1544
    %v1546 = vrot.slane %v1541, %v1545
    %v1547 = vlaneseq
    %v1548 = vshrl.u32 %v1547, 7
    %v1549 = vsub.s32 1, %v1548
    %v1550 = vrot.slane %v1541, %v1549
    %v1553 = vmul.f32 %v1546, %v399
    %v1554 = vmul.f32 %v1550, %v400
    %v1555 = vadd.f32 %v1474, %v1553
    %v1556 = vadd.f32 %v1475, %v1554
    %1557 = vrot.lane.b32.xlu0 %v384, 127
    %v1558 = vpop.permute.xlu0 %1557
    %1559 = vrot.lane.b32.xlu0 %v385, 127
    %v1560 = vpop.permute.xlu0 %1559
    %vm1561 = vcmp.lt.s32.totalorder %v84, 127
    %v1562 = vsel %vm1561, %v1558, %v1560
    %v1563 = vsel %vm1561, %v1560, %v1558
    %1564 = vrot.lane.b32.xlu0 %v399, 127
    %v1565 = vpop.permute.xlu0 %1564
    %1566 = vrot.lane.b32.xlu0 %v400, 127
    %v1567 = vpop.permute.xlu0 %1566
    %v1568 = vsel %vm1561, %v1565, %v1567
    %v1569 = vsel %vm1561, %v1567, %v1565
    %s1570 = scalar_lea.vmem [#allocation5], 49
    %v1571 = vld [vmem:[%s1570] ss:$8 sm:$0x3]
    %v1573 = vlaneseq
    %v1574 = vshrl.u32 %v1573, 7
    %v1575 = vsub.s32 0, %v1574
    %v1576 = vrot.slane %v1571, %v1575
    %v1577 = vlaneseq
    %v1578 = vshrl.u32 %v1577, 7
    %v1579 = vsub.s32 1, %v1578
    %v1580 = vrot.slane %v1571, %v1579
    %v1583 = vmul.f32 %v1576, %v1562
    %v1584 = vmul.f32 %v1580, %v1563
    %v1585 = vadd.f32 %v1504, %v1583
    %v1586 = vadd.f32 %v1505, %v1584
    %s1587 = scalar_lea.vmem [#allocation5], 146
    %v1588 = vld [vmem:[%s1587] ss:$8 sm:$0x3]
    %v1590 = vlaneseq
    %v1591 = vshrl.u32 %v1590, 7
    %v1592 = vsub.s32 0, %v1591
    %v1593 = vrot.slane %v1588, %v1592
    %v1594 = vlaneseq
    %v1595 = vshrl.u32 %v1594, 7
    %v1596 = vsub.s32 1, %v1595
    %v1597 = vrot.slane %v1588, %v1596
    %v1600 = vmul.f32 %v1593, %v1568
    %v1601 = vmul.f32 %v1597, %v1569
    %v1602 = vadd.f32 %v1521, %v1600
    %v1603 = vadd.f32 %v1522, %v1601
    %1604 = vrot.lane.b32.xlu0 %v384, 126
    %v1605 = vpop.permute.xlu0 %1604
    %1606 = vrot.lane.b32.xlu0 %v385, 126
    %v1607 = vpop.permute.xlu0 %1606
    %vm1608 = vcmp.lt.s32.totalorder %v84, 126
    %v1609 = vsel %vm1608, %v1605, %v1607
    %v1610 = vsel %vm1608, %v1607, %v1605
    %1611 = vrot.lane.b32.xlu0 %v399, 126
    %v1612 = vpop.permute.xlu0 %1611
    %1613 = vrot.lane.b32.xlu0 %v400, 126
    %v1614 = vpop.permute.xlu0 %1613
    %v1615 = vsel %vm1608, %v1612, %v1614
    %v1616 = vsel %vm1608, %v1614, %v1612
    %s1617 = scalar_lea.vmem [#allocation5], 50
    %v1618 = vld [vmem:[%s1617] ss:$8 sm:$0x3]
    %v1620 = vlaneseq
    %v1621 = vshrl.u32 %v1620, 7
    %v1622 = vsub.s32 0, %v1621
    %v1623 = vrot.slane %v1618, %v1622
    %v1624 = vlaneseq
    %v1625 = vshrl.u32 %v1624, 7
    %v1626 = vsub.s32 1, %v1625
    %v1627 = vrot.slane %v1618, %v1626
    %v1630 = vmul.f32 %v1623, %v1609
    %v1631 = vmul.f32 %v1627, %v1610
    %v1632 = vadd.f32 %v1538, %v1630
    %v1633 = vadd.f32 %v1539, %v1631
    %s1634 = scalar_lea.vmem [#allocation5], 147
    %v1635 = vld [vmem:[%s1634] ss:$8 sm:$0x3]
    %v1637 = vlaneseq
    %v1638 = vshrl.u32 %v1637, 7
    %v1639 = vsub.s32 0, %v1638
    %v1640 = vrot.slane %v1635, %v1639
    %v1641 = vlaneseq
    %v1642 = vshrl.u32 %v1641, 7
    %v1643 = vsub.s32 1, %v1642
    %v1644 = vrot.slane %v1635, %v1643
    %v1647 = vmul.f32 %v1640, %v1615
    %v1648 = vmul.f32 %v1644, %v1616
    %v1649 = vadd.f32 %v1555, %v1647
    %v1650 = vadd.f32 %v1556, %v1648
    %1651 = vrot.lane.b32.xlu0 %v384, 125
    %v1652 = vpop.permute.xlu0 %1651
    %1653 = vrot.lane.b32.xlu0 %v385, 125
    %v1654 = vpop.permute.xlu0 %1653
    %vm1655 = vcmp.lt.s32.totalorder %v84, 125
    %v1656 = vsel %vm1655, %v1652, %v1654
    %v1657 = vsel %vm1655, %v1654, %v1652
    %1658 = vrot.lane.b32.xlu0 %v399, 125
    %v1659 = vpop.permute.xlu0 %1658
    %1660 = vrot.lane.b32.xlu0 %v400, 125
    %v1661 = vpop.permute.xlu0 %1660
    %v1662 = vsel %vm1655, %v1659, %v1661
    %v1663 = vsel %vm1655, %v1661, %v1659
    %s1664 = scalar_lea.vmem [#allocation5], 51
    %v1665 = vld [vmem:[%s1664] ss:$8 sm:$0x3]
    %v1667 = vlaneseq
    %v1668 = vshrl.u32 %v1667, 7
    %v1669 = vsub.s32 0, %v1668
    %v1670 = vrot.slane %v1665, %v1669
    %v1671 = vlaneseq
    %v1672 = vshrl.u32 %v1671, 7
    %v1673 = vsub.s32 1, %v1672
    %v1674 = vrot.slane %v1665, %v1673
    %v1677 = vmul.f32 %v1670, %v1656
    %v1678 = vmul.f32 %v1674, %v1657
    %v1679 = vadd.f32 %v1585, %v1677
    %v1680 = vadd.f32 %v1586, %v1678
    %s1681 = scalar_lea.vmem [#allocation5], 148
    %v1682 = vld [vmem:[%s1681] ss:$8 sm:$0x3]
    %v1684 = vlaneseq
    %v1685 = vshrl.u32 %v1684, 7
    %v1686 = vsub.s32 0, %v1685
    %v1687 = vrot.slane %v1682, %v1686
    %v1688 = vlaneseq
    %v1689 = vshrl.u32 %v1688, 7
    %v1690 = vsub.s32 1, %v1689
    %v1691 = vrot.slane %v1682, %v1690
    %v1694 = vmul.f32 %v1687, %v1662
    %v1695 = vmul.f32 %v1691, %v1663
    %v1696 = vadd.f32 %v1602, %v1694
    %v1697 = vadd.f32 %v1603, %v1695
    %1698 = vrot.lane.b32.xlu0 %v384, 115
    %v1699 = vpop.permute.xlu0 %1698
    %1700 = vrot.lane.b32.xlu0 %v385, 115
    %v1701 = vpop.permute.xlu0 %1700
    %vm1702 = vcmp.lt.s32.totalorder %v84, 115
    %v1703 = vsel %vm1702, %v1699, %v1701
    %v1704 = vsel %vm1702, %v1701, %v1699
    %1705 = vrot.lane.b32.xlu0 %v399, 115
    %v1706 = vpop.permute.xlu0 %1705
    %1707 = vrot.lane.b32.xlu0 %v400, 115
    %v1708 = vpop.permute.xlu0 %1707
    %v1709 = vsel %vm1702, %v1706, %v1708
    %v1710 = vsel %vm1702, %v1708, %v1706
    %s1711 = scalar_lea.vmem [#allocation5], 52
    %v1712 = vld [vmem:[%s1711] ss:$8 sm:$0x3]
    %v1714 = vlaneseq
    %v1715 = vshrl.u32 %v1714, 7
    %v1716 = vsub.s32 0, %v1715
    %v1717 = vrot.slane %v1712, %v1716
    %v1718 = vlaneseq
    %v1719 = vshrl.u32 %v1718, 7
    %v1720 = vsub.s32 1, %v1719
    %v1721 = vrot.slane %v1712, %v1720
    %v1724 = vmul.f32 %v1717, %v1703
    %v1725 = vmul.f32 %v1721, %v1704
    %v1726 = vadd.f32 %v1632, %v1724
    %v1727 = vadd.f32 %v1633, %v1725
    %s1728 = scalar_lea.vmem [#allocation5], 149
    %v1729 = vld [vmem:[%s1728] ss:$8 sm:$0x3]
    %v1731 = vlaneseq
    %v1732 = vshrl.u32 %v1731, 7
    %v1733 = vsub.s32 0, %v1732
    %v1734 = vrot.slane %v1729, %v1733
    %v1735 = vlaneseq
    %v1736 = vshrl.u32 %v1735, 7
    %v1737 = vsub.s32 1, %v1736
    %v1738 = vrot.slane %v1729, %v1737
    %v1741 = vmul.f32 %v1734, %v1709
    %v1742 = vmul.f32 %v1738, %v1710
    %v1743 = vadd.f32 %v1649, %v1741
    %v1744 = vadd.f32 %v1650, %v1742
    %1745 = vrot.lane.b32.xlu0 %v384, 114
    %v1746 = vpop.permute.xlu0 %1745
    %1747 = vrot.lane.b32.xlu0 %v385, 114
    %v1748 = vpop.permute.xlu0 %1747
    %vm1749 = vcmp.lt.s32.totalorder %v84, 114
    %v1750 = vsel %vm1749, %v1746, %v1748
    %v1751 = vsel %vm1749, %v1748, %v1746
    %1752 = vrot.lane.b32.xlu0 %v399, 114
    %v1753 = vpop.permute.xlu0 %1752
    %1754 = vrot.lane.b32.xlu0 %v400, 114
    %v1755 = vpop.permute.xlu0 %1754
    %v1756 = vsel %vm1749, %v1753, %v1755
    %v1757 = vsel %vm1749, %v1755, %v1753
    %s1758 = scalar_lea.vmem [#allocation5], 53
    %v1759 = vld [vmem:[%s1758] ss:$8 sm:$0x3]
    %v1761 = vlaneseq
    %v1762 = vshrl.u32 %v1761, 7
    %v1763 = vsub.s32 0, %v1762
    %v1764 = vrot.slane %v1759, %v1763
    %v1765 = vlaneseq
    %v1766 = vshrl.u32 %v1765, 7
    %v1767 = vsub.s32 1, %v1766
    %v1768 = vrot.slane %v1759, %v1767
    %v1771 = vmul.f32 %v1764, %v1750
    %v1772 = vmul.f32 %v1768, %v1751
    %v1773 = vadd.f32 %v1679, %v1771
    %v1774 = vadd.f32 %v1680, %v1772
    %s1775 = scalar_lea.vmem [#allocation5], 150
    %v1776 = vld [vmem:[%s1775] ss:$8 sm:$0x3]
    %v1778 = vlaneseq
    %v1779 = vshrl.u32 %v1778, 7
    %v1780 = vsub.s32 0, %v1779
    %v1781 = vrot.slane %v1776, %v1780
    %v1782 = vlaneseq
    %v1783 = vshrl.u32 %v1782, 7
    %v1784 = vsub.s32 1, %v1783
    %v1785 = vrot.slane %v1776, %v1784
    %v1788 = vmul.f32 %v1781, %v1756
    %v1789 = vmul.f32 %v1785, %v1757
    %v1790 = vadd.f32 %v1696, %v1788
    %v1791 = vadd.f32 %v1697, %v1789
    %1792 = vrot.lane.b32.xlu0 %v384, 113
    %v1793 = vpop.permute.xlu0 %1792
    %1794 = vrot.lane.b32.xlu0 %v385, 113
    %v1795 = vpop.permute.xlu0 %1794
    %vm1796 = vcmp.lt.s32.totalorder %v84, 113
    %v1797 = vsel %vm1796, %v1793, %v1795
    %v1798 = vsel %vm1796, %v1795, %v1793
    %1799 = vrot.lane.b32.xlu0 %v399, 113
    %v1800 = vpop.permute.xlu0 %1799
    %1801 = vrot.lane.b32.xlu0 %v400, 113
    %v1802 = vpop.permute.xlu0 %1801
    %v1803 = vsel %vm1796, %v1800, %v1802
    %v1804 = vsel %vm1796, %v1802, %v1800
    %s1805 = scalar_lea.vmem [#allocation5], 54
    %v1806 = vld [vmem:[%s1805] ss:$8 sm:$0x3]
    %v1808 = vlaneseq
    %v1809 = vshrl.u32 %v1808, 7
    %v1810 = vsub.s32 0, %v1809
    %v1811 = vrot.slane %v1806, %v1810
    %v1812 = vlaneseq
    %v1813 = vshrl.u32 %v1812, 7
    %v1814 = vsub.s32 1, %v1813
    %v1815 = vrot.slane %v1806, %v1814
    %v1818 = vmul.f32 %v1811, %v1797
    %v1819 = vmul.f32 %v1815, %v1798
    %v1820 = vadd.f32 %v1726, %v1818
    %v1821 = vadd.f32 %v1727, %v1819
    %s1822 = scalar_lea.vmem [#allocation5], 151
    %v1823 = vld [vmem:[%s1822] ss:$8 sm:$0x3]
    %v1825 = vlaneseq
    %v1826 = vshrl.u32 %v1825, 7
    %v1827 = vsub.s32 0, %v1826
    %v1828 = vrot.slane %v1823, %v1827
    %v1829 = vlaneseq
    %v1830 = vshrl.u32 %v1829, 7
    %v1831 = vsub.s32 1, %v1830
    %v1832 = vrot.slane %v1823, %v1831
    %v1835 = vmul.f32 %v1828, %v1803
    %v1836 = vmul.f32 %v1832, %v1804
    %v1837 = vadd.f32 %v1743, %v1835
    %v1838 = vadd.f32 %v1744, %v1836
    %1839 = vrot.lane.b32.xlu0 %v384, 112
    %v1840 = vpop.permute.xlu0 %1839
    %1841 = vrot.lane.b32.xlu0 %v385, 112
    %v1842 = vpop.permute.xlu0 %1841
    %vm1843 = vcmp.lt.s32.totalorder %v84, 112
    %v1844 = vsel %vm1843, %v1840, %v1842
    %v1845 = vsel %vm1843, %v1842, %v1840
    %1846 = vrot.lane.b32.xlu0 %v399, 112
    %v1847 = vpop.permute.xlu0 %1846
    %1848 = vrot.lane.b32.xlu0 %v400, 112
    %v1849 = vpop.permute.xlu0 %1848
    %v1850 = vsel %vm1843, %v1847, %v1849
    %v1851 = vsel %vm1843, %v1849, %v1847
    %s1852 = scalar_lea.vmem [#allocation5], 55
    %v1853 = vld [vmem:[%s1852] ss:$8 sm:$0x3]
    %v1855 = vlaneseq
    %v1856 = vshrl.u32 %v1855, 7
    %v1857 = vsub.s32 0, %v1856
    %v1858 = vrot.slane %v1853, %v1857
    %v1859 = vlaneseq
    %v1860 = vshrl.u32 %v1859, 7
    %v1861 = vsub.s32 1, %v1860
    %v1862 = vrot.slane %v1853, %v1861
    %v1865 = vmul.f32 %v1858, %v1844
    %v1866 = vmul.f32 %v1862, %v1845
    %v1867 = vadd.f32 %v1773, %v1865
    %v1868 = vadd.f32 %v1774, %v1866
    %s1869 = scalar_lea.vmem [#allocation5], 160
    %v1870 = vld [vmem:[%s1869] ss:$8 sm:$0x3]
    %v1872 = vlaneseq
    %v1873 = vshrl.u32 %v1872, 7
    %v1874 = vsub.s32 0, %v1873
    %v1875 = vrot.slane %v1870, %v1874
    %v1876 = vlaneseq
    %v1877 = vshrl.u32 %v1876, 7
    %v1878 = vsub.s32 1, %v1877
    %v1879 = vrot.slane %v1870, %v1878
    %v1882 = vmul.f32 %v1875, %v1850
    %v1883 = vmul.f32 %v1879, %v1851
    %v1884 = vadd.f32 %v1790, %v1882
    %v1885 = vadd.f32 %v1791, %v1883
    %1886 = vrot.lane.b32.xlu0 %v384, 111
    %v1887 = vpop.permute.xlu0 %1886
    %1888 = vrot.lane.b32.xlu0 %v385, 111
    %v1889 = vpop.permute.xlu0 %1888
    %vm1890 = vcmp.lt.s32.totalorder %v84, 111
    %v1891 = vsel %vm1890, %v1887, %v1889
    %v1892 = vsel %vm1890, %v1889, %v1887
    %1893 = vrot.lane.b32.xlu0 %v399, 111
    %v1894 = vpop.permute.xlu0 %1893
    %1895 = vrot.lane.b32.xlu0 %v400, 111
    %v1896 = vpop.permute.xlu0 %1895
    %v1897 = vsel %vm1890, %v1894, %v1896
    %v1898 = vsel %vm1890, %v1896, %v1894
    %s1899 = scalar_lea.vmem [#allocation5], 64
    %v1900 = vld [vmem:[%s1899] ss:$8 sm:$0x3]
    %v1902 = vlaneseq
    %v1903 = vshrl.u32 %v1902, 7
    %v1904 = vsub.s32 0, %v1903
    %v1905 = vrot.slane %v1900, %v1904
    %v1906 = vlaneseq
    %v1907 = vshrl.u32 %v1906, 7
    %v1908 = vsub.s32 1, %v1907
    %v1909 = vrot.slane %v1900, %v1908
    %v1912 = vmul.f32 %v1905, %v1891
    %v1913 = vmul.f32 %v1909, %v1892
    %v1914 = vadd.f32 %v1820, %v1912
    %v1915 = vadd.f32 %v1821, %v1913
    %s1916 = scalar_lea.vmem [#allocation5], 161
    %v1917 = vld [vmem:[%s1916] ss:$8 sm:$0x3]
    %v1919 = vlaneseq
    %v1920 = vshrl.u32 %v1919, 7
    %v1921 = vsub.s32 0, %v1920
    %v1922 = vrot.slane %v1917, %v1921
    %v1923 = vlaneseq
    %v1924 = vshrl.u32 %v1923, 7
    %v1925 = vsub.s32 1, %v1924
    %v1926 = vrot.slane %v1917, %v1925
    %v1929 = vmul.f32 %v1922, %v1897
    %v1930 = vmul.f32 %v1926, %v1898
    %v1931 = vadd.f32 %v1837, %v1929
    %v1932 = vadd.f32 %v1838, %v1930
    %1933 = vrot.lane.b32.xlu0 %v384, 110
    %v1934 = vpop.permute.xlu0 %1933
    %1935 = vrot.lane.b32.xlu0 %v385, 110
    %v1936 = vpop.permute.xlu0 %1935
    %vm1937 = vcmp.lt.s32.totalorder %v84, 110
    %v1938 = vsel %vm1937, %v1934, %v1936
    %v1939 = vsel %vm1937, %v1936, %v1934
    %1940 = vrot.lane.b32.xlu0 %v399, 110
    %v1941 = vpop.permute.xlu0 %1940
    %1942 = vrot.lane.b32.xlu0 %v400, 110
    %v1943 = vpop.permute.xlu0 %1942
    %v1944 = vsel %vm1937, %v1941, %v1943
    %v1945 = vsel %vm1937, %v1943, %v1941
    %s1946 = scalar_lea.vmem [#allocation5], 65
    %v1947 = vld [vmem:[%s1946] ss:$8 sm:$0x3]
    %v1949 = vlaneseq
    %v1950 = vshrl.u32 %v1949, 7
    %v1951 = vsub.s32 0, %v1950
    %v1952 = vrot.slane %v1947, %v1951
    %v1953 = vlaneseq
    %v1954 = vshrl.u32 %v1953, 7
    %v1955 = vsub.s32 1, %v1954
    %v1956 = vrot.slane %v1947, %v1955
    %v1959 = vmul.f32 %v1952, %v1938
    %v1960 = vmul.f32 %v1956, %v1939
    %v1961 = vadd.f32 %v1867, %v1959
    %v1962 = vadd.f32 %v1868, %v1960
    %s1963 = scalar_lea.vmem [#allocation5], 162
    %v1964 = vld [vmem:[%s1963] ss:$8 sm:$0x3]
    %v1966 = vlaneseq
    %v1967 = vshrl.u32 %v1966, 7
    %v1968 = vsub.s32 0, %v1967
    %v1969 = vrot.slane %v1964, %v1968
    %v1970 = vlaneseq
    %v1971 = vshrl.u32 %v1970, 7
    %v1972 = vsub.s32 1, %v1971
    %v1973 = vrot.slane %v1964, %v1972
    %v1976 = vmul.f32 %v1969, %v1944
    %v1977 = vmul.f32 %v1973, %v1945
    %v1978 = vadd.f32 %v1884, %v1976
    %v1979 = vadd.f32 %v1885, %v1977
    %1980 = vrot.lane.b32.xlu0 %v384, 109
    %v1981 = vpop.permute.xlu0 %1980
    %1982 = vrot.lane.b32.xlu0 %v385, 109
    %v1983 = vpop.permute.xlu0 %1982
    %vm1984 = vcmp.lt.s32.totalorder %v84, 109
    %v1985 = vsel %vm1984, %v1981, %v1983
    %v1986 = vsel %vm1984, %v1983, %v1981
    %1987 = vrot.lane.b32.xlu0 %v399, 109
    %v1988 = vpop.permute.xlu0 %1987
    %1989 = vrot.lane.b32.xlu0 %v400, 109
    %v1990 = vpop.permute.xlu0 %1989
    %v1991 = vsel %vm1984, %v1988, %v1990
    %v1992 = vsel %vm1984, %v1990, %v1988
    %s1993 = scalar_lea.vmem [#allocation5], 66
    %v1994 = vld [vmem:[%s1993] ss:$8 sm:$0x3]
    %v1996 = vlaneseq
    %v1997 = vshrl.u32 %v1996, 7
    %v1998 = vsub.s32 0, %v1997
    %v1999 = vrot.slane %v1994, %v1998
    %v2000 = vlaneseq
    %v2001 = vshrl.u32 %v2000, 7
    %v2002 = vsub.s32 1, %v2001
    %v2003 = vrot.slane %v1994, %v2002
    %v2006 = vmul.f32 %v1999, %v1985
    %v2007 = vmul.f32 %v2003, %v1986
    %v2008 = vadd.f32 %v1914, %v2006
    %v2009 = vadd.f32 %v1915, %v2007
    %s2010 = scalar_lea.vmem [#allocation5], 163
    %v2011 = vld [vmem:[%s2010] ss:$8 sm:$0x3]
    %v2013 = vlaneseq
    %v2014 = vshrl.u32 %v2013, 7
    %v2015 = vsub.s32 0, %v2014
    %v2016 = vrot.slane %v2011, %v2015
    %v2017 = vlaneseq
    %v2018 = vshrl.u32 %v2017, 7
    %v2019 = vsub.s32 1, %v2018
    %v2020 = vrot.slane %v2011, %v2019
    %v2023 = vmul.f32 %v2016, %v1991
    %v2024 = vmul.f32 %v2020, %v1992
    %v2025 = vadd.f32 %v1931, %v2023
    %v2026 = vadd.f32 %v1932, %v2024
    %2027 = vrot.lane.b32.xlu0 %v384, 99
    %v2028 = vpop.permute.xlu0 %2027
    %2029 = vrot.lane.b32.xlu0 %v385, 99
    %v2030 = vpop.permute.xlu0 %2029
    %vm2031 = vcmp.lt.s32.totalorder %v84, 99
    %v2032 = vsel %vm2031, %v2028, %v2030
    %v2033 = vsel %vm2031, %v2030, %v2028
    %2034 = vrot.lane.b32.xlu0 %v399, 99
    %v2035 = vpop.permute.xlu0 %2034
    %2036 = vrot.lane.b32.xlu0 %v400, 99
    %v2037 = vpop.permute.xlu0 %2036
    %v2038 = vsel %vm2031, %v2035, %v2037
    %v2039 = vsel %vm2031, %v2037, %v2035
    %s2040 = scalar_lea.vmem [#allocation5], 67
    %v2041 = vld [vmem:[%s2040] ss:$8 sm:$0x3]
    %v2043 = vlaneseq
    %v2044 = vshrl.u32 %v2043, 7
    %v2045 = vsub.s32 0, %v2044
    %v2046 = vrot.slane %v2041, %v2045
    %v2047 = vlaneseq
    %v2048 = vshrl.u32 %v2047, 7
    %v2049 = vsub.s32 1, %v2048
    %v2050 = vrot.slane %v2041, %v2049
    %v2053 = vmul.f32 %v2046, %v2032
    %v2054 = vmul.f32 %v2050, %v2033
    %v2055 = vadd.f32 %v1961, %v2053
    %v2056 = vadd.f32 %v1962, %v2054
    %s2057 = scalar_lea.vmem [#allocation5], 164
    %v2058 = vld [vmem:[%s2057] ss:$8 sm:$0x3]
    %v2060 = vlaneseq
    %v2061 = vshrl.u32 %v2060, 7
    %v2062 = vsub.s32 0, %v2061
    %v2063 = vrot.slane %v2058, %v2062
    %v2064 = vlaneseq
    %v2065 = vshrl.u32 %v2064, 7
    %v2066 = vsub.s32 1, %v2065
    %v2067 = vrot.slane %v2058, %v2066
    %v2070 = vmul.f32 %v2063, %v2038
    %v2071 = vmul.f32 %v2067, %v2039
    %v2072 = vadd.f32 %v1978, %v2070
    %v2073 = vadd.f32 %v1979, %v2071
    %2074 = vrot.lane.b32.xlu0 %v384, 98
    %v2075 = vpop.permute.xlu0 %2074
    %2076 = vrot.lane.b32.xlu0 %v385, 98
    %v2077 = vpop.permute.xlu0 %2076
    %vm2078 = vcmp.lt.s32.totalorder %v84, 98
    %v2079 = vsel %vm2078, %v2075, %v2077
    %v2080 = vsel %vm2078, %v2077, %v2075
    %2081 = vrot.lane.b32.xlu0 %v399, 98
    %v2082 = vpop.permute.xlu0 %2081
    %2083 = vrot.lane.b32.xlu0 %v400, 98
    %v2084 = vpop.permute.xlu0 %2083
    %v2085 = vsel %vm2078, %v2082, %v2084
    %v2086 = vsel %vm2078, %v2084, %v2082
    %s2087 = scalar_lea.vmem [#allocation5], 68
    %v2088 = vld [vmem:[%s2087] ss:$8 sm:$0x3]
    %v2090 = vlaneseq
    %v2091 = vshrl.u32 %v2090, 7
    %v2092 = vsub.s32 0, %v2091
    %v2093 = vrot.slane %v2088, %v2092
    %v2094 = vlaneseq
    %v2095 = vshrl.u32 %v2094, 7
    %v2096 = vsub.s32 1, %v2095
    %v2097 = vrot.slane %v2088, %v2096
    %v2100 = vmul.f32 %v2093, %v2079
    %v2101 = vmul.f32 %v2097, %v2080
    %v2102 = vadd.f32 %v2008, %v2100
    %v2103 = vadd.f32 %v2009, %v2101
    %s2104 = scalar_lea.vmem [#allocation5], 165
    %v2105 = vld [vmem:[%s2104] ss:$8 sm:$0x3]
    %v2107 = vlaneseq
    %v2108 = vshrl.u32 %v2107, 7
    %v2109 = vsub.s32 0, %v2108
    %v2110 = vrot.slane %v2105, %v2109
    %v2111 = vlaneseq
    %v2112 = vshrl.u32 %v2111, 7
    %v2113 = vsub.s32 1, %v2112
    %v2114 = vrot.slane %v2105, %v2113
    %v2117 = vmul.f32 %v2110, %v2085
    %v2118 = vmul.f32 %v2114, %v2086
    %v2119 = vadd.f32 %v2025, %v2117
    %v2120 = vadd.f32 %v2026, %v2118
    %2121 = vrot.lane.b32.xlu0 %v384, 97
    %v2122 = vpop.permute.xlu0 %2121
    %2123 = vrot.lane.b32.xlu0 %v385, 97
    %v2124 = vpop.permute.xlu0 %2123
    %vm2125 = vcmp.lt.s32.totalorder %v84, 97
    %v2126 = vsel %vm2125, %v2122, %v2124
    %v2127 = vsel %vm2125, %v2124, %v2122
    %2128 = vrot.lane.b32.xlu0 %v399, 97
    %v2129 = vpop.permute.xlu0 %2128
    %2130 = vrot.lane.b32.xlu0 %v400, 97
    %v2131 = vpop.permute.xlu0 %2130
    %v2132 = vsel %vm2125, %v2129, %v2131
    %v2133 = vsel %vm2125, %v2131, %v2129
    %s2134 = scalar_lea.vmem [#allocation5], 69
    %v2135 = vld [vmem:[%s2134] ss:$8 sm:$0x3]
    %v2137 = vlaneseq
    %v2138 = vshrl.u32 %v2137, 7
    %v2139 = vsub.s32 0, %v2138
    %v2140 = vrot.slane %v2135, %v2139
    %v2141 = vlaneseq
    %v2142 = vshrl.u32 %v2141, 7
    %v2143 = vsub.s32 1, %v2142
    %v2144 = vrot.slane %v2135, %v2143
    %v2147 = vmul.f32 %v2140, %v2126
    %v2148 = vmul.f32 %v2144, %v2127
    %v2149 = vadd.f32 %v2055, %v2147
    %v2150 = vadd.f32 %v2056, %v2148
    %s2151 = scalar_lea.vmem [#allocation5], 166
    %v2152 = vld [vmem:[%s2151] ss:$8 sm:$0x3]
    %v2154 = vlaneseq
    %v2155 = vshrl.u32 %v2154, 7
    %v2156 = vsub.s32 0, %v2155
    %v2157 = vrot.slane %v2152, %v2156
    %v2158 = vlaneseq
    %v2159 = vshrl.u32 %v2158, 7
    %v2160 = vsub.s32 1, %v2159
    %v2161 = vrot.slane %v2152, %v2160
    %v2164 = vmul.f32 %v2157, %v2132
    %v2165 = vmul.f32 %v2161, %v2133
    %v2166 = vadd.f32 %v2072, %v2164
    %v2167 = vadd.f32 %v2073, %v2165
    %2168 = vrot.lane.b32.xlu0 %v384, 96
    %v2169 = vpop.permute.xlu0 %2168
    %2170 = vrot.lane.b32.xlu0 %v385, 96
    %v2171 = vpop.permute.xlu0 %2170
    %vm2172 = vcmp.lt.s32.totalorder %v84, 96
    %v2173 = vsel %vm2172, %v2169, %v2171
    %v2174 = vsel %vm2172, %v2171, %v2169
    %2175 = vrot.lane.b32.xlu0 %v399, 96
    %v2176 = vpop.permute.xlu0 %2175
    %2177 = vrot.lane.b32.xlu0 %v400, 96
    %v2178 = vpop.permute.xlu0 %2177
    %v2179 = vsel %vm2172, %v2176, %v2178
    %v2180 = vsel %vm2172, %v2178, %v2176
    %s2181 = scalar_lea.vmem [#allocation5], 70
    %v2182 = vld [vmem:[%s2181] ss:$8 sm:$0x3]
    %v2184 = vlaneseq
    %v2185 = vshrl.u32 %v2184, 7
    %v2186 = vsub.s32 0, %v2185
    %v2187 = vrot.slane %v2182, %v2186
    %v2188 = vlaneseq
    %v2189 = vshrl.u32 %v2188, 7
    %v2190 = vsub.s32 1, %v2189
    %v2191 = vrot.slane %v2182, %v2190
    %v2194 = vmul.f32 %v2187, %v2173
    %v2195 = vmul.f32 %v2191, %v2174
    %v2196 = vadd.f32 %v2102, %v2194
    %v2197 = vadd.f32 %v2103, %v2195
    %s2198 = scalar_lea.vmem [#allocation5], 167
    %v2199 = vld [vmem:[%s2198] ss:$8 sm:$0x3]
    %v2201 = vlaneseq
    %v2202 = vshrl.u32 %v2201, 7
    %v2203 = vsub.s32 0, %v2202
    %v2204 = vrot.slane %v2199, %v2203
    %v2205 = vlaneseq
    %v2206 = vshrl.u32 %v2205, 7
    %v2207 = vsub.s32 1, %v2206
    %v2208 = vrot.slane %v2199, %v2207
    %v2211 = vmul.f32 %v2204, %v2179
    %v2212 = vmul.f32 %v2208, %v2180
    %v2213 = vadd.f32 %v2119, %v2211
    %v2214 = vadd.f32 %v2120, %v2212
    %2215 = vrot.lane.b32.xlu0 %v384, 95
    %v2216 = vpop.permute.xlu0 %2215
    %2217 = vrot.lane.b32.xlu0 %v385, 95
    %v2218 = vpop.permute.xlu0 %2217
    %vm2219 = vcmp.lt.s32.totalorder %v84, 95
    %v2220 = vsel %vm2219, %v2216, %v2218
    %v2221 = vsel %vm2219, %v2218, %v2216
    %2222 = vrot.lane.b32.xlu0 %v399, 95
    %v2223 = vpop.permute.xlu0 %2222
    %2224 = vrot.lane.b32.xlu0 %v400, 95
    %v2225 = vpop.permute.xlu0 %2224
    %v2226 = vsel %vm2219, %v2223, %v2225
    %v2227 = vsel %vm2219, %v2225, %v2223
    %s2228 = scalar_lea.vmem [#allocation5], 71
    %v2229 = vld [vmem:[%s2228] ss:$8 sm:$0x3]
    %v2231 = vlaneseq
    %v2232 = vshrl.u32 %v2231, 7
    %v2233 = vsub.s32 0, %v2232
    %v2234 = vrot.slane %v2229, %v2233
    %v2235 = vlaneseq
    %v2236 = vshrl.u32 %v2235, 7
    %v2237 = vsub.s32 1, %v2236
    %v2238 = vrot.slane %v2229, %v2237
    %v2241 = vmul.f32 %v2234, %v2220
    %v2242 = vmul.f32 %v2238, %v2221
    %v2243 = vadd.f32 %v2149, %v2241
    %v2244 = vadd.f32 %v2150, %v2242
    %s2245 = scalar_lea.vmem [#allocation5], 176
    %v2246 = vld [vmem:[%s2245] ss:$8 sm:$0x3]
    %v2248 = vlaneseq
    %v2249 = vshrl.u32 %v2248, 7
    %v2250 = vsub.s32 0, %v2249
    %v2251 = vrot.slane %v2246, %v2250
    %v2252 = vlaneseq
    %v2253 = vshrl.u32 %v2252, 7
    %v2254 = vsub.s32 1, %v2253
    %v2255 = vrot.slane %v2246, %v2254
    %v2258 = vmul.f32 %v2251, %v2226
    %v2259 = vmul.f32 %v2255, %v2227
    %v2260 = vadd.f32 %v2166, %v2258
    %v2261 = vadd.f32 %v2167, %v2259
    %2262 = vrot.lane.b32.xlu0 %v384, 94
    %v2263 = vpop.permute.xlu0 %2262
    %2264 = vrot.lane.b32.xlu0 %v385, 94
    %v2265 = vpop.permute.xlu0 %2264
    %vm2266 = vcmp.lt.s32.totalorder %v84, 94
    %v2267 = vsel %vm2266, %v2263, %v2265
    %v2268 = vsel %vm2266, %v2265, %v2263
    %2269 = vrot.lane.b32.xlu0 %v399, 94
    %v2270 = vpop.permute.xlu0 %2269
    %2271 = vrot.lane.b32.xlu0 %v400, 94
    %v2272 = vpop.permute.xlu0 %2271
    %v2273 = vsel %vm2266, %v2270, %v2272
    %v2274 = vsel %vm2266, %v2272, %v2270
    %s2275 = scalar_lea.vmem [#allocation5], 80
    %v2276 = vld [vmem:[%s2275] ss:$8 sm:$0x3]
    %v2278 = vlaneseq
    %v2279 = vshrl.u32 %v2278, 7
    %v2280 = vsub.s32 0, %v2279
    %v2281 = vrot.slane %v2276, %v2280
    %v2282 = vlaneseq
    %v2283 = vshrl.u32 %v2282, 7
    %v2284 = vsub.s32 1, %v2283
    %v2285 = vrot.slane %v2276, %v2284
    %v2288 = vmul.f32 %v2281, %v2267
    %v2289 = vmul.f32 %v2285, %v2268
    %v2290 = vadd.f32 %v2196, %v2288
    %v2291 = vadd.f32 %v2197, %v2289
    %s2292 = scalar_lea.vmem [#allocation5], 177
    %v2293 = vld [vmem:[%s2292] ss:$8 sm:$0x3]
    %v2295 = vlaneseq
    %v2296 = vshrl.u32 %v2295, 7
    %v2297 = vsub.s32 0, %v2296
    %v2298 = vrot.slane %v2293, %v2297
    %v2299 = vlaneseq
    %v2300 = vshrl.u32 %v2299, 7
    %v2301 = vsub.s32 1, %v2300
    %v2302 = vrot.slane %v2293, %v2301
    %v2305 = vmul.f32 %v2298, %v2273
    %v2306 = vmul.f32 %v2302, %v2274
    %v2307 = vadd.f32 %v2213, %v2305
    %v2308 = vadd.f32 %v2214, %v2306
    %2309 = vrot.lane.b32.xlu0 %v384, 93
    %v2310 = vpop.permute.xlu0 %2309
    %2311 = vrot.lane.b32.xlu0 %v385, 93
    %v2312 = vpop.permute.xlu0 %2311
    %vm2313 = vcmp.lt.s32.totalorder %v84, 93
    %v2314 = vsel %vm2313, %v2310, %v2312
    %v2315 = vsel %vm2313, %v2312, %v2310
    %2316 = vrot.lane.b32.xlu0 %v399, 93
    %v2317 = vpop.permute.xlu0 %2316
    %2318 = vrot.lane.b32.xlu0 %v400, 93
    %v2319 = vpop.permute.xlu0 %2318
    %v2320 = vsel %vm2313, %v2317, %v2319
    %v2321 = vsel %vm2313, %v2319, %v2317
    %s2322 = scalar_lea.vmem [#allocation5], 81
    %v2323 = vld [vmem:[%s2322] ss:$8 sm:$0x3]
    %v2325 = vlaneseq
    %v2326 = vshrl.u32 %v2325, 7
    %v2327 = vsub.s32 0, %v2326
    %v2328 = vrot.slane %v2323, %v2327
    %v2329 = vlaneseq
    %v2330 = vshrl.u32 %v2329, 7
    %v2331 = vsub.s32 1, %v2330
    %v2332 = vrot.slane %v2323, %v2331
    %v2335 = vmul.f32 %v2328, %v2314
    %v2336 = vmul.f32 %v2332, %v2315
    %v2337 = vadd.f32 %v2243, %v2335
    %v2338 = vadd.f32 %v2244, %v2336
    %s2339 = scalar_lea.vmem [#allocation5], 178
    %v2340 = vld [vmem:[%s2339] ss:$8 sm:$0x3]
    %v2342 = vlaneseq
    %v2343 = vshrl.u32 %v2342, 7
    %v2344 = vsub.s32 0, %v2343
    %v2345 = vrot.slane %v2340, %v2344
    %v2346 = vlaneseq
    %v2347 = vshrl.u32 %v2346, 7
    %v2348 = vsub.s32 1, %v2347
    %v2349 = vrot.slane %v2340, %v2348
    %v2352 = vmul.f32 %v2345, %v2320
    %v2353 = vmul.f32 %v2349, %v2321
    %v2354 = vadd.f32 %v2260, %v2352
    %v2355 = vadd.f32 %v2261, %v2353
    %2356 = vrot.lane.b32.xlu0 %v384, 83
    %v2357 = vpop.permute.xlu0 %2356
    %2358 = vrot.lane.b32.xlu0 %v385, 83
    %v2359 = vpop.permute.xlu0 %2358
    %vm2360 = vcmp.lt.s32.totalorder %v84, 83
    %v2361 = vsel %vm2360, %v2357, %v2359
    %v2362 = vsel %vm2360, %v2359, %v2357
    %2363 = vrot.lane.b32.xlu0 %v399, 83
    %v2364 = vpop.permute.xlu0 %2363
    %2365 = vrot.lane.b32.xlu0 %v400, 83
    %v2366 = vpop.permute.xlu0 %2365
    %v2367 = vsel %vm2360, %v2364, %v2366
    %v2368 = vsel %vm2360, %v2366, %v2364
    %s2369 = scalar_lea.vmem [#allocation5], 82
    %v2370 = vld [vmem:[%s2369] ss:$8 sm:$0x3]
    %v2372 = vlaneseq
    %v2373 = vshrl.u32 %v2372, 7
    %v2374 = vsub.s32 0, %v2373
    %v2375 = vrot.slane %v2370, %v2374
    %v2376 = vlaneseq
    %v2377 = vshrl.u32 %v2376, 7
    %v2378 = vsub.s32 1, %v2377
    %v2379 = vrot.slane %v2370, %v2378
    %v2382 = vmul.f32 %v2375, %v2361
    %v2383 = vmul.f32 %v2379, %v2362
    %v2384 = vadd.f32 %v2290, %v2382
    %v2385 = vadd.f32 %v2291, %v2383
    %s2386 = scalar_lea.vmem [#allocation5], 179
    %v2387 = vld [vmem:[%s2386] ss:$8 sm:$0x3]
    %v2389 = vlaneseq
    %v2390 = vshrl.u32 %v2389, 7
    %v2391 = vsub.s32 0, %v2390
    %v2392 = vrot.slane %v2387, %v2391
    %v2393 = vlaneseq
    %v2394 = vshrl.u32 %v2393, 7
    %v2395 = vsub.s32 1, %v2394
    %v2396 = vrot.slane %v2387, %v2395
    %v2399 = vmul.f32 %v2392, %v2367
    %v2400 = vmul.f32 %v2396, %v2368
    %v2401 = vadd.f32 %v2307, %v2399
    %v2402 = vadd.f32 %v2308, %v2400
    %2403 = vrot.lane.b32.xlu0 %v384, 82
    %v2404 = vpop.permute.xlu0 %2403
    %2405 = vrot.lane.b32.xlu0 %v385, 82
    %v2406 = vpop.permute.xlu0 %2405
    %vm2407 = vcmp.lt.s32.totalorder %v84, 82
    %v2408 = vsel %vm2407, %v2404, %v2406
    %v2409 = vsel %vm2407, %v2406, %v2404
    %2410 = vrot.lane.b32.xlu0 %v399, 82
    %v2411 = vpop.permute.xlu0 %2410
    %2412 = vrot.lane.b32.xlu0 %v400, 82
    %v2413 = vpop.permute.xlu0 %2412
    %v2414 = vsel %vm2407, %v2411, %v2413
    %v2415 = vsel %vm2407, %v2413, %v2411
    %s2416 = scalar_lea.vmem [#allocation5], 83
    %v2417 = vld [vmem:[%s2416] ss:$8 sm:$0x3]
    %v2419 = vlaneseq
    %v2420 = vshrl.u32 %v2419, 7
    %v2421 = vsub.s32 0, %v2420
    %v2422 = vrot.slane %v2417, %v2421
    %v2423 = vlaneseq
    %v2424 = vshrl.u32 %v2423, 7
    %v2425 = vsub.s32 1, %v2424
    %v2426 = vrot.slane %v2417, %v2425
    %v2429 = vmul.f32 %v2422, %v2408
    %v2430 = vmul.f32 %v2426, %v2409
    %v2431 = vadd.f32 %v2337, %v2429
    %v2432 = vadd.f32 %v2338, %v2430
    %s2433 = scalar_lea.vmem [#allocation5], 180
    %v2434 = vld [vmem:[%s2433] ss:$8 sm:$0x3]
    %v2436 = vlaneseq
    %v2437 = vshrl.u32 %v2436, 7
    %v2438 = vsub.s32 0, %v2437
    %v2439 = vrot.slane %v2434, %v2438
    %v2440 = vlaneseq
    %v2441 = vshrl.u32 %v2440, 7
    %v2442 = vsub.s32 1, %v2441
    %v2443 = vrot.slane %v2434, %v2442
    %v2446 = vmul.f32 %v2439, %v2414
    %v2447 = vmul.f32 %v2443, %v2415
    %v2448 = vadd.f32 %v2354, %v2446
    %v2449 = vadd.f32 %v2355, %v2447
    %2450 = vrot.lane.b32.xlu0 %v384, 81
    %v2451 = vpop.permute.xlu0 %2450
    %2452 = vrot.lane.b32.xlu0 %v385, 81
    %v2453 = vpop.permute.xlu0 %2452
    %vm2454 = vcmp.lt.s32.totalorder %v84, 81
    %v2455 = vsel %vm2454, %v2451, %v2453
    %v2456 = vsel %vm2454, %v2453, %v2451
    %2457 = vrot.lane.b32.xlu0 %v399, 81
    %v2458 = vpop.permute.xlu0 %2457
    %2459 = vrot.lane.b32.xlu0 %v400, 81
    %v2460 = vpop.permute.xlu0 %2459
    %v2461 = vsel %vm2454, %v2458, %v2460
    %v2462 = vsel %vm2454, %v2460, %v2458
    %s2463 = scalar_lea.vmem [#allocation5], 84
    %v2464 = vld [vmem:[%s2463] ss:$8 sm:$0x3]
    %v2466 = vlaneseq
    %v2467 = vshrl.u32 %v2466, 7
    %v2468 = vsub.s32 0, %v2467
    %v2469 = vrot.slane %v2464, %v2468
    %v2470 = vlaneseq
    %v2471 = vshrl.u32 %v2470, 7
    %v2472 = vsub.s32 1, %v2471
    %v2473 = vrot.slane %v2464, %v2472
    %v2476 = vmul.f32 %v2469, %v2455
    %v2477 = vmul.f32 %v2473, %v2456
    %v2478 = vadd.f32 %v2384, %v2476
    %v2479 = vadd.f32 %v2385, %v2477
    %s2480 = scalar_lea.vmem [#allocation5], 181
    %v2481 = vld [vmem:[%s2480] ss:$8 sm:$0x3]
    %v2483 = vlaneseq
    %v2484 = vshrl.u32 %v2483, 7
    %v2485 = vsub.s32 0, %v2484
    %v2486 = vrot.slane %v2481, %v2485
    %v2487 = vlaneseq
    %v2488 = vshrl.u32 %v2487, 7
    %v2489 = vsub.s32 1, %v2488
    %v2490 = vrot.slane %v2481, %v2489
    %v2493 = vmul.f32 %v2486, %v2461
    %v2494 = vmul.f32 %v2490, %v2462
    %v2495 = vadd.f32 %v2401, %v2493
    %v2496 = vadd.f32 %v2402, %v2494
    %2497 = vrot.lane.b32.xlu0 %v384, 80
    %v2498 = vpop.permute.xlu0 %2497
    %2499 = vrot.lane.b32.xlu0 %v385, 80
    %v2500 = vpop.permute.xlu0 %2499
    %vm2501 = vcmp.lt.s32.totalorder %v84, 80
    %v2502 = vsel %vm2501, %v2498, %v2500
    %v2503 = vsel %vm2501, %v2500, %v2498
    %2504 = vrot.lane.b32.xlu0 %v399, 80
    %v2505 = vpop.permute.xlu0 %2504
    %2506 = vrot.lane.b32.xlu0 %v400, 80
    %v2507 = vpop.permute.xlu0 %2506
    %v2508 = vsel %vm2501, %v2505, %v2507
    %v2509 = vsel %vm2501, %v2507, %v2505
    %s2510 = scalar_lea.vmem [#allocation5], 85
    %v2511 = vld [vmem:[%s2510] ss:$8 sm:$0x3]
    %v2513 = vlaneseq
    %v2514 = vshrl.u32 %v2513, 7
    %v2515 = vsub.s32 0, %v2514
    %v2516 = vrot.slane %v2511, %v2515
    %v2517 = vlaneseq
    %v2518 = vshrl.u32 %v2517, 7
    %v2519 = vsub.s32 1, %v2518
    %v2520 = vrot.slane %v2511, %v2519
    %v2523 = vmul.f32 %v2516, %v2502
    %v2524 = vmul.f32 %v2520, %v2503
    %v2525 = vadd.f32 %v2431, %v2523
    %v2526 = vadd.f32 %v2432, %v2524
    %s2527 = scalar_lea.vmem [#allocation5], 182
    %v2528 = vld [vmem:[%s2527] ss:$8 sm:$0x3]
    %v2530 = vlaneseq
    %v2531 = vshrl.u32 %v2530, 7
    %v2532 = vsub.s32 0, %v2531
    %v2533 = vrot.slane %v2528, %v2532
    %v2534 = vlaneseq
    %v2535 = vshrl.u32 %v2534, 7
    %v2536 = vsub.s32 1, %v2535
    %v2537 = vrot.slane %v2528, %v2536
    %v2540 = vmul.f32 %v2533, %v2508
    %v2541 = vmul.f32 %v2537, %v2509
    %v2542 = vadd.f32 %v2448, %v2540
    %v2543 = vadd.f32 %v2449, %v2541
    %2544 = vrot.lane.b32.xlu0 %v384, 79
    %v2545 = vpop.permute.xlu0 %2544
    %2546 = vrot.lane.b32.xlu0 %v385, 79
    %v2547 = vpop.permute.xlu0 %2546
    %vm2548 = vcmp.lt.s32.totalorder %v84, 79
    %v2549 = vsel %vm2548, %v2545, %v2547
    %v2550 = vsel %vm2548, %v2547, %v2545
    %2551 = vrot.lane.b32.xlu0 %v399, 79
    %v2552 = vpop.permute.xlu0 %2551
    %2553 = vrot.lane.b32.xlu0 %v400, 79
    %v2554 = vpop.permute.xlu0 %2553
    %v2555 = vsel %vm2548, %v2552, %v2554
    %v2556 = vsel %vm2548, %v2554, %v2552
    %s2557 = scalar_lea.vmem [#allocation5], 86
    %v2558 = vld [vmem:[%s2557] ss:$8 sm:$0x3]
    %v2560 = vlaneseq
    %v2561 = vshrl.u32 %v2560, 7
    %v2562 = vsub.s32 0, %v2561
    %v2563 = vrot.slane %v2558, %v2562
    %v2564 = vlaneseq
    %v2565 = vshrl.u32 %v2564, 7
    %v2566 = vsub.s32 1, %v2565
    %v2567 = vrot.slane %v2558, %v2566
    %v2570 = vmul.f32 %v2563, %v2549
    %v2571 = vmul.f32 %v2567, %v2550
    %v2572 = vadd.f32 %v2478, %v2570
    %v2573 = vadd.f32 %v2479, %v2571
    %s2574 = scalar_lea.vmem [#allocation5], 183
    %v2575 = vld [vmem:[%s2574] ss:$8 sm:$0x3]
    %v2577 = vlaneseq
    %v2578 = vshrl.u32 %v2577, 7
    %v2579 = vsub.s32 0, %v2578
    %v2580 = vrot.slane %v2575, %v2579
    %v2581 = vlaneseq
    %v2582 = vshrl.u32 %v2581, 7
    %v2583 = vsub.s32 1, %v2582
    %v2584 = vrot.slane %v2575, %v2583
    %v2587 = vmul.f32 %v2580, %v2555
    %v2588 = vmul.f32 %v2584, %v2556
    %v2589 = vadd.f32 %v2495, %v2587
    %v2590 = vadd.f32 %v2496, %v2588
    %2591 = vrot.lane.b32.xlu0 %v384, 78
    %v2592 = vpop.permute.xlu0 %2591
    %2593 = vrot.lane.b32.xlu0 %v385, 78
    %v2594 = vpop.permute.xlu0 %2593
    %vm2595 = vcmp.lt.s32.totalorder %v84, 78
    %v2596 = vsel %vm2595, %v2592, %v2594
    %v2597 = vsel %vm2595, %v2594, %v2592
    %2598 = vrot.lane.b32.xlu0 %v399, 78
    %v2599 = vpop.permute.xlu0 %2598
    %2600 = vrot.lane.b32.xlu0 %v400, 78
    %v2601 = vpop.permute.xlu0 %2600
    %v2602 = vsel %vm2595, %v2599, %v2601
    %v2603 = vsel %vm2595, %v2601, %v2599
    %s2604 = scalar_lea.vmem [#allocation5], 87
    %v2605 = vld [vmem:[%s2604] ss:$8 sm:$0x3]
    %v2607 = vlaneseq
    %v2608 = vshrl.u32 %v2607, 7
    %v2609 = vsub.s32 0, %v2608
    %v2610 = vrot.slane %v2605, %v2609
    %v2611 = vlaneseq
    %v2612 = vshrl.u32 %v2611, 7
    %v2613 = vsub.s32 1, %v2612
    %v2614 = vrot.slane %v2605, %v2613
    %v2617 = vmul.f32 %v2610, %v2596
    %v2618 = vmul.f32 %v2614, %v2597
    %v2619 = vadd.f32 %v2525, %v2617
    %v2620 = vadd.f32 %v2526, %v2618
    %s2621 = scalar_lea.vmem [#allocation5], 192
    %v2622 = vld [vmem:[%s2621] ss:$8 sm:$0x3]
    %v2624 = vlaneseq
    %v2625 = vshrl.u32 %v2624, 7
    %v2626 = vsub.s32 0, %v2625
    %v2627 = vrot.slane %v2622, %v2626
    %v2628 = vlaneseq
    %v2629 = vshrl.u32 %v2628, 7
    %v2630 = vsub.s32 1, %v2629
    %v2631 = vrot.slane %v2622, %v2630
    %v2634 = vmul.f32 %v2627, %v2602
    %v2635 = vmul.f32 %v2631, %v2603
    %v2636 = vadd.f32 %v2542, %v2634
    %v2637 = vadd.f32 %v2543, %v2635
    %2638 = vrot.lane.b32.xlu0 %v384, 77
    %v2639 = vpop.permute.xlu0 %2638
    %2640 = vrot.lane.b32.xlu0 %v385, 77
    %v2641 = vpop.permute.xlu0 %2640
    %vm2642 = vcmp.lt.s32.totalorder %v84, 77
    %v2643 = vsel %vm2642, %v2639, %v2641
    %v2644 = vsel %vm2642, %v2641, %v2639
    %2645 = vrot.lane.b32.xlu0 %v399, 77
    %v2646 = vpop.permute.xlu0 %2645
    %2647 = vrot.lane.b32.xlu0 %v400, 77
    %v2648 = vpop.permute.xlu0 %2647
    %v2649 = vsel %vm2642, %v2646, %v2648
    %v2650 = vsel %vm2642, %v2648, %v2646
    %s2651 = scalar_lea.vmem [#allocation5], 96
    %v2652 = vld [vmem:[%s2651] ss:$8 sm:$0x3]
    %v2654 = vlaneseq
    %v2655 = vshrl.u32 %v2654, 7
    %v2656 = vsub.s32 0, %v2655
    %v2657 = vrot.slane %v2652, %v2656
    %v2658 = vlaneseq
    %v2659 = vshrl.u32 %v2658, 7
    %v2660 = vsub.s32 1, %v2659
    %v2661 = vrot.slane %v2652, %v2660
    %v2664 = vmul.f32 %v2657, %v2643
    %v2665 = vmul.f32 %v2661, %v2644
    %v2666 = vadd.f32 %v2572, %v2664
    %v2667 = vadd.f32 %v2573, %v2665
    %s2668 = scalar_lea.vmem [#allocation5], 193
    %v2669 = vld [vmem:[%s2668] ss:$8 sm:$0x3]
    %v2671 = vlaneseq
    %v2672 = vshrl.u32 %v2671, 7
    %v2673 = vsub.s32 0, %v2672
    %v2674 = vrot.slane %v2669, %v2673
    %v2675 = vlaneseq
    %v2676 = vshrl.u32 %v2675, 7
    %v2677 = vsub.s32 1, %v2676
    %v2678 = vrot.slane %v2669, %v2677
    %v2681 = vmul.f32 %v2674, %v2649
    %v2682 = vmul.f32 %v2678, %v2650
    %v2683 = vadd.f32 %v2589, %v2681
    %v2684 = vadd.f32 %v2590, %v2682
    %v2685 = vadd.f32 %v2666, %v2683
    %v2686 = vadd.f32 %v2667, %v2684
    %v2687 = vadd.f32 %v2619, %v2636
    %v2688 = vadd.f32 %v2620, %v2637
    %v2689 = vadd.f32 %v2685, %v2687
    %v2690 = vadd.f32 %v2686, %v2688
    %v2691 = vxor.u32 %v2689, 2147483648
    %v2692 = vxor.u32 %v2690, 2147483648
    %v2693 = vmul.f32 %v2691, 1.442695
    %v2694 = vpow.pop %v2693
    %v2695 = vmul.f32 %v2692, 1.442695
    %v2696 = vpow.pop %v2695
    %v2697 = vadd.f32 %v2694, 1.0
    %v2698 = vadd.f32 %v2696, 1.0
    %v2699 = vrcp.pop %v2697
    %v2700 = vmul.f32 1.0, %v2699
    %v2701 = vrcp.pop %v2698
    %v2702 = vmul.f32 1.0, %v2701
    %v2705 = vcombine.low %v2700, %v2702
    %v2707 = vunpack.c.l.s4 1966171168
    %v2708 = vunpack.c.0.s8 %v2707
    %v2709 = vlaneseq
    %v2710 = vshrl.u32 %v2709, 7
    %v2711 = vsub.s32 %v2708, %v2710
    %v2712 = vrot.slane %v2705, %v2711
    %v2713 = vcombine.high %v2712, %v2712
    %v2715 = vunpack.c.l.s4 1966171168
    %v2716 = vunpack.c.0.s8 %v2715
    %v2717 = vlaneseq
    %v2718 = vshrl.u32 %v2717, 7
    %v2719 = vsub.s32 %v2716, %v2718
    %v2720 = vrot.slane %v2712, %v2719
    %v2722 = vunpack.c.l.s4 1966171168
    %v2723 = vunpack.c.0.s8 %v2722
    %v2724 = vlaneseq
    %v2725 = vshrl.u32 %v2724, 7
    %v2726 = vsub.s32 %v2723, %v2725
    %v2727 = vrot.slane %v2713, %v2726
    %v2730 = vlaneseq
    %v2731 = vshrl.u32 %v2730, 7
    %v2732 = vsub.s32 0, %v2731
    %v2733 = vrot.slane %v2720, %v2732
    %v2734 = vlaneseq
    %v2735 = vshrl.u32 %v2734, 7
    %v2736 = vsub.s32 1, %v2735
    %v2737 = vrot.slane %v2720, %v2736
    %v2738 = vlaneseq
    %v2739 = vshrl.u32 %v2738, 7
    %v2740 = vsub.s32 0, %v2739
    %v2741 = vrot.slane %v2727, %v2740
    %v2742 = vlaneseq
    %v2743 = vshrl.u32 %v2742, 7
    %v2744 = vsub.s32 1, %v2743
    %v2745 = vrot.slane %v2727, %v2744
    %v2746 = vcombine.low %v2733, %v2737
    %v2747 = vcombine.low %v2741, %v2745
    %v2750 = vmul.f32 %v311, %v2746
    %v2751 = vmul.f32 %v312, %v2747
    %2752 = vst [vmem:[#allocation7] sm:$0xff] %v2750
    %2753 = vst [vmem:[#allocation7 + $0x8] sm:$0xff] %v2751
    %v2754 = vlaneseq
    %vm2755 = vcmp.ge.s32.totalorder %v2754, 0
    %vm2756 = vcmp.lt.s32.totalorder %v2754, 256
    %vm2757 = vmand %vm2755, %vm2756
    %2758 = vst.msk [vmem:[#allocation8] sm:$0x3] %vm2757, %v2720
    %2759 = vst.msk [vmem:[#allocation8 + $0x2] sm:$0x3] %vm2757, %v2727
    // Predicated region
    $region26: #{tpu_custom_call.1} parent=1 // pred_check
      _
    $region27: #{tpu_custom_call.1} parent=1 // pred_check_branch
      %2761 = sbr.rel (0) target = $region29
    $region28: #{tpu_custom_call.1} parent=1 // pred_region
      %s2763 = ssub.s32 256, 256
      %2764 = vsyncadd [#allocation4], %s2763
      %s2765 = sshll.u32 [#allocation7], 4
      %s2766 = int_to_ptr.vmem [resolvable:$true] %s2765
      %2771 = dma.vmem_to_hbm [thread:$0]  %s2766, 256, %s4, [#allocation4], 128, 128, 8
    $region29: #{tpu_custom_call.1} parent=1 // pred_fallthru
      _
    // Predicated region
    $region30: #{tpu_custom_call.1} parent=1 // pred_check
      _
    $region31: #{tpu_custom_call.1} parent=1 // pred_check_branch
      %2773 = sbr.rel (0) target = $region33
    $region32: #{tpu_custom_call.1} parent=1 // pred_region
      %s2775 = ssub.s32 64, 64
      %2776 = vsyncadd [#allocation9], %s2775
      %s2777 = sshll.u32 [#allocation8], 4
      %s2778 = int_to_ptr.vmem [resolvable:$true] %s2777
      %2783 = dma.vmem_to_hbm [thread:$0]  %s2778, 64, %s5, [#allocation9], 32, 32, 2
    $region33: #{tpu_custom_call.1} parent=1 // pred_fallthru
      _
    // Predicated region
    $region34: #{tpu_custom_call.1} parent=1 // pred_check
      _
    $region35: #{tpu_custom_call.1} parent=1 // pred_check_branch
      %2785 = sbr.rel (0) target = $region37
    $region36: #{tpu_custom_call.1} parent=1 // pred_region
      %2786 = dma.done [#allocation4], 256
    $region37: #{tpu_custom_call.1} parent=1 // pred_fallthru
      _
    // Predicated region
    $region38: #{tpu_custom_call.1} parent=1 // pred_check
      _
    $region39: #{tpu_custom_call.1} parent=1 // pred_check_branch
      %2788 = sbr.rel (0) target = $region41
    $region40: #{tpu_custom_call.1} parent=1 // pred_region
      %2789 = dma.done [#allocation9], 64
    $region41: #{tpu_custom_call.1} parent=1 // pred_fallthru
      _
    %2790 = vsyncpa [#allocation3], 1
    %2791 = vsyncpa [#allocation6], 1
    %2792 = vsyncpa [#allocation4], 1
    %2793 = vsyncpa [#allocation9], 1

</llo_original>
